<compile_context>
chip_gen: v7x
topology: tpu7x:2x2x1
jax: 0.10.0
libtpu: 0.0.40
codegen_flags: <defaults>
</compile_context>

<pallas_src>
import jax
import jax.numpy as jnp
from jax import lax
from jax.experimental import pallas as pl
from jax.experimental.pallas import tpu as pltpu


def _round_up(v, m):
    return -(-v // m) * m


# ---------------------------------------------------------------------------
# Fused kernel: Conv1d(k=5,p=2)+ReLU -> MaxPool1d(3,1) -> Conv1d+ReLU -> MaxPool1d(3,1)
#               -> 2-layer LSTM (gate order [o,f,i,g] inside the kernel) -> last step
#               -> Linear (lane-padded output)
# ---------------------------------------------------------------------------
def rnn_classifier_kernel(x_ref, cw1_ref, cb1_ref, cw2_ref, cb2_ref,
                          wih0_ref, whh0_ref, bl0_ref,
                          wih1_ref, whh1_ref, bl1_ref,
                          wfc_ref, bfc_ref,
                          o_ref, xg_ref):
    bf16 = jnp.bfloat16
    f32 = jnp.float32
    x = x_ref[...]                                     # (L, Bb, Cin) bf16

    def conv_relu(inp, w_ref, b_ref):
        # inp: (Li, Bi, Ci) bf16 time-major; w_ref: (5, Ci, Co) bf16; b_ref: (1, Co) f32
        Li, Bi, Ci = inp.shape
        Co = w_ref.shape[2]
        zpad = jnp.zeros((2, Bi, Ci), inp.dtype)
        xp = jnp.concatenate([zpad, inp, zpad], axis=0)          # (Li+4, Bi, Ci)
        acc = None
        for k in range(5):                                       # 5 taps, K=Ci each,
            tap = xp[k:k + Li].reshape(Li * Bi, Ci)              # leading-dim slices
            y = jnp.dot(tap, w_ref[k], preferred_element_type=f32)
            acc = y if acc is None else acc + y
        y = acc.reshape(Li, Bi, Co) + b_ref[...][None]
        return jnp.maximum(y, 0.0)

    def maxpool3(v):                                   # kernel=3, stride=1: Li -> Li-2
        return jnp.maximum(jnp.maximum(v[0:-2], v[1:-1]), v[2:])

    h = maxpool3(conv_relu(x, cw1_ref, cb1_ref))
    h = maxpool3(conv_relu(h.astype(bf16), cw2_ref, cb2_ref))    # (T, Bb, Cout) f32

    T, Bb, Cout = h.shape
    H = whh0_ref.shape[0]
    G = 4 * H

    # Hoisted layer-0 input projection + bias: one big MXU matmul, parked in VMEM scratch.
    xg = jnp.dot(h.reshape(T * Bb, Cout).astype(bf16), wih0_ref[...],
                 preferred_element_type=f32) + bl0_ref[...]
    xg_ref[...] = xg.reshape(T, Bb, G)

    whh0 = whh0_ref[...]                               # (H, 4H)  bf16
    wih1 = wih1_ref[...]                               # (H, 4H)  bf16
    whh1 = whh1_ref[...]                               # (H, 4H)  bf16
    bl1 = jnp.broadcast_to(bl1_ref[...], (Bb, G))      # hoisted bias broadcast

    # Lane mask for the tanh (g) block.  Gate order inside kernel: [o, f, i, g].
    lane = lax.broadcasted_iota(jnp.int32, (Bb, G), 1)
    is_g = lane >= 3 * H

    def lstm_cell(gates, c_slab):
        # gates:  (Bb, 4H) pre-activations, blocks [o | f | i | g]
        # c_slab: (Bb, 4H) with the real cell state in lanes [H:2H] (aligned with f);
        #         other blocks hold bounded garbage that never reaches a real output.
        pre = jnp.where(is_g, gates + gates, gates)
        s = pl.reciprocal(1.0 + jnp.exp(-pre), approx=True)      # EUP exp + EUP rcp
        act = jnp.where(is_g, s + s - 1.0, s)                    # sigma / tanh(g)
        i_al = pltpu.roll(act, 3 * H, axis=1)                    # i block -> f's lanes
        g_al = pltpu.roll(act, 2 * H, axis=1)                    # g block -> f's lanes
        c_new = act * c_slab + i_al * g_al                       # valid at [H:2H]
        t_al = pltpu.roll(jnp.tanh(c_new), 3 * H, axis=1)        # tanh(c) -> o's lanes
        h_slab = act * t_al                                      # valid at [0:H]
        return h_slab[:, 0:H], c_new                             # offset-0 slice (cheap)

    zeros_h = jnp.zeros((Bb, H), f32)
    zeros_c = jnp.zeros((Bb, G), f32)

    def step(t, carry):
        h0, c0, h1, c1 = carry
        g0 = xg_ref[t] + jnp.dot(h0.astype(bf16), whh0, preferred_element_type=f32)
        h0, c0 = lstm_cell(g0, c0)
        g1 = (bl1
              + jnp.dot(h0.astype(bf16), wih1, preferred_element_type=f32)
              + jnp.dot(h1.astype(bf16), whh1, preferred_element_type=f32))
        h1, c1 = lstm_cell(g1, c1)
        return h0, c0, h1, c1

    h0, c0, h1, c1 = lax.fori_loop(0, T, step,
                                   (zeros_h, zeros_c, zeros_h, zeros_c),
                                   unroll=True)

    # Final FC on the last hidden state of the top layer (lane-padded to 128 outputs).
    out = jnp.dot(h1.astype(bf16), wfc_ref[...],
                  preferred_element_type=f32) + bfc_ref[...]
    o_ref[...] = out


# ---------------------------------------------------------------------------
# Wrapper: layout plumbing (time-major transpose, batch/lane padding, gate column
# permutation, bf16 casts) lives here, outside the kernel.
# ---------------------------------------------------------------------------
def rnn_classifier_forward(x, params, *, batch_block=128):
    B, L, Cin = x.shape
    H = params["whh0"].shape[0]
    n_out = params["wfc"].shape[1]
    T = L - 4                                          # two MaxPool1d(3, stride=1)
    G = 4 * H
    N_pad = _round_up(max(n_out, 128), 128)            # lane-dense output
    bf16 = jnp.bfloat16

    # Batch block: always a multiple of 8; prefer >=2 grid steps (v7x megacore) when the
    # batch is large enough to split without extra waste.
    bb = _round_up(min(batch_block, max(B, 1)), 8)
    B_pad = _round_up(B, bb)
    if B_pad // bb < 2 and B_pad >= 16:
        bb = _round_up(-(-B_pad // 2), 8)
        B_pad = _round_up(B, bb)
    grid = (B_pad // bb,)

    def perm_gates(w):                                 # [i, f, g, o] -> [o, f, i, g]
        i, f, g, o = jnp.split(w, 4, axis=-1)
        return jnp.concatenate([o, f, i, g], axis=-1)

    x_tm = jnp.transpose(x, (1, 0, 2)).astype(bf16)                      # (L, B, Cin)
    x_tm = jnp.pad(x_tm, ((0, 0), (0, B_pad - B), (0, 0)))               # pad batch

    cw1 = params["cw1"].astype(bf16)                                     # (5, Cin, Cmid)
    cw2 = params["cw2"].astype(bf16)                                     # (5, Cmid, Cout)
    wih0 = perm_gates(params["wih0"]).astype(bf16)
    whh0 = perm_gates(params["whh0"]).astype(bf16)
    bl0 = perm_gates(params["bl0"])
    wih1 = perm_gates(params["wih1"]).astype(bf16)
    whh1 = perm_gates(params["whh1"]).astype(bf16)
    bl1 = perm_gates(params["bl1"])
    wfc = jnp.pad(params["wfc"], ((0, 0), (0, N_pad - n_out))).astype(bf16)
    bfc = jnp.pad(params["bfc"], ((0, 0), (0, N_pad - n_out)))

    inputs = (x_tm, cw1, params["cb1"], cw2, params["cb2"],
              wih0, whh0, bl0, wih1, whh1, bl1, wfc, bfc)

    def full_spec(a):                                  # constant index_map: fetched once
        return pl.BlockSpec(a.shape, lambda i, _nd=a.ndim: (0,) * _nd)

    in_specs = ([pl.BlockSpec((L, bb, Cin), lambda i: (0, i, 0))]
                + [full_spec(a) for a in inputs[1:]])
    out_specs = pl.BlockSpec((bb, N_pad), lambda i: (i, 0))

    Cmid = cw1.shape[2]
    Cout = cw2.shape[2]
    flops = 2 * B_pad * (L * 5 * Cin * Cmid
                         + (L - 2) * 5 * Cmid * Cout
                         + T * Cout * G
                         + T * 3 * H * G
                         + H * N_pad)
    transcendentals = B_pad * T * 2 * (2 * G)          # exp + tanh over the 4H slab
    bytes_accessed = int(sum(a.size * a.dtype.itemsize for a in inputs)
                         + B_pad * N_pad * 4)

    out = pl.pallas_call(
        rnn_classifier_kernel,
        out_shape=jax.ShapeDtypeStruct((B_pad, N_pad), jnp.float32),
        grid=grid,
        in_specs=in_specs,
        out_specs=out_specs,
        scratch_shapes=[pltpu.VMEM((T, bb, G), jnp.float32)],
        compiler_params=pltpu.CompilerParams(
            dimension_semantics=("parallel",),
            vmem_limit_bytes=32 * 1024 * 1024),
        cost_estimate=pl.CostEstimate(flops=flops,
                                      transcendentals=transcendentals,
                                      bytes_accessed=bytes_accessed),
    )(*inputs)
    return out[:B, :n_out].reshape(-1)                 # .flatten(start_dim=0)


# ---------------------------------------------------------------------------
# Deterministic parameter construction (PyTorch-like uniform init, synthetic).
# Conv weights stored (K, Cin, Cout); LSTM weights (in, 4H)/(H, 4H) (right-matmul);
# LSTM bias is b_ih + b_hh combined; gate order is PyTorch's (i, f, g, o).
# ---------------------------------------------------------------------------
def make_params(key, input_size, hidden_size, num_classes):
    c_mid = input_size // 2
    c_out = input_size // 4
    ks = jax.random.split(key, 12)

    def uni(k, shape, fan_in):
        bound = 1.0 / jnp.sqrt(fan_in)
        return jax.random.uniform(k, shape, jnp.float32, -bound, bound)

    return {
        "cw1": uni(ks[0], (5, input_size, c_mid), input_size * 5),
        "cb1": uni(ks[1], (1, c_mid), input_size * 5),
        "cw2": uni(ks[2], (5, c_mid, c_out), c_mid * 5),
        "cb2": uni(ks[3], (1, c_out), c_mid * 5),
        "wih0": uni(ks[4], (c_out, 4 * hidden_size), hidden_size),
        "whh0": uni(ks[5], (hidden_size, 4 * hidden_size), hidden_size),
        "bl0":  uni(ks[6], (1, 4 * hidden_size), hidden_size),   # b_ih + b_hh combined
        "wih1": uni(ks[7], (hidden_size, 4 * hidden_size), hidden_size),
        "whh1": uni(ks[8], (hidden_size, 4 * hidden_size), hidden_size),
        "bl1":  uni(ks[9], (1, 4 * hidden_size), hidden_size),
        "wfc": uni(ks[10], (hidden_size, num_classes - 1), hidden_size),
        "bfc": uni(ks[11], (1, num_classes - 1), hidden_size),
    }


# ---------------------------------------------------------------------------
# Pure-JAX reference (same math: bf16 matmul operands, f32 accumulate/elementwise,
# PyTorch gate order [i, f, g, o]).
# ---------------------------------------------------------------------------
def reference_forward(x, p):
    bf16 = jnp.bfloat16
    H = p["whh0"].shape[0]

    def bdot(a, b):
        return jnp.dot(a.astype(bf16), b.astype(bf16),
                       preferred_element_type=jnp.float32)

    def conv_relu(inp, w, b):
        B, L, Ci = inp.shape
        Co = w.shape[2]
        xp = jnp.pad(inp, ((0, 0), (2, 2), (0, 0)))
        cols = jnp.concatenate([xp[:, k:k + L, :] for k in range(5)], axis=-1)
        y = bdot(cols.reshape(B * L, 5 * Ci), w.reshape(5 * Ci, Co)).reshape(B, L, Co)
        return jnp.maximum(y + b[None], 0.0)

    def maxpool3(v):
        return jnp.maximum(jnp.maximum(v[:, 0:-2], v[:, 1:-1]), v[:, 2:])

    h = maxpool3(conv_relu(x, p["cw1"], p["cb1"]))
    h = maxpool3(conv_relu(h, p["cw2"], p["cb2"]))

    def cell(x_t, h_, c_, wih, whh, b):
        g = bdot(x_t, wih) + bdot(h_, whh) + b
        i = jax.nn.sigmoid(g[:, :H])
        f = jax.nn.sigmoid(g[:, H:2 * H])
        gg = jnp.tanh(g[:, 2 * H:3 * H])
        o = jax.nn.sigmoid(g[:, 3 * H:])
        c_new = f * c_ + i * gg
        return o * jnp.tanh(c_new), c_new

    B, T, _ = h.shape
    z = jnp.zeros((B, H), jnp.float32)
    h0, c0, h1, c1 = z, z, z, z
    for t in range(T):
        h0, c0 = cell(h[:, t, :], h0, c0, p["wih0"], p["whh0"], p["bl0"])
        h1, c1 = cell(h0, h1, c1, p["wih1"], p["whh1"], p["bl1"])
    return (bdot(h1, p["wfc"]) + p["bfc"]).reshape(-1)


if __name__ == "__main__":
    batch = 2
    seq = 16
    input_size = 16          # conv channels 16 -> 8 -> 4, LSTM input = 4
    hidden_size = 32
    num_layers = 2
    num_classes = 5          # fc output = num_classes - 1 = 4

    key = jax.random.PRNGKey(0)
    k_x, k_p = jax.random.split(key)
    x = jax.random.normal(k_x, (batch, seq, input_size), jnp.float32)
    params = make_params(k_p, input_size, hidden_size, num_classes)

    out = jax.block_until_ready(rnn_classifier_forward(x, params))
    ref = reference_forward(x, params)

    assert out.shape == (batch * (num_classes - 1),), out.shape
    assert jnp.allclose(out, ref, atol=2e-2, rtol=2e-2), (out, ref)

    print("KERNEL_OK")
</pallas_src>

<mosaic_0001>
module attributes {stable_mosaic.version = 11 : i64} {
  func.func @rnn_classifier_kernel(%arg0: i32, %arg1: memref<16x8x16xbf16, #tpu.memory_space<vmem>>, %arg2: memref<5x16x8xbf16, #tpu.memory_space<vmem>>, %arg3: memref<1x8xf32, #tpu.memory_space<vmem>>, %arg4: memref<5x8x4xbf16, #tpu.memory_space<vmem>>, %arg5: memref<1x4xf32, #tpu.memory_space<vmem>>, %arg6: memref<4x128xbf16, #tpu.memory_space<vmem>>, %arg7: memref<32x128xbf16, #tpu.memory_space<vmem>>, %arg8: memref<1x128xf32, #tpu.memory_space<vmem>>, %arg9: memref<32x128xbf16, #tpu.memory_space<vmem>>, %arg10: memref<32x128xbf16, #tpu.memory_space<vmem>>, %arg11: memref<1x128xf32, #tpu.memory_space<vmem>>, %arg12: memref<32x128xbf16, #tpu.memory_space<vmem>>, %arg13: memref<1x128xf32, #tpu.memory_space<vmem>>, %arg14: memref<8x128xf32, #tpu.memory_space<vmem>>, %arg15: memref<12x8x128xf32, #tpu.memory_space<vmem>>) attributes {dimension_semantics = [#tpu.dimension_semantics<parallel>], iteration_bounds = array<i64: 1>, scalar_prefetch = 0 : i64, scratch_operands = 1 : i64, tpu.core_type = #tpu.core_type<tc>, window_params = [{transform_indices = @transform_0, window_bounds = array<i64: 16, 8, 16>}, {pipeline_mode = #tpu.pipeline_mode<synchronous>, transform_indices = @transform_1, window_bounds = array<i64: 5, 16, 8>}, {pipeline_mode = #tpu.pipeline_mode<synchronous>, transform_indices = @transform_2, window_bounds = array<i64: 1, 8>}, {pipeline_mode = #tpu.pipeline_mode<synchronous>, transform_indices = @transform_3, window_bounds = array<i64: 5, 8, 4>}, {pipeline_mode = #tpu.pipeline_mode<synchronous>, transform_indices = @transform_4, window_bounds = array<i64: 1, 4>}, {pipeline_mode = #tpu.pipeline_mode<synchronous>, transform_indices = @transform_5, window_bounds = array<i64: 4, 128>}, {pipeline_mode = #tpu.pipeline_mode<synchronous>, transform_indices = @transform_6, window_bounds = array<i64: 32, 128>}, {pipeline_mode = #tpu.pipeline_mode<synchronous>, transform_indices = @transform_7, window_bounds = array<i64: 1, 128>}, {pipeline_mode = #tpu.pipeline_mode<synchronous>, transform_indices = @transform_8, window_bounds = array<i64: 32, 128>}, {pipeline_mode = #tpu.pipeline_mode<synchronous>, transform_indices = @transform_9, window_bounds = array<i64: 32, 128>}, {pipeline_mode = #tpu.pipeline_mode<synchronous>, transform_indices = @transform_10, window_bounds = array<i64: 1, 128>}, {pipeline_mode = #tpu.pipeline_mode<synchronous>, transform_indices = @transform_11, window_bounds = array<i64: 32, 128>}, {pipeline_mode = #tpu.pipeline_mode<synchronous>, transform_indices = @transform_12, window_bounds = array<i64: 1, 128>}, {transform_indices = @transform_13, window_bounds = array<i64: 8, 128>}]} {
    %c0 = arith.constant 0 : index
    %c0_0 = arith.constant 0 : index
    %c0_1 = arith.constant 0 : index
    %0 = vector.load %arg1[%c0, %c0_0, %c0_1] : memref<16x8x16xbf16, #tpu.memory_space<vmem>>, vector<16x8x16xbf16>
    %cst = arith.constant 0.000000e+00 : bf16
    %1 = vector.broadcast %cst : bf16 to vector<2x8x16xbf16>
    %2 = tpu.concatenate %1, %0, %1 in 0 : vector<2x8x16xbf16>, vector<16x8x16xbf16>, vector<2x8x16xbf16> -> vector<20x8x16xbf16>
    %3 = vector.extract_strided_slice %2 {offsets = [0, 0, 0], sizes = [16, 8, 16], strides = [1, 1, 1]} : vector<20x8x16xbf16> to vector<16x8x16xbf16>
    %4 = vector.shape_cast %3 : vector<16x8x16xbf16> to vector<128x16xbf16>
    %c0_2 = arith.constant 0 : index
    %c0_3 = arith.constant 0 : index
    %c0_4 = arith.constant 0 : index
    %5 = vector.load %arg2[%c0_2, %c0_3, %c0_4] : memref<5x16x8xbf16, #tpu.memory_space<vmem>>, vector<1x16x8xbf16>
    %6 = vector.shape_cast %5 : vector<1x16x8xbf16> to vector<16x8xbf16>
    %cst_5 = arith.constant dense<0.000000e+00> : vector<128x8xf32>
    %7 = tpu.matmul %4, %6, %cst_5 {dimension_numbers = #tpu.dot_dimension_numbers<[1], [0], [0], [1], [0, 0, 1, 1], [], []>} : vector<128x16xbf16>, vector<16x8xbf16>, vector<128x8xf32> -> vector<128x8xf32>
    %8 = vector.extract_strided_slice %2 {offsets = [1, 0, 0], sizes = [16, 8, 16], strides = [1, 1, 1]} : vector<20x8x16xbf16> to vector<16x8x16xbf16>
    %9 = vector.shape_cast %8 : vector<16x8x16xbf16> to vector<128x16xbf16>
    %c1 = arith.constant 1 : index
    %c0_6 = arith.constant 0 : index
    %c0_7 = arith.constant 0 : index
    %10 = vector.load %arg2[%c1, %c0_6, %c0_7] : memref<5x16x8xbf16, #tpu.memory_space<vmem>>, vector<1x16x8xbf16>
    %11 = vector.shape_cast %10 : vector<1x16x8xbf16> to vector<16x8xbf16>
    %cst_8 = arith.constant dense<0.000000e+00> : vector<128x8xf32>
    %12 = tpu.matmul %9, %11, %cst_8 {dimension_numbers = #tpu.dot_dimension_numbers<[1], [0], [0], [1], [0, 0, 1, 1], [], []>} : vector<128x16xbf16>, vector<16x8xbf16>, vector<128x8xf32> -> vector<128x8xf32>
    %13 = arith.addf %7, %12 : vector<128x8xf32>
    %14 = vector.extract_strided_slice %2 {offsets = [2, 0, 0], sizes = [16, 8, 16], strides = [1, 1, 1]} : vector<20x8x16xbf16> to vector<16x8x16xbf16>
    %15 = vector.shape_cast %14 : vector<16x8x16xbf16> to vector<128x16xbf16>
    %c2 = arith.constant 2 : index
    %c0_9 = arith.constant 0 : index
    %c0_10 = arith.constant 0 : index
    %16 = vector.load %arg2[%c2, %c0_9, %c0_10] : memref<5x16x8xbf16, #tpu.memory_space<vmem>>, vector<1x16x8xbf16>
    %17 = vector.shape_cast %16 : vector<1x16x8xbf16> to vector<16x8xbf16>
    %cst_11 = arith.constant dense<0.000000e+00> : vector<128x8xf32>
    %18 = tpu.matmul %15, %17, %cst_11 {dimension_numbers = #tpu.dot_dimension_numbers<[1], [0], [0], [1], [0, 0, 1, 1], [], []>} : vector<128x16xbf16>, vector<16x8xbf16>, vector<128x8xf32> -> vector<128x8xf32>
    %19 = arith.addf %13, %18 : vector<128x8xf32>
    %20 = vector.extract_strided_slice %2 {offsets = [3, 0, 0], sizes = [16, 8, 16], strides = [1, 1, 1]} : vector<20x8x16xbf16> to vector<16x8x16xbf16>
    %21 = vector.shape_cast %20 : vector<16x8x16xbf16> to vector<128x16xbf16>
    %c3 = arith.constant 3 : index
    %c0_12 = arith.constant 0 : index
    %c0_13 = arith.constant 0 : index
    %22 = vector.load %arg2[%c3, %c0_12, %c0_13] : memref<5x16x8xbf16, #tpu.memory_space<vmem>>, vector<1x16x8xbf16>
    %23 = vector.shape_cast %22 : vector<1x16x8xbf16> to vector<16x8xbf16>
    %cst_14 = arith.constant dense<0.000000e+00> : vector<128x8xf32>
    %24 = tpu.matmul %21, %23, %cst_14 {dimension_numbers = #tpu.dot_dimension_numbers<[1], [0], [0], [1], [0, 0, 1, 1], [], []>} : vector<128x16xbf16>, vector<16x8xbf16>, vector<128x8xf32> -> vector<128x8xf32>
    %25 = arith.addf %19, %24 : vector<128x8xf32>
    %26 = vector.extract_strided_slice %2 {offsets = [4, 0, 0], sizes = [16, 8, 16], strides = [1, 1, 1]} : vector<20x8x16xbf16> to vector<16x8x16xbf16>
    %27 = vector.shape_cast %26 : vector<16x8x16xbf16> to vector<128x16xbf16>
    %c4 = arith.constant 4 : index
    %c0_15 = arith.constant 0 : index
    %c0_16 = arith.constant 0 : index
    %28 = vector.load %arg2[%c4, %c0_15, %c0_16] : memref<5x16x8xbf16, #tpu.memory_space<vmem>>, vector<1x16x8xbf16>
    %29 = vector.shape_cast %28 : vector<1x16x8xbf16> to vector<16x8xbf16>
    %cst_17 = arith.constant dense<0.000000e+00> : vector<128x8xf32>
    %30 = tpu.matmul %27, %29, %cst_17 {dimension_numbers = #tpu.dot_dimension_numbers<[1], [0], [0], [1], [0, 0, 1, 1], [], []>} : vector<128x16xbf16>, vector<16x8xbf16>, vector<128x8xf32> -> vector<128x8xf32>
    %31 = arith.addf %25, %30 : vector<128x8xf32>
    %32 = vector.shape_cast %31 : vector<128x8xf32> to vector<16x8x8xf32>
    %c0_18 = arith.constant 0 : index
    %c0_19 = arith.constant 0 : index
    %33 = vector.load %arg3[%c0_18, %c0_19] : memref<1x8xf32, #tpu.memory_space<vmem>>, vector<1x8xf32>
    %34 = vector.shape_cast %33 : vector<1x8xf32> to vector<1x1x8xf32>
    %35 = vector.broadcast %34 : vector<1x1x8xf32> to vector<16x8x8xf32>
    %36 = arith.addf %32, %35 : vector<16x8x8xf32>
    %cst_20 = arith.constant 0.000000e+00 : f32
    %37 = vector.broadcast %cst_20 : f32 to vector<16x8x8xf32>
    %38 = arith.maximumf %36, %37 : vector<16x8x8xf32>
    %39 = vector.extract_strided_slice %38 {offsets = [0, 0, 0], sizes = [14, 8, 8], strides = [1, 1, 1]} : vector<16x8x8xf32> to vector<14x8x8xf32>
    %40 = vector.extract_strided_slice %38 {offsets = [1, 0, 0], sizes = [14, 8, 8], strides = [1, 1, 1]} : vector<16x8x8xf32> to vector<14x8x8xf32>
    %41 = arith.maximumf %39, %40 : vector<14x8x8xf32>
    %42 = vector.extract_strided_slice %38 {offsets = [2, 0, 0], sizes = [14, 8, 8], strides = [1, 1, 1]} : vector<16x8x8xf32> to vector<14x8x8xf32>
    %43 = arith.maximumf %41, %42 : vector<14x8x8xf32>
    %44 = arith.truncf %43 : vector<14x8x8xf32> to vector<14x8x8xbf16>
    %cst_21 = arith.constant 0.000000e+00 : bf16
    %45 = vector.broadcast %cst_21 : bf16 to vector<2x8x8xbf16>
    %46 = tpu.concatenate %45, %44, %45 in 0 : vector<2x8x8xbf16>, vector<14x8x8xbf16>, vector<2x8x8xbf16> -> vector<18x8x8xbf16>
    %47 = vector.extract_strided_slice %46 {offsets = [0, 0, 0], sizes = [14, 8, 8], strides = [1, 1, 1]} : vector<18x8x8xbf16> to vector<14x8x8xbf16>
    %48 = vector.shape_cast %47 : vector<14x8x8xbf16> to vector<112x8xbf16>
    %c0_22 = arith.constant 0 : index
    %c0_23 = arith.constant 0 : index
    %c0_24 = arith.constant 0 : index
    %49 = vector.load %arg4[%c0_22, %c0_23, %c0_24] : memref<5x8x4xbf16, #tpu.memory_space<vmem>>, vector<1x8x4xbf16>
    %50 = vector.shape_cast %49 : vector<1x8x4xbf16> to vector<8x4xbf16>
    %cst_25 = arith.constant dense<0.000000e+00> : vector<112x4xf32>
    %51 = tpu.matmul %48, %50, %cst_25 {dimension_numbers = #tpu.dot_dimension_numbers<[1], [0], [0], [1], [0, 0, 1, 1], [], []>} : vector<112x8xbf16>, vector<8x4xbf16>, vector<112x4xf32> -> vector<112x4xf32>
    %52 = vector.extract_strided_slice %46 {offsets = [1, 0, 0], sizes = [14, 8, 8], strides = [1, 1, 1]} : vector<18x8x8xbf16> to vector<14x8x8xbf16>
    %53 = vector.shape_cast %52 : vector<14x8x8xbf16> to vector<112x8xbf16>
    %c1_26 = arith.constant 1 : index
    %c0_27 = arith.constant 0 : index
    %c0_28 = arith.constant 0 : index
    %54 = vector.load %arg4[%c1_26, %c0_27, %c0_28] : memref<5x8x4xbf16, #tpu.memory_space<vmem>>, vector<1x8x4xbf16>
    %55 = vector.shape_cast %54 : vector<1x8x4xbf16> to vector<8x4xbf16>
    %cst_29 = arith.constant dense<0.000000e+00> : vector<112x4xf32>
    %56 = tpu.matmul %53, %55, %cst_29 {dimension_numbers = #tpu.dot_dimension_numbers<[1], [0], [0], [1], [0, 0, 1, 1], [], []>} : vector<112x8xbf16>, vector<8x4xbf16>, vector<112x4xf32> -> vector<112x4xf32>
    %57 = arith.addf %51, %56 : vector<112x4xf32>
    %58 = vector.extract_strided_slice %46 {offsets = [2, 0, 0], sizes = [14, 8, 8], strides = [1, 1, 1]} : vector<18x8x8xbf16> to vector<14x8x8xbf16>
    %59 = vector.shape_cast %58 : vector<14x8x8xbf16> to vector<112x8xbf16>
    %c2_30 = arith.constant 2 : index
    %c0_31 = arith.constant 0 : index
    %c0_32 = arith.constant 0 : index
    %60 = vector.load %arg4[%c2_30, %c0_31, %c0_32] : memref<5x8x4xbf16, #tpu.memory_space<vmem>>, vector<1x8x4xbf16>
    %61 = vector.shape_cast %60 : vector<1x8x4xbf16> to vector<8x4xbf16>
    %cst_33 = arith.constant dense<0.000000e+00> : vector<112x4xf32>
    %62 = tpu.matmul %59, %61, %cst_33 {dimension_numbers = #tpu.dot_dimension_numbers<[1], [0], [0], [1], [0, 0, 1, 1], [], []>} : vector<112x8xbf16>, vector<8x4xbf16>, vector<112x4xf32> -> vector<112x4xf32>
    %63 = arith.addf %57, %62 : vector<112x4xf32>
    %64 = vector.extract_strided_slice %46 {offsets = [3, 0, 0], sizes = [14, 8, 8], strides = [1, 1, 1]} : vector<18x8x8xbf16> to vector<14x8x8xbf16>
    %65 = vector.shape_cast %64 : vector<14x8x8xbf16> to vector<112x8xbf16>
    %c3_34 = arith.constant 3 : index
    %c0_35 = arith.constant 0 : index
    %c0_36 = arith.constant 0 : index
    %66 = vector.load %arg4[%c3_34, %c0_35, %c0_36] : memref<5x8x4xbf16, #tpu.memory_space<vmem>>, vector<1x8x4xbf16>
    %67 = vector.shape_cast %66 : vector<1x8x4xbf16> to vector<8x4xbf16>
    %cst_37 = arith.constant dense<0.000000e+00> : vector<112x4xf32>
    %68 = tpu.matmul %65, %67, %cst_37 {dimension_numbers = #tpu.dot_dimension_numbers<[1], [0], [0], [1], [0, 0, 1, 1], [], []>} : vector<112x8xbf16>, vector<8x4xbf16>, vector<112x4xf32> -> vector<112x4xf32>
    %69 = arith.addf %63, %68 : vector<112x4xf32>
    %70 = vector.extract_strided_slice %46 {offsets = [4, 0, 0], sizes = [14, 8, 8], strides = [1, 1, 1]} : vector<18x8x8xbf16> to vector<14x8x8xbf16>
    %71 = vector.shape_cast %70 : vector<14x8x8xbf16> to vector<112x8xbf16>
    %c4_38 = arith.constant 4 : index
    %c0_39 = arith.constant 0 : index
    %c0_40 = arith.constant 0 : index
    %72 = vector.load %arg4[%c4_38, %c0_39, %c0_40] : memref<5x8x4xbf16, #tpu.memory_space<vmem>>, vector<1x8x4xbf16>
    %73 = vector.shape_cast %72 : vector<1x8x4xbf16> to vector<8x4xbf16>
    %cst_41 = arith.constant dense<0.000000e+00> : vector<112x4xf32>
    %74 = tpu.matmul %71, %73, %cst_41 {dimension_numbers = #tpu.dot_dimension_numbers<[1], [0], [0], [1], [0, 0, 1, 1], [], []>} : vector<112x8xbf16>, vector<8x4xbf16>, vector<112x4xf32> -> vector<112x4xf32>
    %75 = arith.addf %69, %74 : vector<112x4xf32>
    %76 = vector.shape_cast %75 : vector<112x4xf32> to vector<14x8x4xf32>
    %c0_42 = arith.constant 0 : index
    %c0_43 = arith.constant 0 : index
    %77 = vector.load %arg5[%c0_42, %c0_43] : memref<1x4xf32, #tpu.memory_space<vmem>>, vector<1x4xf32>
    %78 = vector.shape_cast %77 : vector<1x4xf32> to vector<1x1x4xf32>
    %79 = vector.broadcast %78 : vector<1x1x4xf32> to vector<14x8x4xf32>
    %80 = arith.addf %76, %79 : vector<14x8x4xf32>
    %cst_44 = arith.constant 0.000000e+00 : f32
    %81 = vector.broadcast %cst_44 : f32 to vector<14x8x4xf32>
    %82 = arith.maximumf %80, %81 : vector<14x8x4xf32>
    %83 = vector.extract_strided_slice %82 {offsets = [0, 0, 0], sizes = [12, 8, 4], strides = [1, 1, 1]} : vector<14x8x4xf32> to vector<12x8x4xf32>
    %84 = vector.extract_strided_slice %82 {offsets = [1, 0, 0], sizes = [12, 8, 4], strides = [1, 1, 1]} : vector<14x8x4xf32> to vector<12x8x4xf32>
    %85 = arith.maximumf %83, %84 : vector<12x8x4xf32>
    %86 = vector.extract_strided_slice %82 {offsets = [2, 0, 0], sizes = [12, 8, 4], strides = [1, 1, 1]} : vector<14x8x4xf32> to vector<12x8x4xf32>
    %87 = arith.maximumf %85, %86 : vector<12x8x4xf32>
    %88 = vector.shape_cast %87 : vector<12x8x4xf32> to vector<96x4xf32>
    %89 = arith.truncf %88 : vector<96x4xf32> to vector<96x4xbf16>
    %c0_45 = arith.constant 0 : index
    %c0_46 = arith.constant 0 : index
    %90 = vector.load %arg6[%c0_45, %c0_46] : memref<4x128xbf16, #tpu.memory_space<vmem>>, vector<4x128xbf16>
    %cst_47 = arith.constant dense<0.000000e+00> : vector<96x128xf32>
    %91 = tpu.matmul %89, %90, %cst_47 {dimension_numbers = #tpu.dot_dimension_numbers<[1], [0], [0], [1], [0, 0, 1, 1], [], []>} : vector<96x4xbf16>, vector<4x128xbf16>, vector<96x128xf32> -> vector<96x128xf32>
    %c0_48 = arith.constant 0 : index
    %c0_49 = arith.constant 0 : index
    %92 = vector.load %arg8[%c0_48, %c0_49] : memref<1x128xf32, #tpu.memory_space<vmem>>, vector<1x128xf32>
    %93 = vector.broadcast %92 : vector<1x128xf32> to vector<96x128xf32>
    %94 = arith.addf %91, %93 : vector<96x128xf32>
    %95 = vector.shape_cast %94 : vector<96x128xf32> to vector<12x8x128xf32>
    %c0_50 = arith.constant 0 : index
    %c0_51 = arith.constant 0 : index
    %c0_52 = arith.constant 0 : index
    %96 = vector.load %arg15[%c0_50, %c0_51, %c0_52] : memref<12x8x128xf32, #tpu.memory_space<vmem>>, vector<12x8x128xf32>
    tpu.vector_store %arg15[%c0_50, %c0_51, %c0_52], %95 {strides = array<i32>} : memref<12x8x128xf32, #tpu.memory_space<vmem>>, vector<12x8x128xf32>,
    %c0_53 = arith.constant 0 : index
    %c0_54 = arith.constant 0 : index
    %97 = vector.load %arg7[%c0_53, %c0_54] : memref<32x128xbf16, #tpu.memory_space<vmem>>, vector<32x128xbf16>
    %c0_55 = arith.constant 0 : index
    %c0_56 = arith.constant 0 : index
    %98 = vector.load %arg9[%c0_55, %c0_56] : memref<32x128xbf16, #tpu.memory_space<vmem>>, vector<32x128xbf16>
    %c0_57 = arith.constant 0 : index
    %c0_58 = arith.constant 0 : index
    %99 = vector.load %arg10[%c0_57, %c0_58] : memref<32x128xbf16, #tpu.memory_space<vmem>>, vector<32x128xbf16>
    %c0_59 = arith.constant 0 : index
    %c0_60 = arith.constant 0 : index
    %100 = vector.load %arg11[%c0_59, %c0_60] : memref<1x128xf32, #tpu.memory_space<vmem>>, vector<1x128xf32>
    %101 = vector.shape_cast %100 : vector<1x128xf32> to vector<1x128xf32>
    %102 = vector.broadcast %101 : vector<1x128xf32> to vector<8x128xf32>
    %103 = tpu.iota {dimensions = array<i32: 1>} : vector<8x128xi32>
    %c96_i32 = arith.constant 96 : i32
    %104 = vector.broadcast %c96_i32 : i32 to vector<8x128xi32>
    %105 = arith.cmpi sge, %103, %104 : vector<8x128xi32>
    %cst_61 = arith.constant 0.000000e+00 : f32
    %106 = vector.broadcast %cst_61 : f32 to vector<8x32xf32>
    %cst_62 = arith.constant 0.000000e+00 : f32
    %107 = vector.broadcast %cst_62 : f32 to vector<8x128xf32>
    %c0_i32 = arith.constant 0 : i32
    %108 = arith.index_cast %c0_i32 : i32 to index
    %c0_63 = arith.constant 0 : index
    %c0_64 = arith.constant 0 : index
    %109 = vector.load %arg15[%108, %c0_63, %c0_64] : memref<12x8x128xf32, #tpu.memory_space<vmem>>, vector<1x8x128xf32>
    %110 = vector.shape_cast %109 : vector<1x8x128xf32> to vector<8x128xf32>
    %111 = arith.truncf %106 : vector<8x32xf32> to vector<8x32xbf16>
    %cst_65 = arith.constant dense<0.000000e+00> : vector<8x128xf32>
    %112 = tpu.matmul %111, %97, %cst_65 {dimension_numbers = #tpu.dot_dimension_numbers<[1], [0], [0], [1], [0, 0, 1, 1], [], []>} : vector<8x32xbf16>, vector<32x128xbf16>, vector<8x128xf32> -> vector<8x128xf32>
    %113 = arith.addf %110, %112 : vector<8x128xf32>
    %114 = arith.addf %113, %113 : vector<8x128xf32>
    %115 = arith.select %105, %114, %113 : vector<8x128xi1>, vector<8x128xf32>
    %cst_66 = arith.constant 0.000000e+00 : f32
    %116 = vector.broadcast %cst_66 : f32 to vector<8x128xf32>
    %117 = arith.subf %116, %115 : vector<8x128xf32>
    %118 = math.exp %117 : vector<8x128xf32>
    %cst_67 = arith.constant 1.000000e+00 : f32
    %119 = vector.broadcast %cst_67 : f32 to vector<8x128xf32>
    %120 = arith.addf %119, %118 : vector<8x128xf32>
    %121 = tpu.reciprocal %120 {approx = true} : vector<8x128xf32> -> vector<8x128xf32>
    %122 = arith.addf %121, %121 : vector<8x128xf32>
    %cst_68 = arith.constant 1.000000e+00 : f32
    %123 = vector.broadcast %cst_68 : f32 to vector<8x128xf32>
    %124 = arith.subf %122, %123 : vector<8x128xf32>
    %125 = arith.select %105, %124, %121 : vector<8x128xi1>, vector<8x128xf32>
    %c96_i32_69 = arith.constant 96 : i32
    %126 = tpu.dynamic_rotate %125 by %c96_i32_69 dim 1 : vector<8x128xf32>, i32 -> vector<8x128xf32>
    %c64_i32 = arith.constant 64 : i32
    %127 = tpu.dynamic_rotate %125 by %c64_i32 dim 1 : vector<8x128xf32>, i32 -> vector<8x128xf32>
    %128 = arith.mulf %125, %107 : vector<8x128xf32>
    %129 = arith.mulf %126, %127 : vector<8x128xf32>
    %130 = arith.addf %128, %129 : vector<8x128xf32>
    %131 = math.tanh %130 : vector<8x128xf32>
    %c96_i32_70 = arith.constant 96 : i32
    %132 = tpu.dynamic_rotate %131 by %c96_i32_70 dim 1 : vector<8x128xf32>, i32 -> vector<8x128xf32>
    %133 = arith.mulf %125, %132 : vector<8x128xf32>
    %134 = vector.extract_strided_slice %133 {offsets = [0, 0], sizes = [8, 32], strides = [1, 1]} : vector<8x128xf32> to vector<8x32xf32>
    %135 = arith.truncf %134 : vector<8x32xf32> to vector<8x32xbf16>
    %cst_71 = arith.constant dense<0.000000e+00> : vector<8x128xf32>
    %136 = tpu.matmul %135, %98, %cst_71 {dimension_numbers = #tpu.dot_dimension_numbers<[1], [0], [0], [1], [0, 0, 1, 1], [], []>} : vector<8x32xbf16>, vector<32x128xbf16>, vector<8x128xf32> -> vector<8x128xf32>
    %137 = arith.addf %102, %136 : vector<8x128xf32>
    %138 = arith.truncf %106 : vector<8x32xf32> to vector<8x32xbf16>
    %cst_72 = arith.constant dense<0.000000e+00> : vector<8x128xf32>
    %139 = tpu.matmul %138, %99, %cst_72 {dimension_numbers = #tpu.dot_dimension_numbers<[1], [0], [0], [1], [0, 0, 1, 1], [], []>} : vector<8x32xbf16>, vector<32x128xbf16>, vector<8x128xf32> -> vector<8x128xf32>
    %140 = arith.addf %137, %139 : vector<8x128xf32>
    %141 = arith.addf %140, %140 : vector<8x128xf32>
    %142 = arith.select %105, %141, %140 : vector<8x128xi1>, vector<8x128xf32>
    %cst_73 = arith.constant 0.000000e+00 : f32
    %143 = vector.broadcast %cst_73 : f32 to vector<8x128xf32>
    %144 = arith.subf %143, %142 : vector<8x128xf32>
    %145 = math.exp %144 : vector<8x128xf32>
    %cst_74 = arith.constant 1.000000e+00 : f32
    %146 = vector.broadcast %cst_74 : f32 to vector<8x128xf32>
    %147 = arith.addf %146, %145 : vector<8x128xf32>
    %148 = tpu.reciprocal %147 {approx = true} : vector<8x128xf32> -> vector<8x128xf32>
    %149 = arith.addf %148, %148 : vector<8x128xf32>
    %cst_75 = arith.constant 1.000000e+00 : f32
    %150 = vector.broadcast %cst_75 : f32 to vector<8x128xf32>
    %151 = arith.subf %149, %150 : vector<8x128xf32>
    %152 = arith.select %105, %151, %148 : vector<8x128xi1>, vector<8x128xf32>
    %c96_i32_76 = arith.constant 96 : i32
    %153 = tpu.dynamic_rotate %152 by %c96_i32_76 dim 1 : vector<8x128xf32>, i32 -> vector<8x128xf32>
    %c64_i32_77 = arith.constant 64 : i32
    %154 = tpu.dynamic_rotate %152 by %c64_i32_77 dim 1 : vector<8x128xf32>, i32 -> vector<8x128xf32>
    %155 = arith.mulf %152, %107 : vector<8x128xf32>
    %156 = arith.mulf %153, %154 : vector<8x128xf32>
    %157 = arith.addf %155, %156 : vector<8x128xf32>
    %158 = math.tanh %157 : vector<8x128xf32>
    %c96_i32_78 = arith.constant 96 : i32
    %159 = tpu.dynamic_rotate %158 by %c96_i32_78 dim 1 : vector<8x128xf32>, i32 -> vector<8x128xf32>
    %160 = arith.mulf %152, %159 : vector<8x128xf32>
    %161 = vector.extract_strided_slice %160 {offsets = [0, 0], sizes = [8, 32], strides = [1, 1]} : vector<8x128xf32> to vector<8x32xf32>
    %c1_i32 = arith.constant 1 : i32
    %162 = arith.index_cast %c1_i32 : i32 to index
    %c0_79 = arith.constant 0 : index
    %c0_80 = arith.constant 0 : index
    %163 = vector.load %arg15[%162, %c0_79, %c0_80] : memref<12x8x128xf32, #tpu.memory_space<vmem>>, vector<1x8x128xf32>
    %164 = vector.shape_cast %163 : vector<1x8x128xf32> to vector<8x128xf32>
    %165 = arith.truncf %134 : vector<8x32xf32> to vector<8x32xbf16>
    %cst_81 = arith.constant dense<0.000000e+00> : vector<8x128xf32>
    %166 = tpu.matmul %165, %97, %cst_81 {dimension_numbers = #tpu.dot_dimension_numbers<[1], [0], [0], [1], [0, 0, 1, 1], [], []>} : vector<8x32xbf16>, vector<32x128xbf16>, vector<8x128xf32> -> vector<8x128xf32>
    %167 = arith.addf %164, %166 : vector<8x128xf32>
    %168 = arith.addf %167, %167 : vector<8x128xf32>
    %169 = arith.select %105, %168, %167 : vector<8x128xi1>, vector<8x128xf32>
    %cst_82 = arith.constant 0.000000e+00 : f32
    %170 = vector.broadcast %cst_82 : f32 to vector<8x128xf32>
    %171 = arith.subf %170, %169 : vector<8x128xf32>
    %172 = math.exp %171 : vector<8x128xf32>
    %cst_83 = arith.constant 1.000000e+00 : f32
    %173 = vector.broadcast %cst_83 : f32 to vector<8x128xf32>
    %174 = arith.addf %173, %172 : vector<8x128xf32>
    %175 = tpu.reciprocal %174 {approx = true} : vector<8x128xf32> -> vector<8x128xf32>
    %176 = arith.addf %175, %175 : vector<8x128xf32>
    %cst_84 = arith.constant 1.000000e+00 : f32
    %177 = vector.broadcast %cst_84 : f32 to vector<8x128xf32>
    %178 = arith.subf %176, %177 : vector<8x128xf32>
    %179 = arith.select %105, %178, %175 : vector<8x128xi1>, vector<8x128xf32>
    %c96_i32_85 = arith.constant 96 : i32
    %180 = tpu.dynamic_rotate %179 by %c96_i32_85 dim 1 : vector<8x128xf32>, i32 -> vector<8x128xf32>
    %c64_i32_86 = arith.constant 64 : i32
    %181 = tpu.dynamic_rotate %179 by %c64_i32_86 dim 1 : vector<8x128xf32>, i32 -> vector<8x128xf32>
    %182 = arith.mulf %179, %130 : vector<8x128xf32>
    %183 = arith.mulf %180, %181 : vector<8x128xf32>
    %184 = arith.addf %182, %183 : vector<8x128xf32>
    %185 = math.tanh %184 : vector<8x128xf32>
    %c96_i32_87 = arith.constant 96 : i32
    %186 = tpu.dynamic_rotate %185 by %c96_i32_87 dim 1 : vector<8x128xf32>, i32 -> vector<8x128xf32>
    %187 = arith.mulf %179, %186 : vector<8x128xf32>
    %188 = vector.extract_strided_slice %187 {offsets = [0, 0], sizes = [8, 32], strides = [1, 1]} : vector<8x128xf32> to vector<8x32xf32>
    %189 = arith.truncf %188 : vector<8x32xf32> to vector<8x32xbf16>
    %cst_88 = arith.constant dense<0.000000e+00> : vector<8x128xf32>
    %190 = tpu.matmul %189, %98, %cst_88 {dimension_numbers = #tpu.dot_dimension_numbers<[1], [0], [0], [1], [0, 0, 1, 1], [], []>} : vector<8x32xbf16>, vector<32x128xbf16>, vector<8x128xf32> -> vector<8x128xf32>
    %191 = arith.addf %102, %190 : vector<8x128xf32>
    %192 = arith.truncf %161 : vector<8x32xf32> to vector<8x32xbf16>
    %cst_89 = arith.constant dense<0.000000e+00> : vector<8x128xf32>
    %193 = tpu.matmul %192, %99, %cst_89 {dimension_numbers = #tpu.dot_dimension_numbers<[1], [0], [0], [1], [0, 0, 1, 1], [], []>} : vector<8x32xbf16>, vector<32x128xbf16>, vector<8x128xf32> -> vector<8x128xf32>
    %194 = arith.addf %191, %193 : vector<8x128xf32>
    %195 = arith.addf %194, %194 : vector<8x128xf32>
    %196 = arith.select %105, %195, %194 : vector<8x128xi1>, vector<8x128xf32>
    %cst_90 = arith.constant 0.000000e+00 : f32
    %197 = vector.broadcast %cst_90 : f32 to vector<8x128xf32>
    %198 = arith.subf %197, %196 : vector<8x128xf32>
    %199 = math.exp %198 : vector<8x128xf32>
    %cst_91 = arith.constant 1.000000e+00 : f32
    %200 = vector.broadcast %cst_91 : f32 to vector<8x128xf32>
    %201 = arith.addf %200, %199 : vector<8x128xf32>
    %202 = tpu.reciprocal %201 {approx = true} : vector<8x128xf32> -> vector<8x128xf32>
    %203 = arith.addf %202, %202 : vector<8x128xf32>
    %cst_92 = arith.constant 1.000000e+00 : f32
    %204 = vector.broadcast %cst_92 : f32 to vector<8x128xf32>
    %205 = arith.subf %203, %204 : vector<8x128xf32>
    %206 = arith.select %105, %205, %202 : vector<8x128xi1>, vector<8x128xf32>
    %c96_i32_93 = arith.constant 96 : i32
    %207 = tpu.dynamic_rotate %206 by %c96_i32_93 dim 1 : vector<8x128xf32>, i32 -> vector<8x128xf32>
    %c64_i32_94 = arith.constant 64 : i32
    %208 = tpu.dynamic_rotate %206 by %c64_i32_94 dim 1 : vector<8x128xf32>, i32 -> vector<8x128xf32>
    %209 = arith.mulf %206, %157 : vector<8x128xf32>
    %210 = arith.mulf %207, %208 : vector<8x128xf32>
    %211 = arith.addf %209, %210 : vector<8x128xf32>
    %212 = math.tanh %211 : vector<8x128xf32>
    %c96_i32_95 = arith.constant 96 : i32
    %213 = tpu.dynamic_rotate %212 by %c96_i32_95 dim 1 : vector<8x128xf32>, i32 -> vector<8x128xf32>
    %214 = arith.mulf %206, %213 : vector<8x128xf32>
    %215 = vector.extract_strided_slice %214 {offsets = [0, 0], sizes = [8, 32], strides = [1, 1]} : vector<8x128xf32> to vector<8x32xf32>
    %c2_i32 = arith.constant 2 : i32
    %216 = arith.index_cast %c2_i32 : i32 to index
    %c0_96 = arith.constant 0 : index
    %c0_97 = arith.constant 0 : index
    %217 = vector.load %arg15[%216, %c0_96, %c0_97] : memref<12x8x128xf32, #tpu.memory_space<vmem>>, vector<1x8x128xf32>
    %218 = vector.shape_cast %217 : vector<1x8x128xf32> to vector<8x128xf32>
    %219 = arith.truncf %188 : vector<8x32xf32> to vector<8x32xbf16>
    %cst_98 = arith.constant dense<0.000000e+00> : vector<8x128xf32>
    %220 = tpu.matmul %219, %97, %cst_98 {dimension_numbers = #tpu.dot_dimension_numbers<[1], [0], [0], [1], [0, 0, 1, 1], [], []>} : vector<8x32xbf16>, vector<32x128xbf16>, vector<8x128xf32> -> vector<8x128xf32>
    %221 = arith.addf %218, %220 : vector<8x128xf32>
    %222 = arith.addf %221, %221 : vector<8x128xf32>
    %223 = arith.select %105, %222, %221 : vector<8x128xi1>, vector<8x128xf32>
    %cst_99 = arith.constant 0.000000e+00 : f32
    %224 = vector.broadcast %cst_99 : f32 to vector<8x128xf32>
    %225 = arith.subf %224, %223 : vector<8x128xf32>
    %226 = math.exp %225 : vector<8x128xf32>
    %cst_100 = arith.constant 1.000000e+00 : f32
    %227 = vector.broadcast %cst_100 : f32 to vector<8x128xf32>
    %228 = arith.addf %227, %226 : vector<8x128xf32>
    %229 = tpu.reciprocal %228 {approx = true} : vector<8x128xf32> -> vector<8x128xf32>
    %230 = arith.addf %229, %229 : vector<8x128xf32>
    %cst_101 = arith.constant 1.000000e+00 : f32
    %231 = vector.broadcast %cst_101 : f32 to vector<8x128xf32>
    %232 = arith.subf %230, %231 : vector<8x128xf32>
    %233 = arith.select %105, %232, %229 : vector<8x128xi1>, vector<8x128xf32>
    %c96_i32_102 = arith.constant 96 : i32
    %234 = tpu.dynamic_rotate %233 by %c96_i32_102 dim 1 : vector<8x128xf32>, i32 -> vector<8x128xf32>
    %c64_i32_103 = arith.constant 64 : i32
    %235 = tpu.dynamic_rotate %233 by %c64_i32_103 dim 1 : vector<8x128xf32>, i32 -> vector<8x128xf32>
    %236 = arith.mulf %233, %184 : vector<8x128xf32>
    %237 = arith.mulf %234, %235 : vector<8x128xf32>
    %238 = arith.addf %236, %237 : vector<8x128xf32>
    %239 = math.tanh %238 : vector<8x128xf32>
    %c96_i32_104 = arith.constant 96 : i32
    %240 = tpu.dynamic_rotate %239 by %c96_i32_104 dim 1 : vector<8x128xf32>, i32 -> vector<8x128xf32>
    %241 = arith.mulf %233, %240 : vector<8x128xf32>
    %242 = vector.extract_strided_slice %241 {offsets = [0, 0], sizes = [8, 32], strides = [1, 1]} : vector<8x128xf32> to vector<8x32xf32>
    %243 = arith.truncf %242 : vector<8x32xf32> to vector<8x32xbf16>
    %cst_105 = arith.constant dense<0.000000e+00> : vector<8x128xf32>
    %244 = tpu.matmul %243, %98, %cst_105 {dimension_numbers = #tpu.dot_dimension_numbers<[1], [0], [0], [1], [0, 0, 1, 1], [], []>} : vector<8x32xbf16>, vector<32x128xbf16>, vector<8x128xf32> -> vector<8x128xf32>
    %245 = arith.addf %102, %244 : vector<8x128xf32>
    %246 = arith.truncf %215 : vector<8x32xf32> to vector<8x32xbf16>
    %cst_106 = arith.constant dense<0.000000e+00> : vector<8x128xf32>
    %247 = tpu.matmul %246, %99, %cst_106 {dimension_numbers = #tpu.dot_dimension_numbers<[1], [0], [0], [1], [0, 0, 1, 1], [], []>} : vector<8x32xbf16>, vector<32x128xbf16>, vector<8x128xf32> -> vector<8x128xf32>
    %248 = arith.addf %245, %247 : vector<8x128xf32>
    %249 = arith.addf %248, %248 : vector<8x128xf32>
    %250 = arith.select %105, %249, %248 : vector<8x128xi1>, vector<8x128xf32>
    %cst_107 = arith.constant 0.000000e+00 : f32
    %251 = vector.broadcast %cst_107 : f32 to vector<8x128xf32>
    %252 = arith.subf %251, %250 : vector<8x128xf32>
    %253 = math.exp %252 : vector<8x128xf32>
    %cst_108 = arith.constant 1.000000e+00 : f32
    %254 = vector.broadcast %cst_108 : f32 to vector<8x128xf32>
    %255 = arith.addf %254, %253 : vector<8x128xf32>
    %256 = tpu.reciprocal %255 {approx = true} : vector<8x128xf32> -> vector<8x128xf32>
    %257 = arith.addf %256, %256 : vector<8x128xf32>
    %cst_109 = arith.constant 1.000000e+00 : f32
    %258 = vector.broadcast %cst_109 : f32 to vector<8x128xf32>
    %259 = arith.subf %257, %258 : vector<8x128xf32>
    %260 = arith.select %105, %259, %256 : vector<8x128xi1>, vector<8x128xf32>
    %c96_i32_110 = arith.constant 96 : i32
    %261 = tpu.dynamic_rotate %260 by %c96_i32_110 dim 1 : vector<8x128xf32>, i32 -> vector<8x128xf32>
    %c64_i32_111 = arith.constant 64 : i32
    %262 = tpu.dynamic_rotate %260 by %c64_i32_111 dim 1 : vector<8x128xf32>, i32 -> vector<8x128xf32>
    %263 = arith.mulf %260, %211 : vector<8x128xf32>
    %264 = arith.mulf %261, %262 : vector<8x128xf32>
    %265 = arith.addf %263, %264 : vector<8x128xf32>
    %266 = math.tanh %265 : vector<8x128xf32>
    %c96_i32_112 = arith.constant 96 : i32
    %267 = tpu.dynamic_rotate %266 by %c96_i32_112 dim 1 : vector<8x128xf32>, i32 -> vector<8x128xf32>
    %268 = arith.mulf %260, %267 : vector<8x128xf32>
    %269 = vector.extract_strided_slice %268 {offsets = [0, 0], sizes = [8, 32], strides = [1, 1]} : vector<8x128xf32> to vector<8x32xf32>
    %c3_i32 = arith.constant 3 : i32
    %270 = arith.index_cast %c3_i32 : i32 to index
    %c0_113 = arith.constant 0 : index
    %c0_114 = arith.constant 0 : index
    %271 = vector.load %arg15[%270, %c0_113, %c0_114] : memref<12x8x128xf32, #tpu.memory_space<vmem>>, vector<1x8x128xf32>
    %272 = vector.shape_cast %271 : vector<1x8x128xf32> to vector<8x128xf32>
    %273 = arith.truncf %242 : vector<8x32xf32> to vector<8x32xbf16>
    %cst_115 = arith.constant dense<0.000000e+00> : vector<8x128xf32>
    %274 = tpu.matmul %273, %97, %cst_115 {dimension_numbers = #tpu.dot_dimension_numbers<[1], [0], [0], [1], [0, 0, 1, 1], [], []>} : vector<8x32xbf16>, vector<32x128xbf16>, vector<8x128xf32> -> vector<8x128xf32>
    %275 = arith.addf %272, %274 : vector<8x128xf32>
    %276 = arith.addf %275, %275 : vector<8x128xf32>
    %277 = arith.select %105, %276, %275 : vector<8x128xi1>, vector<8x128xf32>
    %cst_116 = arith.constant 0.000000e+00 : f32
    %278 = vector.broadcast %cst_116 : f32 to vector<8x128xf32>
    %279 = arith.subf %278, %277 : vector<8x128xf32>
    %280 = math.exp %279 : vector<8x128xf32>
    %cst_117 = arith.constant 1.000000e+00 : f32
    %281 = vector.broadcast %cst_117 : f32 to vector<8x128xf32>
    %282 = arith.addf %281, %280 : vector<8x128xf32>
    %283 = tpu.reciprocal %282 {approx = true} : vector<8x128xf32> -> vector<8x128xf32>
    %284 = arith.addf %283, %283 : vector<8x128xf32>
    %cst_118 = arith.constant 1.000000e+00 : f32
    %285 = vector.broadcast %cst_118 : f32 to vector<8x128xf32>
    %286 = arith.subf %284, %285 : vector<8x128xf32>
    %287 = arith.select %105, %286, %283 : vector<8x128xi1>, vector<8x128xf32>
    %c96_i32_119 = arith.constant 96 : i32
    %288 = tpu.dynamic_rotate %287 by %c96_i32_119 dim 1 : vector<8x128xf32>, i32 -> vector<8x128xf32>
    %c64_i32_120 = arith.constant 64 : i32
    %289 = tpu.dynamic_rotate %287 by %c64_i32_120 dim 1 : vector<8x128xf32>, i32 -> vector<8x128xf32>
    %290 = arith.mulf %287, %238 : vector<8x128xf32>
    %291 = arith.mulf %288, %289 : vector<8x128xf32>
    %292 = arith.addf %290, %291 : vector<8x128xf32>
    %293 = math.tanh %292 : vector<8x128xf32>
    %c96_i32_121 = arith.constant 96 : i32
    %294 = tpu.dynamic_rotate %293 by %c96_i32_121 dim 1 : vector<8x128xf32>, i32 -> vector<8x128xf32>
    %295 = arith.mulf %287, %294 : vector<8x128xf32>
    %296 = vector.extract_strided_slice %295 {offsets = [0, 0], sizes = [8, 32], strides = [1, 1]} : vector<8x128xf32> to vector<8x32xf32>
    %297 = arith.truncf %296 : vector<8x32xf32> to vector<8x32xbf16>
    %cst_122 = arith.constant dense<0.000000e+00> : vector<8x128xf32>
    %298 = tpu.matmul %297, %98, %cst_122 {dimension_numbers = #tpu.dot_dimension_numbers<[1], [0], [0], [1], [0, 0, 1, 1], [], []>} : vector<8x32xbf16>, vector<32x128xbf16>, vector<8x128xf32> -> vector<8x128xf32>
    %299 = arith.addf %102, %298 : vector<8x128xf32>
    %300 = arith.truncf %269 : vector<8x32xf32> to vector<8x32xbf16>
    %cst_123 = arith.constant dense<0.000000e+00> : vector<8x128xf32>
    %301 = tpu.matmul %300, %99, %cst_123 {dimension_numbers = #tpu.dot_dimension_numbers<[1], [0], [0], [1], [0, 0, 1, 1], [], []>} : vector<8x32xbf16>, vector<32x128xbf16>, vector<8x128xf32> -> vector<8x128xf32>
    %302 = arith.addf %299, %301 : vector<8x128xf32>
    %303 = arith.addf %302, %302 : vector<8x128xf32>
    %304 = arith.select %105, %303, %302 : vector<8x128xi1>, vector<8x128xf32>
    %cst_124 = arith.constant 0.000000e+00 : f32
    %305 = vector.broadcast %cst_124 : f32 to vector<8x128xf32>
    %306 = arith.subf %305, %304 : vector<8x128xf32>
    %307 = math.exp %306 : vector<8x128xf32>
    %cst_125 = arith.constant 1.000000e+00 : f32
    %308 = vector.broadcast %cst_125 : f32 to vector<8x128xf32>
    %309 = arith.addf %308, %307 : vector<8x128xf32>
    %310 = tpu.reciprocal %309 {approx = true} : vector<8x128xf32> -> vector<8x128xf32>
    %311 = arith.addf %310, %310 : vector<8x128xf32>
    %cst_126 = arith.constant 1.000000e+00 : f32
    %312 = vector.broadcast %cst_126 : f32 to vector<8x128xf32>
    %313 = arith.subf %311, %312 : vector<8x128xf32>
    %314 = arith.select %105, %313, %310 : vector<8x128xi1>, vector<8x128xf32>
    %c96_i32_127 = arith.constant 96 : i32
    %315 = tpu.dynamic_rotate %314 by %c96_i32_127 dim 1 : vector<8x128xf32>, i32 -> vector<8x128xf32>
    %c64_i32_128 = arith.constant 64 : i32
    %316 = tpu.dynamic_rotate %314 by %c64_i32_128 dim 1 : vector<8x128xf32>, i32 -> vector<8x128xf32>
    %317 = arith.mulf %314, %265 : vector<8x128xf32>
    %318 = arith.mulf %315, %316 : vector<8x128xf32>
    %319 = arith.addf %317, %318 : vector<8x128xf32>
    %320 = math.tanh %319 : vector<8x128xf32>
    %c96_i32_129 = arith.constant 96 : i32
    %321 = tpu.dynamic_rotate %320 by %c96_i32_129 dim 1 : vector<8x128xf32>, i32 -> vector<8x128xf32>
    %322 = arith.mulf %314, %321 : vector<8x128xf32>
    %323 = vector.extract_strided_slice %322 {offsets = [0, 0], sizes = [8, 32], strides = [1, 1]} : vector<8x128xf32> to vector<8x32xf32>
    %c4_i32 = arith.constant 4 : i32
    %324 = arith.index_cast %c4_i32 : i32 to index
    %c0_130 = arith.constant 0 : index
    %c0_131 = arith.constant 0 : index
    %325 = vector.load %arg15[%324, %c0_130, %c0_131] : memref<12x8x128xf32, #tpu.memory_space<vmem>>, vector<1x8x128xf32>
    %326 = vector.shape_cast %325 : vector<1x8x128xf32> to vector<8x128xf32>
    %327 = arith.truncf %296 : vector<8x32xf32> to vector<8x32xbf16>
    %cst_132 = arith.constant dense<0.000000e+00> : vector<8x128xf32>
    %328 = tpu.matmul %327, %97, %cst_132 {dimension_numbers = #tpu.dot_dimension_numbers<[1], [0], [0], [1], [0, 0, 1, 1], [], []>} : vector<8x32xbf16>, vector<32x128xbf16>, vector<8x128xf32> -> vector<8x128xf32>
    %329 = arith.addf %326, %328 : vector<8x128xf32>
    %330 = arith.addf %329, %329 : vector<8x128xf32>
    %331 = arith.select %105, %330, %329 : vector<8x128xi1>, vector<8x128xf32>
    %cst_133 = arith.constant 0.000000e+00 : f32
    %332 = vector.broadcast %cst_133 : f32 to vector<8x128xf32>
    %333 = arith.subf %332, %331 : vector<8x128xf32>
    %334 = math.exp %333 : vector<8x128xf32>
    %cst_134 = arith.constant 1.000000e+00 : f32
    %335 = vector.broadcast %cst_134 : f32 to vector<8x128xf32>
    %336 = arith.addf %335, %334 : vector<8x128xf32>
    %337 = tpu.reciprocal %336 {approx = true} : vector<8x128xf32> -> vector<8x128xf32>
    %338 = arith.addf %337, %337 : vector<8x128xf32>
    %cst_135 = arith.constant 1.000000e+00 : f32
    %339 = vector.broadcast %cst_135 : f32 to vector<8x128xf32>
    %340 = arith.subf %338, %339 : vector<8x128xf32>
    %341 = arith.select %105, %340, %337 : vector<8x128xi1>, vector<8x128xf32>
    %c96_i32_136 = arith.constant 96 : i32
    %342 = tpu.dynamic_rotate %341 by %c96_i32_136 dim 1 : vector<8x128xf32>, i32 -> vector<8x128xf32>
    %c64_i32_137 = arith.constant 64 : i32
    %343 = tpu.dynamic_rotate %341 by %c64_i32_137 dim 1 : vector<8x128xf32>, i32 -> vector<8x128xf32>
    %344 = arith.mulf %341, %292 : vector<8x128xf32>
    %345 = arith.mulf %342, %343 : vector<8x128xf32>
    %346 = arith.addf %344, %345 : vector<8x128xf32>
    %347 = math.tanh %346 : vector<8x128xf32>
    %c96_i32_138 = arith.constant 96 : i32
    %348 = tpu.dynamic_rotate %347 by %c96_i32_138 dim 1 : vector<8x128xf32>, i32 -> vector<8x128xf32>
    %349 = arith.mulf %341, %348 : vector<8x128xf32>
    %350 = vector.extract_strided_slice %349 {offsets = [0, 0], sizes = [8, 32], strides = [1, 1]} : vector<8x128xf32> to vector<8x32xf32>
    %351 = arith.truncf %350 : vector<8x32xf32> to vector<8x32xbf16>
    %cst_139 = arith.constant dense<0.000000e+00> : vector<8x128xf32>
    %352 = tpu.matmul %351, %98, %cst_139 {dimension_numbers = #tpu.dot_dimension_numbers<[1], [0], [0], [1], [0, 0, 1, 1], [], []>} : vector<8x32xbf16>, vector<32x128xbf16>, vector<8x128xf32> -> vector<8x128xf32>
    %353 = arith.addf %102, %352 : vector<8x128xf32>
    %354 = arith.truncf %323 : vector<8x32xf32> to vector<8x32xbf16>
    %cst_140 = arith.constant dense<0.000000e+00> : vector<8x128xf32>
    %355 = tpu.matmul %354, %99, %cst_140 {dimension_numbers = #tpu.dot_dimension_numbers<[1], [0], [0], [1], [0, 0, 1, 1], [], []>} : vector<8x32xbf16>, vector<32x128xbf16>, vector<8x128xf32> -> vector<8x128xf32>
    %356 = arith.addf %353, %355 : vector<8x128xf32>
    %357 = arith.addf %356, %356 : vector<8x128xf32>
    %358 = arith.select %105, %357, %356 : vector<8x128xi1>, vector<8x128xf32>
    %cst_141 = arith.constant 0.000000e+00 : f32
    %359 = vector.broadcast %cst_141 : f32 to vector<8x128xf32>
    %360 = arith.subf %359, %358 : vector<8x128xf32>
    %361 = math.exp %360 : vector<8x128xf32>
    %cst_142 = arith.constant 1.000000e+00 : f32
    %362 = vector.broadcast %cst_142 : f32 to vector<8x128xf32>
    %363 = arith.addf %362, %361 : vector<8x128xf32>
    %364 = tpu.reciprocal %363 {approx = true} : vector<8x128xf32> -> vector<8x128xf32>
    %365 = arith.addf %364, %364 : vector<8x128xf32>
    %cst_143 = arith.constant 1.000000e+00 : f32
    %366 = vector.broadcast %cst_143 : f32 to vector<8x128xf32>
    %367 = arith.subf %365, %366 : vector<8x128xf32>
    %368 = arith.select %105, %367, %364 : vector<8x128xi1>, vector<8x128xf32>
    %c96_i32_144 = arith.constant 96 : i32
    %369 = tpu.dynamic_rotate %368 by %c96_i32_144 dim 1 : vector<8x128xf32>, i32 -> vector<8x128xf32>
    %c64_i32_145 = arith.constant 64 : i32
    %370 = tpu.dynamic_rotate %368 by %c64_i32_145 dim 1 : vector<8x128xf32>, i32 -> vector<8x128xf32>
    %371 = arith.mulf %368, %319 : vector<8x128xf32>
    %372 = arith.mulf %369, %370 : vector<8x128xf32>
    %373 = arith.addf %371, %372 : vector<8x128xf32>
    %374 = math.tanh %373 : vector<8x128xf32>
    %c96_i32_146 = arith.constant 96 : i32
    %375 = tpu.dynamic_rotate %374 by %c96_i32_146 dim 1 : vector<8x128xf32>, i32 -> vector<8x128xf32>
    %376 = arith.mulf %368, %375 : vector<8x128xf32>
    %377 = vector.extract_strided_slice %376 {offsets = [0, 0], sizes = [8, 32], strides = [1, 1]} : vector<8x128xf32> to vector<8x32xf32>
    %c5_i32 = arith.constant 5 : i32
    %378 = arith.index_cast %c5_i32 : i32 to index
    %c0_147 = arith.constant 0 : index
    %c0_148 = arith.constant 0 : index
    %379 = vector.load %arg15[%378, %c0_147, %c0_148] : memref<12x8x128xf32, #tpu.memory_space<vmem>>, vector<1x8x128xf32>
    %380 = vector.shape_cast %379 : vector<1x8x128xf32> to vector<8x128xf32>
    %381 = arith.truncf %350 : vector<8x32xf32> to vector<8x32xbf16>
    %cst_149 = arith.constant dense<0.000000e+00> : vector<8x128xf32>
    %382 = tpu.matmul %381, %97, %cst_149 {dimension_numbers = #tpu.dot_dimension_numbers<[1], [0], [0], [1], [0, 0, 1, 1], [], []>} : vector<8x32xbf16>, vector<32x128xbf16>, vector<8x128xf32> -> vector<8x128xf32>
    %383 = arith.addf %380, %382 : vector<8x128xf32>
    %384 = arith.addf %383, %383 : vector<8x128xf32>
    %385 = arith.select %105, %384, %383 : vector<8x128xi1>, vector<8x128xf32>
    %cst_150 = arith.constant 0.000000e+00 : f32
    %386 = vector.broadcast %cst_150 : f32 to vector<8x128xf32>
    %387 = arith.subf %386, %385 : vector<8x128xf32>
    %388 = math.exp %387 : vector<8x128xf32>
    %cst_151 = arith.constant 1.000000e+00 : f32
    %389 = vector.broadcast %cst_151 : f32 to vector<8x128xf32>
    %390 = arith.addf %389, %388 : vector<8x128xf32>
    %391 = tpu.reciprocal %390 {approx = true} : vector<8x128xf32> -> vector<8x128xf32>
    %392 = arith.addf %391, %391 : vector<8x128xf32>
    %cst_152 = arith.constant 1.000000e+00 : f32
    %393 = vector.broadcast %cst_152 : f32 to vector<8x128xf32>
    %394 = arith.subf %392, %393 : vector<8x128xf32>
    %395 = arith.select %105, %394, %391 : vector<8x128xi1>, vector<8x128xf32>
    %c96_i32_153 = arith.constant 96 : i32
    %396 = tpu.dynamic_rotate %395 by %c96_i32_153 dim 1 : vector<8x128xf32>, i32 -> vector<8x128xf32>
    %c64_i32_154 = arith.constant 64 : i32
    %397 = tpu.dynamic_rotate %395 by %c64_i32_154 dim 1 : vector<8x128xf32>, i32 -> vector<8x128xf32>
    %398 = arith.mulf %395, %346 : vector<8x128xf32>
    %399 = arith.mulf %396, %397 : vector<8x128xf32>
    %400 = arith.addf %398, %399 : vector<8x128xf32>
    %401 = math.tanh %400 : vector<8x128xf32>
    %c96_i32_155 = arith.constant 96 : i32
    %402 = tpu.dynamic_rotate %401 by %c96_i32_155 dim 1 : vector<8x128xf32>, i32 -> vector<8x128xf32>
    %403 = arith.mulf %395, %402 : vector<8x128xf32>
    %404 = vector.extract_strided_slice %403 {offsets = [0, 0], sizes = [8, 32], strides = [1, 1]} : vector<8x128xf32> to vector<8x32xf32>
    %405 = arith.truncf %404 : vector<8x32xf32> to vector<8x32xbf16>
    %cst_156 = arith.constant dense<0.000000e+00> : vector<8x128xf32>
    %406 = tpu.matmul %405, %98, %cst_156 {dimension_numbers = #tpu.dot_dimension_numbers<[1], [0], [0], [1], [0, 0, 1, 1], [], []>} : vector<8x32xbf16>, vector<32x128xbf16>, vector<8x128xf32> -> vector<8x128xf32>
    %407 = arith.addf %102, %406 : vector<8x128xf32>
    %408 = arith.truncf %377 : vector<8x32xf32> to vector<8x32xbf16>
    %cst_157 = arith.constant dense<0.000000e+00> : vector<8x128xf32>
    %409 = tpu.matmul %408, %99, %cst_157 {dimension_numbers = #tpu.dot_dimension_numbers<[1], [0], [0], [1], [0, 0, 1, 1], [], []>} : vector<8x32xbf16>, vector<32x128xbf16>, vector<8x128xf32> -> vector<8x128xf32>
    %410 = arith.addf %407, %409 : vector<8x128xf32>
    %411 = arith.addf %410, %410 : vector<8x128xf32>
    %412 = arith.select %105, %411, %410 : vector<8x128xi1>, vector<8x128xf32>
    %cst_158 = arith.constant 0.000000e+00 : f32
    %413 = vector.broadcast %cst_158 : f32 to vector<8x128xf32>
    %414 = arith.subf %413, %412 : vector<8x128xf32>
    %415 = math.exp %414 : vector<8x128xf32>
    %cst_159 = arith.constant 1.000000e+00 : f32
    %416 = vector.broadcast %cst_159 : f32 to vector<8x128xf32>
    %417 = arith.addf %416, %415 : vector<8x128xf32>
    %418 = tpu.reciprocal %417 {approx = true} : vector<8x128xf32> -> vector<8x128xf32>
    %419 = arith.addf %418, %418 : vector<8x128xf32>
    %cst_160 = arith.constant 1.000000e+00 : f32
    %420 = vector.broadcast %cst_160 : f32 to vector<8x128xf32>
    %421 = arith.subf %419, %420 : vector<8x128xf32>
    %422 = arith.select %105, %421, %418 : vector<8x128xi1>, vector<8x128xf32>
    %c96_i32_161 = arith.constant 96 : i32
    %423 = tpu.dynamic_rotate %422 by %c96_i32_161 dim 1 : vector<8x128xf32>, i32 -> vector<8x128xf32>
    %c64_i32_162 = arith.constant 64 : i32
    %424 = tpu.dynamic_rotate %422 by %c64_i32_162 dim 1 : vector<8x128xf32>, i32 -> vector<8x128xf32>
    %425 = arith.mulf %422, %373 : vector<8x128xf32>
    %426 = arith.mulf %423, %424 : vector<8x128xf32>
    %427 = arith.addf %425, %426 : vector<8x128xf32>
    %428 = math.tanh %427 : vector<8x128xf32>
    %c96_i32_163 = arith.constant 96 : i32
    %429 = tpu.dynamic_rotate %428 by %c96_i32_163 dim 1 : vector<8x128xf32>, i32 -> vector<8x128xf32>
    %430 = arith.mulf %422, %429 : vector<8x128xf32>
    %431 = vector.extract_strided_slice %430 {offsets = [0, 0], sizes = [8, 32], strides = [1, 1]} : vector<8x128xf32> to vector<8x32xf32>
    %c6_i32 = arith.constant 6 : i32
    %432 = arith.index_cast %c6_i32 : i32 to index
    %c0_164 = arith.constant 0 : index
    %c0_165 = arith.constant 0 : index
    %433 = vector.load %arg15[%432, %c0_164, %c0_165] : memref<12x8x128xf32, #tpu.memory_space<vmem>>, vector<1x8x128xf32>
    %434 = vector.shape_cast %433 : vector<1x8x128xf32> to vector<8x128xf32>
    %435 = arith.truncf %404 : vector<8x32xf32> to vector<8x32xbf16>
    %cst_166 = arith.constant dense<0.000000e+00> : vector<8x128xf32>
    %436 = tpu.matmul %435, %97, %cst_166 {dimension_numbers = #tpu.dot_dimension_numbers<[1], [0], [0], [1], [0, 0, 1, 1], [], []>} : vector<8x32xbf16>, vector<32x128xbf16>, vector<8x128xf32> -> vector<8x128xf32>
    %437 = arith.addf %434, %436 : vector<8x128xf32>
    %438 = arith.addf %437, %437 : vector<8x128xf32>
    %439 = arith.select %105, %438, %437 : vector<8x128xi1>, vector<8x128xf32>
    %cst_167 = arith.constant 0.000000e+00 : f32
    %440 = vector.broadcast %cst_167 : f32 to vector<8x128xf32>
    %441 = arith.subf %440, %439 : vector<8x128xf32>
    %442 = math.exp %441 : vector<8x128xf32>
    %cst_168 = arith.constant 1.000000e+00 : f32
    %443 = vector.broadcast %cst_168 : f32 to vector<8x128xf32>
    %444 = arith.addf %443, %442 : vector<8x128xf32>
    %445 = tpu.reciprocal %444 {approx = true} : vector<8x128xf32> -> vector<8x128xf32>
    %446 = arith.addf %445, %445 : vector<8x128xf32>
    %cst_169 = arith.constant 1.000000e+00 : f32
    %447 = vector.broadcast %cst_169 : f32 to vector<8x128xf32>
    %448 = arith.subf %446, %447 : vector<8x128xf32>
    %449 = arith.select %105, %448, %445 : vector<8x128xi1>, vector<8x128xf32>
    %c96_i32_170 = arith.constant 96 : i32
    %450 = tpu.dynamic_rotate %449 by %c96_i32_170 dim 1 : vector<8x128xf32>, i32 -> vector<8x128xf32>
    %c64_i32_171 = arith.constant 64 : i32
    %451 = tpu.dynamic_rotate %449 by %c64_i32_171 dim 1 : vector<8x128xf32>, i32 -> vector<8x128xf32>
    %452 = arith.mulf %449, %400 : vector<8x128xf32>
    %453 = arith.mulf %450, %451 : vector<8x128xf32>
    %454 = arith.addf %452, %453 : vector<8x128xf32>
    %455 = math.tanh %454 : vector<8x128xf32>
    %c96_i32_172 = arith.constant 96 : i32
    %456 = tpu.dynamic_rotate %455 by %c96_i32_172 dim 1 : vector<8x128xf32>, i32 -> vector<8x128xf32>
    %457 = arith.mulf %449, %456 : vector<8x128xf32>
    %458 = vector.extract_strided_slice %457 {offsets = [0, 0], sizes = [8, 32], strides = [1, 1]} : vector<8x128xf32> to vector<8x32xf32>
    %459 = arith.truncf %458 : vector<8x32xf32> to vector<8x32xbf16>
    %cst_173 = arith.constant dense<0.000000e+00> : vector<8x128xf32>
    %460 = tpu.matmul %459, %98, %cst_173 {dimension_numbers = #tpu.dot_dimension_numbers<[1], [0], [0], [1], [0, 0, 1, 1], [], []>} : vector<8x32xbf16>, vector<32x128xbf16>, vector<8x128xf32> -> vector<8x128xf32>
    %461 = arith.addf %102, %460 : vector<8x128xf32>
    %462 = arith.truncf %431 : vector<8x32xf32> to vector<8x32xbf16>
    %cst_174 = arith.constant dense<0.000000e+00> : vector<8x128xf32>
    %463 = tpu.matmul %462, %99, %cst_174 {dimension_numbers = #tpu.dot_dimension_numbers<[1], [0], [0], [1], [0, 0, 1, 1], [], []>} : vector<8x32xbf16>, vector<32x128xbf16>, vector<8x128xf32> -> vector<8x128xf32>
    %464 = arith.addf %461, %463 : vector<8x128xf32>
    %465 = arith.addf %464, %464 : vector<8x128xf32>
    %466 = arith.select %105, %465, %464 : vector<8x128xi1>, vector<8x128xf32>
    %cst_175 = arith.constant 0.000000e+00 : f32
    %467 = vector.broadcast %cst_175 : f32 to vector<8x128xf32>
    %468 = arith.subf %467, %466 : vector<8x128xf32>
    %469 = math.exp %468 : vector<8x128xf32>
    %cst_176 = arith.constant 1.000000e+00 : f32
    %470 = vector.broadcast %cst_176 : f32 to vector<8x128xf32>
    %471 = arith.addf %470, %469 : vector<8x128xf32>
    %472 = tpu.reciprocal %471 {approx = true} : vector<8x128xf32> -> vector<8x128xf32>
    %473 = arith.addf %472, %472 : vector<8x128xf32>
    %cst_177 = arith.constant 1.000000e+00 : f32
    %474 = vector.broadcast %cst_177 : f32 to vector<8x128xf32>
    %475 = arith.subf %473, %474 : vector<8x128xf32>
    %476 = arith.select %105, %475, %472 : vector<8x128xi1>, vector<8x128xf32>
    %c96_i32_178 = arith.constant 96 : i32
    %477 = tpu.dynamic_rotate %476 by %c96_i32_178 dim 1 : vector<8x128xf32>, i32 -> vector<8x128xf32>
    %c64_i32_179 = arith.constant 64 : i32
    %478 = tpu.dynamic_rotate %476 by %c64_i32_179 dim 1 : vector<8x128xf32>, i32 -> vector<8x128xf32>
    %479 = arith.mulf %476, %427 : vector<8x128xf32>
    %480 = arith.mulf %477, %478 : vector<8x128xf32>
    %481 = arith.addf %479, %480 : vector<8x128xf32>
    %482 = math.tanh %481 : vector<8x128xf32>
    %c96_i32_180 = arith.constant 96 : i32
    %483 = tpu.dynamic_rotate %482 by %c96_i32_180 dim 1 : vector<8x128xf32>, i32 -> vector<8x128xf32>
    %484 = arith.mulf %476, %483 : vector<8x128xf32>
    %485 = vector.extract_strided_slice %484 {offsets = [0, 0], sizes = [8, 32], strides = [1, 1]} : vector<8x128xf32> to vector<8x32xf32>
    %c7_i32 = arith.constant 7 : i32
    %486 = arith.index_cast %c7_i32 : i32 to index
    %c0_181 = arith.constant 0 : index
    %c0_182 = arith.constant 0 : index
    %487 = vector.load %arg15[%486, %c0_181, %c0_182] : memref<12x8x128xf32, #tpu.memory_space<vmem>>, vector<1x8x128xf32>
    %488 = vector.shape_cast %487 : vector<1x8x128xf32> to vector<8x128xf32>
    %489 = arith.truncf %458 : vector<8x32xf32> to vector<8x32xbf16>
    %cst_183 = arith.constant dense<0.000000e+00> : vector<8x128xf32>
    %490 = tpu.matmul %489, %97, %cst_183 {dimension_numbers = #tpu.dot_dimension_numbers<[1], [0], [0], [1], [0, 0, 1, 1], [], []>} : vector<8x32xbf16>, vector<32x128xbf16>, vector<8x128xf32> -> vector<8x128xf32>
    %491 = arith.addf %488, %490 : vector<8x128xf32>
    %492 = arith.addf %491, %491 : vector<8x128xf32>
    %493 = arith.select %105, %492, %491 : vector<8x128xi1>, vector<8x128xf32>
    %cst_184 = arith.constant 0.000000e+00 : f32
    %494 = vector.broadcast %cst_184 : f32 to vector<8x128xf32>
    %495 = arith.subf %494, %493 : vector<8x128xf32>
    %496 = math.exp %495 : vector<8x128xf32>
    %cst_185 = arith.constant 1.000000e+00 : f32
    %497 = vector.broadcast %cst_185 : f32 to vector<8x128xf32>
    %498 = arith.addf %497, %496 : vector<8x128xf32>
    %499 = tpu.reciprocal %498 {approx = true} : vector<8x128xf32> -> vector<8x128xf32>
    %500 = arith.addf %499, %499 : vector<8x128xf32>
    %cst_186 = arith.constant 1.000000e+00 : f32
    %501 = vector.broadcast %cst_186 : f32 to vector<8x128xf32>
    %502 = arith.subf %500, %501 : vector<8x128xf32>
    %503 = arith.select %105, %502, %499 : vector<8x128xi1>, vector<8x128xf32>
    %c96_i32_187 = arith.constant 96 : i32
    %504 = tpu.dynamic_rotate %503 by %c96_i32_187 dim 1 : vector<8x128xf32>, i32 -> vector<8x128xf32>
    %c64_i32_188 = arith.constant 64 : i32
    %505 = tpu.dynamic_rotate %503 by %c64_i32_188 dim 1 : vector<8x128xf32>, i32 -> vector<8x128xf32>
    %506 = arith.mulf %503, %454 : vector<8x128xf32>
    %507 = arith.mulf %504, %505 : vector<8x128xf32>
    %508 = arith.addf %506, %507 : vector<8x128xf32>
    %509 = math.tanh %508 : vector<8x128xf32>
    %c96_i32_189 = arith.constant 96 : i32
    %510 = tpu.dynamic_rotate %509 by %c96_i32_189 dim 1 : vector<8x128xf32>, i32 -> vector<8x128xf32>
    %511 = arith.mulf %503, %510 : vector<8x128xf32>
    %512 = vector.extract_strided_slice %511 {offsets = [0, 0], sizes = [8, 32], strides = [1, 1]} : vector<8x128xf32> to vector<8x32xf32>
    %513 = arith.truncf %512 : vector<8x32xf32> to vector<8x32xbf16>
    %cst_190 = arith.constant dense<0.000000e+00> : vector<8x128xf32>
    %514 = tpu.matmul %513, %98, %cst_190 {dimension_numbers = #tpu.dot_dimension_numbers<[1], [0], [0], [1], [0, 0, 1, 1], [], []>} : vector<8x32xbf16>, vector<32x128xbf16>, vector<8x128xf32> -> vector<8x128xf32>
    %515 = arith.addf %102, %514 : vector<8x128xf32>
    %516 = arith.truncf %485 : vector<8x32xf32> to vector<8x32xbf16>
    %cst_191 = arith.constant dense<0.000000e+00> : vector<8x128xf32>
    %517 = tpu.matmul %516, %99, %cst_191 {dimension_numbers = #tpu.dot_dimension_numbers<[1], [0], [0], [1], [0, 0, 1, 1], [], []>} : vector<8x32xbf16>, vector<32x128xbf16>, vector<8x128xf32> -> vector<8x128xf32>
    %518 = arith.addf %515, %517 : vector<8x128xf32>
    %519 = arith.addf %518, %518 : vector<8x128xf32>
    %520 = arith.select %105, %519, %518 : vector<8x128xi1>, vector<8x128xf32>
    %cst_192 = arith.constant 0.000000e+00 : f32
    %521 = vector.broadcast %cst_192 : f32 to vector<8x128xf32>
    %522 = arith.subf %521, %520 : vector<8x128xf32>
    %523 = math.exp %522 : vector<8x128xf32>
    %cst_193 = arith.constant 1.000000e+00 : f32
    %524 = vector.broadcast %cst_193 : f32 to vector<8x128xf32>
    %525 = arith.addf %524, %523 : vector<8x128xf32>
    %526 = tpu.reciprocal %525 {approx = true} : vector<8x128xf32> -> vector<8x128xf32>
    %527 = arith.addf %526, %526 : vector<8x128xf32>
    %cst_194 = arith.constant 1.000000e+00 : f32
    %528 = vector.broadcast %cst_194 : f32 to vector<8x128xf32>
    %529 = arith.subf %527, %528 : vector<8x128xf32>
    %530 = arith.select %105, %529, %526 : vector<8x128xi1>, vector<8x128xf32>
    %c96_i32_195 = arith.constant 96 : i32
    %531 = tpu.dynamic_rotate %530 by %c96_i32_195 dim 1 : vector<8x128xf32>, i32 -> vector<8x128xf32>
    %c64_i32_196 = arith.constant 64 : i32
    %532 = tpu.dynamic_rotate %530 by %c64_i32_196 dim 1 : vector<8x128xf32>, i32 -> vector<8x128xf32>
    %533 = arith.mulf %530, %481 : vector<8x128xf32>
    %534 = arith.mulf %531, %532 : vector<8x128xf32>
    %535 = arith.addf %533, %534 : vector<8x128xf32>
    %536 = math.tanh %535 : vector<8x128xf32>
    %c96_i32_197 = arith.constant 96 : i32
    %537 = tpu.dynamic_rotate %536 by %c96_i32_197 dim 1 : vector<8x128xf32>, i32 -> vector<8x128xf32>
    %538 = arith.mulf %530, %537 : vector<8x128xf32>
    %539 = vector.extract_strided_slice %538 {offsets = [0, 0], sizes = [8, 32], strides = [1, 1]} : vector<8x128xf32> to vector<8x32xf32>
    %c8_i32 = arith.constant 8 : i32
    %540 = arith.index_cast %c8_i32 : i32 to index
    %c0_198 = arith.constant 0 : index
    %c0_199 = arith.constant 0 : index
    %541 = vector.load %arg15[%540, %c0_198, %c0_199] : memref<12x8x128xf32, #tpu.memory_space<vmem>>, vector<1x8x128xf32>
    %542 = vector.shape_cast %541 : vector<1x8x128xf32> to vector<8x128xf32>
    %543 = arith.truncf %512 : vector<8x32xf32> to vector<8x32xbf16>
    %cst_200 = arith.constant dense<0.000000e+00> : vector<8x128xf32>
    %544 = tpu.matmul %543, %97, %cst_200 {dimension_numbers = #tpu.dot_dimension_numbers<[1], [0], [0], [1], [0, 0, 1, 1], [], []>} : vector<8x32xbf16>, vector<32x128xbf16>, vector<8x128xf32> -> vector<8x128xf32>
    %545 = arith.addf %542, %544 : vector<8x128xf32>
    %546 = arith.addf %545, %545 : vector<8x128xf32>
    %547 = arith.select %105, %546, %545 : vector<8x128xi1>, vector<8x128xf32>
    %cst_201 = arith.constant 0.000000e+00 : f32
    %548 = vector.broadcast %cst_201 : f32 to vector<8x128xf32>
    %549 = arith.subf %548, %547 : vector<8x128xf32>
    %550 = math.exp %549 : vector<8x128xf32>
    %cst_202 = arith.constant 1.000000e+00 : f32
    %551 = vector.broadcast %cst_202 : f32 to vector<8x128xf32>
    %552 = arith.addf %551, %550 : vector<8x128xf32>
    %553 = tpu.reciprocal %552 {approx = true} : vector<8x128xf32> -> vector<8x128xf32>
    %554 = arith.addf %553, %553 : vector<8x128xf32>
    %cst_203 = arith.constant 1.000000e+00 : f32
    %555 = vector.broadcast %cst_203 : f32 to vector<8x128xf32>
    %556 = arith.subf %554, %555 : vector<8x128xf32>
    %557 = arith.select %105, %556, %553 : vector<8x128xi1>, vector<8x128xf32>
    %c96_i32_204 = arith.constant 96 : i32
    %558 = tpu.dynamic_rotate %557 by %c96_i32_204 dim 1 : vector<8x128xf32>, i32 -> vector<8x128xf32>
    %c64_i32_205 = arith.constant 64 : i32
    %559 = tpu.dynamic_rotate %557 by %c64_i32_205 dim 1 : vector<8x128xf32>, i32 -> vector<8x128xf32>
    %560 = arith.mulf %557, %508 : vector<8x128xf32>
    %561 = arith.mulf %558, %559 : vector<8x128xf32>
    %562 = arith.addf %560, %561 : vector<8x128xf32>
    %563 = math.tanh %562 : vector<8x128xf32>
    %c96_i32_206 = arith.constant 96 : i32
    %564 = tpu.dynamic_rotate %563 by %c96_i32_206 dim 1 : vector<8x128xf32>, i32 -> vector<8x128xf32>
    %565 = arith.mulf %557, %564 : vector<8x128xf32>
    %566 = vector.extract_strided_slice %565 {offsets = [0, 0], sizes = [8, 32], strides = [1, 1]} : vector<8x128xf32> to vector<8x32xf32>
    %567 = arith.truncf %566 : vector<8x32xf32> to vector<8x32xbf16>
    %cst_207 = arith.constant dense<0.000000e+00> : vector<8x128xf32>
    %568 = tpu.matmul %567, %98, %cst_207 {dimension_numbers = #tpu.dot_dimension_numbers<[1], [0], [0], [1], [0, 0, 1, 1], [], []>} : vector<8x32xbf16>, vector<32x128xbf16>, vector<8x128xf32> -> vector<8x128xf32>
    %569 = arith.addf %102, %568 : vector<8x128xf32>
    %570 = arith.truncf %539 : vector<8x32xf32> to vector<8x32xbf16>
    %cst_208 = arith.constant dense<0.000000e+00> : vector<8x128xf32>
    %571 = tpu.matmul %570, %99, %cst_208 {dimension_numbers = #tpu.dot_dimension_numbers<[1], [0], [0], [1], [0, 0, 1, 1], [], []>} : vector<8x32xbf16>, vector<32x128xbf16>, vector<8x128xf32> -> vector<8x128xf32>
    %572 = arith.addf %569, %571 : vector<8x128xf32>
    %573 = arith.addf %572, %572 : vector<8x128xf32>
    %574 = arith.select %105, %573, %572 : vector<8x128xi1>, vector<8x128xf32>
    %cst_209 = arith.constant 0.000000e+00 : f32
    %575 = vector.broadcast %cst_209 : f32 to vector<8x128xf32>
    %576 = arith.subf %575, %574 : vector<8x128xf32>
    %577 = math.exp %576 : vector<8x128xf32>
    %cst_210 = arith.constant 1.000000e+00 : f32
    %578 = vector.broadcast %cst_210 : f32 to vector<8x128xf32>
    %579 = arith.addf %578, %577 : vector<8x128xf32>
    %580 = tpu.reciprocal %579 {approx = true} : vector<8x128xf32> -> vector<8x128xf32>
    %581 = arith.addf %580, %580 : vector<8x128xf32>
    %cst_211 = arith.constant 1.000000e+00 : f32
    %582 = vector.broadcast %cst_211 : f32 to vector<8x128xf32>
    %583 = arith.subf %581, %582 : vector<8x128xf32>
    %584 = arith.select %105, %583, %580 : vector<8x128xi1>, vector<8x128xf32>
    %c96_i32_212 = arith.constant 96 : i32
    %585 = tpu.dynamic_rotate %584 by %c96_i32_212 dim 1 : vector<8x128xf32>, i32 -> vector<8x128xf32>
    %c64_i32_213 = arith.constant 64 : i32
    %586 = tpu.dynamic_rotate %584 by %c64_i32_213 dim 1 : vector<8x128xf32>, i32 -> vector<8x128xf32>
    %587 = arith.mulf %584, %535 : vector<8x128xf32>
    %588 = arith.mulf %585, %586 : vector<8x128xf32>
    %589 = arith.addf %587, %588 : vector<8x128xf32>
    %590 = math.tanh %589 : vector<8x128xf32>
    %c96_i32_214 = arith.constant 96 : i32
    %591 = tpu.dynamic_rotate %590 by %c96_i32_214 dim 1 : vector<8x128xf32>, i32 -> vector<8x128xf32>
    %592 = arith.mulf %584, %591 : vector<8x128xf32>
    %593 = vector.extract_strided_slice %592 {offsets = [0, 0], sizes = [8, 32], strides = [1, 1]} : vector<8x128xf32> to vector<8x32xf32>
    %c9_i32 = arith.constant 9 : i32
    %594 = arith.index_cast %c9_i32 : i32 to index
    %c0_215 = arith.constant 0 : index
    %c0_216 = arith.constant 0 : index
    %595 = vector.load %arg15[%594, %c0_215, %c0_216] : memref<12x8x128xf32, #tpu.memory_space<vmem>>, vector<1x8x128xf32>
    %596 = vector.shape_cast %595 : vector<1x8x128xf32> to vector<8x128xf32>
    %597 = arith.truncf %566 : vector<8x32xf32> to vector<8x32xbf16>
    %cst_217 = arith.constant dense<0.000000e+00> : vector<8x128xf32>
    %598 = tpu.matmul %597, %97, %cst_217 {dimension_numbers = #tpu.dot_dimension_numbers<[1], [0], [0], [1], [0, 0, 1, 1], [], []>} : vector<8x32xbf16>, vector<32x128xbf16>, vector<8x128xf32> -> vector<8x128xf32>
    %599 = arith.addf %596, %598 : vector<8x128xf32>
    %600 = arith.addf %599, %599 : vector<8x128xf32>
    %601 = arith.select %105, %600, %599 : vector<8x128xi1>, vector<8x128xf32>
    %cst_218 = arith.constant 0.000000e+00 : f32
    %602 = vector.broadcast %cst_218 : f32 to vector<8x128xf32>
    %603 = arith.subf %602, %601 : vector<8x128xf32>
    %604 = math.exp %603 : vector<8x128xf32>
    %cst_219 = arith.constant 1.000000e+00 : f32
    %605 = vector.broadcast %cst_219 : f32 to vector<8x128xf32>
    %606 = arith.addf %605, %604 : vector<8x128xf32>
    %607 = tpu.reciprocal %606 {approx = true} : vector<8x128xf32> -> vector<8x128xf32>
    %608 = arith.addf %607, %607 : vector<8x128xf32>
    %cst_220 = arith.constant 1.000000e+00 : f32
    %609 = vector.broadcast %cst_220 : f32 to vector<8x128xf32>
    %610 = arith.subf %608, %609 : vector<8x128xf32>
    %611 = arith.select %105, %610, %607 : vector<8x128xi1>, vector<8x128xf32>
    %c96_i32_221 = arith.constant 96 : i32
    %612 = tpu.dynamic_rotate %611 by %c96_i32_221 dim 1 : vector<8x128xf32>, i32 -> vector<8x128xf32>
    %c64_i32_222 = arith.constant 64 : i32
    %613 = tpu.dynamic_rotate %611 by %c64_i32_222 dim 1 : vector<8x128xf32>, i32 -> vector<8x128xf32>
    %614 = arith.mulf %611, %562 : vector<8x128xf32>
    %615 = arith.mulf %612, %613 : vector<8x128xf32>
    %616 = arith.addf %614, %615 : vector<8x128xf32>
    %617 = math.tanh %616 : vector<8x128xf32>
    %c96_i32_223 = arith.constant 96 : i32
    %618 = tpu.dynamic_rotate %617 by %c96_i32_223 dim 1 : vector<8x128xf32>, i32 -> vector<8x128xf32>
    %619 = arith.mulf %611, %618 : vector<8x128xf32>
    %620 = vector.extract_strided_slice %619 {offsets = [0, 0], sizes = [8, 32], strides = [1, 1]} : vector<8x128xf32> to vector<8x32xf32>
    %621 = arith.truncf %620 : vector<8x32xf32> to vector<8x32xbf16>
    %cst_224 = arith.constant dense<0.000000e+00> : vector<8x128xf32>
    %622 = tpu.matmul %621, %98, %cst_224 {dimension_numbers = #tpu.dot_dimension_numbers<[1], [0], [0], [1], [0, 0, 1, 1], [], []>} : vector<8x32xbf16>, vector<32x128xbf16>, vector<8x128xf32> -> vector<8x128xf32>
    %623 = arith.addf %102, %622 : vector<8x128xf32>
    %624 = arith.truncf %593 : vector<8x32xf32> to vector<8x32xbf16>
    %cst_225 = arith.constant dense<0.000000e+00> : vector<8x128xf32>
    %625 = tpu.matmul %624, %99, %cst_225 {dimension_numbers = #tpu.dot_dimension_numbers<[1], [0], [0], [1], [0, 0, 1, 1], [], []>} : vector<8x32xbf16>, vector<32x128xbf16>, vector<8x128xf32> -> vector<8x128xf32>
    %626 = arith.addf %623, %625 : vector<8x128xf32>
    %627 = arith.addf %626, %626 : vector<8x128xf32>
    %628 = arith.select %105, %627, %626 : vector<8x128xi1>, vector<8x128xf32>
    %cst_226 = arith.constant 0.000000e+00 : f32
    %629 = vector.broadcast %cst_226 : f32 to vector<8x128xf32>
    %630 = arith.subf %629, %628 : vector<8x128xf32>
    %631 = math.exp %630 : vector<8x128xf32>
    %cst_227 = arith.constant 1.000000e+00 : f32
    %632 = vector.broadcast %cst_227 : f32 to vector<8x128xf32>
    %633 = arith.addf %632, %631 : vector<8x128xf32>
    %634 = tpu.reciprocal %633 {approx = true} : vector<8x128xf32> -> vector<8x128xf32>
    %635 = arith.addf %634, %634 : vector<8x128xf32>
    %cst_228 = arith.constant 1.000000e+00 : f32
    %636 = vector.broadcast %cst_228 : f32 to vector<8x128xf32>
    %637 = arith.subf %635, %636 : vector<8x128xf32>
    %638 = arith.select %105, %637, %634 : vector<8x128xi1>, vector<8x128xf32>
    %c96_i32_229 = arith.constant 96 : i32
    %639 = tpu.dynamic_rotate %638 by %c96_i32_229 dim 1 : vector<8x128xf32>, i32 -> vector<8x128xf32>
    %c64_i32_230 = arith.constant 64 : i32
    %640 = tpu.dynamic_rotate %638 by %c64_i32_230 dim 1 : vector<8x128xf32>, i32 -> vector<8x128xf32>
    %641 = arith.mulf %638, %589 : vector<8x128xf32>
    %642 = arith.mulf %639, %640 : vector<8x128xf32>
    %643 = arith.addf %641, %642 : vector<8x128xf32>
    %644 = math.tanh %643 : vector<8x128xf32>
    %c96_i32_231 = arith.constant 96 : i32
    %645 = tpu.dynamic_rotate %644 by %c96_i32_231 dim 1 : vector<8x128xf32>, i32 -> vector<8x128xf32>
    %646 = arith.mulf %638, %645 : vector<8x128xf32>
    %647 = vector.extract_strided_slice %646 {offsets = [0, 0], sizes = [8, 32], strides = [1, 1]} : vector<8x128xf32> to vector<8x32xf32>
    %c10_i32 = arith.constant 10 : i32
    %648 = arith.index_cast %c10_i32 : i32 to index
    %c0_232 = arith.constant 0 : index
    %c0_233 = arith.constant 0 : index
    %649 = vector.load %arg15[%648, %c0_232, %c0_233] : memref<12x8x128xf32, #tpu.memory_space<vmem>>, vector<1x8x128xf32>
    %650 = vector.shape_cast %649 : vector<1x8x128xf32> to vector<8x128xf32>
    %651 = arith.truncf %620 : vector<8x32xf32> to vector<8x32xbf16>
    %cst_234 = arith.constant dense<0.000000e+00> : vector<8x128xf32>
    %652 = tpu.matmul %651, %97, %cst_234 {dimension_numbers = #tpu.dot_dimension_numbers<[1], [0], [0], [1], [0, 0, 1, 1], [], []>} : vector<8x32xbf16>, vector<32x128xbf16>, vector<8x128xf32> -> vector<8x128xf32>
    %653 = arith.addf %650, %652 : vector<8x128xf32>
    %654 = arith.addf %653, %653 : vector<8x128xf32>
    %655 = arith.select %105, %654, %653 : vector<8x128xi1>, vector<8x128xf32>
    %cst_235 = arith.constant 0.000000e+00 : f32
    %656 = vector.broadcast %cst_235 : f32 to vector<8x128xf32>
    %657 = arith.subf %656, %655 : vector<8x128xf32>
    %658 = math.exp %657 : vector<8x128xf32>
    %cst_236 = arith.constant 1.000000e+00 : f32
    %659 = vector.broadcast %cst_236 : f32 to vector<8x128xf32>
    %660 = arith.addf %659, %658 : vector<8x128xf32>
    %661 = tpu.reciprocal %660 {approx = true} : vector<8x128xf32> -> vector<8x128xf32>
    %662 = arith.addf %661, %661 : vector<8x128xf32>
    %cst_237 = arith.constant 1.000000e+00 : f32
    %663 = vector.broadcast %cst_237 : f32 to vector<8x128xf32>
    %664 = arith.subf %662, %663 : vector<8x128xf32>
    %665 = arith.select %105, %664, %661 : vector<8x128xi1>, vector<8x128xf32>
    %c96_i32_238 = arith.constant 96 : i32
    %666 = tpu.dynamic_rotate %665 by %c96_i32_238 dim 1 : vector<8x128xf32>, i32 -> vector<8x128xf32>
    %c64_i32_239 = arith.constant 64 : i32
    %667 = tpu.dynamic_rotate %665 by %c64_i32_239 dim 1 : vector<8x128xf32>, i32 -> vector<8x128xf32>
    %668 = arith.mulf %665, %616 : vector<8x128xf32>
    %669 = arith.mulf %666, %667 : vector<8x128xf32>
    %670 = arith.addf %668, %669 : vector<8x128xf32>
    %671 = math.tanh %670 : vector<8x128xf32>
    %c96_i32_240 = arith.constant 96 : i32
    %672 = tpu.dynamic_rotate %671 by %c96_i32_240 dim 1 : vector<8x128xf32>, i32 -> vector<8x128xf32>
    %673 = arith.mulf %665, %672 : vector<8x128xf32>
    %674 = vector.extract_strided_slice %673 {offsets = [0, 0], sizes = [8, 32], strides = [1, 1]} : vector<8x128xf32> to vector<8x32xf32>
    %675 = arith.truncf %674 : vector<8x32xf32> to vector<8x32xbf16>
    %cst_241 = arith.constant dense<0.000000e+00> : vector<8x128xf32>
    %676 = tpu.matmul %675, %98, %cst_241 {dimension_numbers = #tpu.dot_dimension_numbers<[1], [0], [0], [1], [0, 0, 1, 1], [], []>} : vector<8x32xbf16>, vector<32x128xbf16>, vector<8x128xf32> -> vector<8x128xf32>
    %677 = arith.addf %102, %676 : vector<8x128xf32>
    %678 = arith.truncf %647 : vector<8x32xf32> to vector<8x32xbf16>
    %cst_242 = arith.constant dense<0.000000e+00> : vector<8x128xf32>
    %679 = tpu.matmul %678, %99, %cst_242 {dimension_numbers = #tpu.dot_dimension_numbers<[1], [0], [0], [1], [0, 0, 1, 1], [], []>} : vector<8x32xbf16>, vector<32x128xbf16>, vector<8x128xf32> -> vector<8x128xf32>
    %680 = arith.addf %677, %679 : vector<8x128xf32>
    %681 = arith.addf %680, %680 : vector<8x128xf32>
    %682 = arith.select %105, %681, %680 : vector<8x128xi1>, vector<8x128xf32>
    %cst_243 = arith.constant 0.000000e+00 : f32
    %683 = vector.broadcast %cst_243 : f32 to vector<8x128xf32>
    %684 = arith.subf %683, %682 : vector<8x128xf32>
    %685 = math.exp %684 : vector<8x128xf32>
    %cst_244 = arith.constant 1.000000e+00 : f32
    %686 = vector.broadcast %cst_244 : f32 to vector<8x128xf32>
    %687 = arith.addf %686, %685 : vector<8x128xf32>
    %688 = tpu.reciprocal %687 {approx = true} : vector<8x128xf32> -> vector<8x128xf32>
    %689 = arith.addf %688, %688 : vector<8x128xf32>
    %cst_245 = arith.constant 1.000000e+00 : f32
    %690 = vector.broadcast %cst_245 : f32 to vector<8x128xf32>
    %691 = arith.subf %689, %690 : vector<8x128xf32>
    %692 = arith.select %105, %691, %688 : vector<8x128xi1>, vector<8x128xf32>
    %c96_i32_246 = arith.constant 96 : i32
    %693 = tpu.dynamic_rotate %692 by %c96_i32_246 dim 1 : vector<8x128xf32>, i32 -> vector<8x128xf32>
    %c64_i32_247 = arith.constant 64 : i32
    %694 = tpu.dynamic_rotate %692 by %c64_i32_247 dim 1 : vector<8x128xf32>, i32 -> vector<8x128xf32>
    %695 = arith.mulf %692, %643 : vector<8x128xf32>
    %696 = arith.mulf %693, %694 : vector<8x128xf32>
    %697 = arith.addf %695, %696 : vector<8x128xf32>
    %698 = math.tanh %697 : vector<8x128xf32>
    %c96_i32_248 = arith.constant 96 : i32
    %699 = tpu.dynamic_rotate %698 by %c96_i32_248 dim 1 : vector<8x128xf32>, i32 -> vector<8x128xf32>
    %700 = arith.mulf %692, %699 : vector<8x128xf32>
    %701 = vector.extract_strided_slice %700 {offsets = [0, 0], sizes = [8, 32], strides = [1, 1]} : vector<8x128xf32> to vector<8x32xf32>
    %c11_i32 = arith.constant 11 : i32
    %702 = arith.index_cast %c11_i32 : i32 to index
    %c0_249 = arith.constant 0 : index
    %c0_250 = arith.constant 0 : index
    %703 = vector.load %arg15[%702, %c0_249, %c0_250] : memref<12x8x128xf32, #tpu.memory_space<vmem>>, vector<1x8x128xf32>
    %704 = vector.shape_cast %703 : vector<1x8x128xf32> to vector<8x128xf32>
    %705 = arith.truncf %674 : vector<8x32xf32> to vector<8x32xbf16>
    %cst_251 = arith.constant dense<0.000000e+00> : vector<8x128xf32>
    %706 = tpu.matmul %705, %97, %cst_251 {dimension_numbers = #tpu.dot_dimension_numbers<[1], [0], [0], [1], [0, 0, 1, 1], [], []>} : vector<8x32xbf16>, vector<32x128xbf16>, vector<8x128xf32> -> vector<8x128xf32>
    %707 = arith.addf %704, %706 : vector<8x128xf32>
    %708 = arith.addf %707, %707 : vector<8x128xf32>
    %709 = arith.select %105, %708, %707 : vector<8x128xi1>, vector<8x128xf32>
    %cst_252 = arith.constant 0.000000e+00 : f32
    %710 = vector.broadcast %cst_252 : f32 to vector<8x128xf32>
    %711 = arith.subf %710, %709 : vector<8x128xf32>
    %712 = math.exp %711 : vector<8x128xf32>
    %cst_253 = arith.constant 1.000000e+00 : f32
    %713 = vector.broadcast %cst_253 : f32 to vector<8x128xf32>
    %714 = arith.addf %713, %712 : vector<8x128xf32>
    %715 = tpu.reciprocal %714 {approx = true} : vector<8x128xf32> -> vector<8x128xf32>
    %716 = arith.addf %715, %715 : vector<8x128xf32>
    %cst_254 = arith.constant 1.000000e+00 : f32
    %717 = vector.broadcast %cst_254 : f32 to vector<8x128xf32>
    %718 = arith.subf %716, %717 : vector<8x128xf32>
    %719 = arith.select %105, %718, %715 : vector<8x128xi1>, vector<8x128xf32>
    %c96_i32_255 = arith.constant 96 : i32
    %720 = tpu.dynamic_rotate %719 by %c96_i32_255 dim 1 : vector<8x128xf32>, i32 -> vector<8x128xf32>
    %c64_i32_256 = arith.constant 64 : i32
    %721 = tpu.dynamic_rotate %719 by %c64_i32_256 dim 1 : vector<8x128xf32>, i32 -> vector<8x128xf32>
    %722 = arith.mulf %719, %670 : vector<8x128xf32>
    %723 = arith.mulf %720, %721 : vector<8x128xf32>
    %724 = arith.addf %722, %723 : vector<8x128xf32>
    %725 = math.tanh %724 : vector<8x128xf32>
    %c96_i32_257 = arith.constant 96 : i32
    %726 = tpu.dynamic_rotate %725 by %c96_i32_257 dim 1 : vector<8x128xf32>, i32 -> vector<8x128xf32>
    %727 = arith.mulf %719, %726 : vector<8x128xf32>
    %728 = vector.extract_strided_slice %727 {offsets = [0, 0], sizes = [8, 32], strides = [1, 1]} : vector<8x128xf32> to vector<8x32xf32>
    %729 = arith.truncf %728 : vector<8x32xf32> to vector<8x32xbf16>
    %cst_258 = arith.constant dense<0.000000e+00> : vector<8x128xf32>
    %730 = tpu.matmul %729, %98, %cst_258 {dimension_numbers = #tpu.dot_dimension_numbers<[1], [0], [0], [1], [0, 0, 1, 1], [], []>} : vector<8x32xbf16>, vector<32x128xbf16>, vector<8x128xf32> -> vector<8x128xf32>
    %731 = arith.addf %102, %730 : vector<8x128xf32>
    %732 = arith.truncf %701 : vector<8x32xf32> to vector<8x32xbf16>
    %cst_259 = arith.constant dense<0.000000e+00> : vector<8x128xf32>
    %733 = tpu.matmul %732, %99, %cst_259 {dimension_numbers = #tpu.dot_dimension_numbers<[1], [0], [0], [1], [0, 0, 1, 1], [], []>} : vector<8x32xbf16>, vector<32x128xbf16>, vector<8x128xf32> -> vector<8x128xf32>
    %734 = arith.addf %731, %733 : vector<8x128xf32>
    %735 = arith.addf %734, %734 : vector<8x128xf32>
    %736 = arith.select %105, %735, %734 : vector<8x128xi1>, vector<8x128xf32>
    %cst_260 = arith.constant 0.000000e+00 : f32
    %737 = vector.broadcast %cst_260 : f32 to vector<8x128xf32>
    %738 = arith.subf %737, %736 : vector<8x128xf32>
    %739 = math.exp %738 : vector<8x128xf32>
    %cst_261 = arith.constant 1.000000e+00 : f32
    %740 = vector.broadcast %cst_261 : f32 to vector<8x128xf32>
    %741 = arith.addf %740, %739 : vector<8x128xf32>
    %742 = tpu.reciprocal %741 {approx = true} : vector<8x128xf32> -> vector<8x128xf32>
    %743 = arith.addf %742, %742 : vector<8x128xf32>
    %cst_262 = arith.constant 1.000000e+00 : f32
    %744 = vector.broadcast %cst_262 : f32 to vector<8x128xf32>
    %745 = arith.subf %743, %744 : vector<8x128xf32>
    %746 = arith.select %105, %745, %742 : vector<8x128xi1>, vector<8x128xf32>
    %c96_i32_263 = arith.constant 96 : i32
    %747 = tpu.dynamic_rotate %746 by %c96_i32_263 dim 1 : vector<8x128xf32>, i32 -> vector<8x128xf32>
    %c64_i32_264 = arith.constant 64 : i32
    %748 = tpu.dynamic_rotate %746 by %c64_i32_264 dim 1 : vector<8x128xf32>, i32 -> vector<8x128xf32>
    %749 = arith.mulf %746, %697 : vector<8x128xf32>
    %750 = arith.mulf %747, %748 : vector<8x128xf32>
    %751 = arith.addf %749, %750 : vector<8x128xf32>
    %752 = math.tanh %751 : vector<8x128xf32>
    %c96_i32_265 = arith.constant 96 : i32
    %753 = tpu.dynamic_rotate %752 by %c96_i32_265 dim 1 : vector<8x128xf32>, i32 -> vector<8x128xf32>
    %754 = arith.mulf %746, %753 : vector<8x128xf32>
    %755 = vector.extract_strided_slice %754 {offsets = [0, 0], sizes = [8, 32], strides = [1, 1]} : vector<8x128xf32> to vector<8x32xf32>
    %c12_i32 = arith.constant 12 : i32
    %756 = arith.truncf %755 : vector<8x32xf32> to vector<8x32xbf16>
    %c0_266 = arith.constant 0 : index
    %c0_267 = arith.constant 0 : index
    %757 = vector.load %arg12[%c0_266, %c0_267] : memref<32x128xbf16, #tpu.memory_space<vmem>>, vector<32x128xbf16>
    %cst_268 = arith.constant dense<0.000000e+00> : vector<8x128xf32>
    %758 = tpu.matmul %756, %757, %cst_268 {dimension_numbers = #tpu.dot_dimension_numbers<[1], [0], [0], [1], [0, 0, 1, 1], [], []>} : vector<8x32xbf16>, vector<32x128xbf16>, vector<8x128xf32> -> vector<8x128xf32>
    %c0_269 = arith.constant 0 : index
    %c0_270 = arith.constant 0 : index
    %759 = vector.load %arg13[%c0_269, %c0_270] : memref<1x128xf32, #tpu.memory_space<vmem>>, vector<1x128xf32>
    %760 = vector.broadcast %759 : vector<1x128xf32> to vector<8x128xf32>
    %761 = arith.addf %758, %760 : vector<8x128xf32>
    %c0_271 = arith.constant 0 : index
    %c0_272 = arith.constant 0 : index
    %762 = vector.load %arg14[%c0_271, %c0_272] : memref<8x128xf32, #tpu.memory_space<vmem>>, vector<8x128xf32>
    tpu.vector_store %arg14[%c0_271, %c0_272], %761 {strides = array<i32>} : memref<8x128xf32, #tpu.memory_space<vmem>>, vector<8x128xf32>,
    return
  }
  func.func @transform_0(%arg0: i32) -> (i32, i32, i32) {
    %c0_i32 = arith.constant 0 : i32
    %c0_i32_0 = arith.constant 0 : i32
    %c0_i32_1 = arith.constant 0 : i32
    return %c0_i32, %arg0, %c0_i32_0 : i32, i32, i32
  }
  func.func @transform_1(%arg0: i32) -> (i32, i32, i32) {
    %c0_i32 = arith.constant 0 : i32
    %c0_i32_0 = arith.constant 0 : i32
    %c0_i32_1 = arith.constant 0 : i32
    %c0_i32_2 = arith.constant 0 : i32
    return %c0_i32, %c0_i32_0, %c0_i32_1 : i32, i32, i32
  }
  func.func @transform_2(%arg0: i32) -> (i32, i32) {
    %c0_i32 = arith.constant 0 : i32
    %c0_i32_0 = arith.constant 0 : i32
    %c0_i32_1 = arith.constant 0 : i32
    return %c0_i32, %c0_i32_0 : i32, i32
  }
  func.func @transform_3(%arg0: i32) -> (i32, i32, i32) {
    %c0_i32 = arith.constant 0 : i32
    %c0_i32_0 = arith.constant 0 : i32
    %c0_i32_1 = arith.constant 0 : i32
    %c0_i32_2 = arith.constant 0 : i32
    return %c0_i32, %c0_i32_0, %c0_i32_1 : i32, i32, i32
  }
  func.func @transform_4(%arg0: i32) -> (i32, i32) {
    %c0_i32 = arith.constant 0 : i32
    %c0_i32_0 = arith.constant 0 : i32
    %c0_i32_1 = arith.constant 0 : i32
    return %c0_i32, %c0_i32_0 : i32, i32
  }
  func.func @transform_5(%arg0: i32) -> (i32, i32) {
    %c0_i32 = arith.constant 0 : i32
    %c0_i32_0 = arith.constant 0 : i32
    %c0_i32_1 = arith.constant 0 : i32
    return %c0_i32, %c0_i32_0 : i32, i32
  }
  func.func @transform_6(%arg0: i32) -> (i32, i32) {
    %c0_i32 = arith.constant 0 : i32
    %c0_i32_0 = arith.constant 0 : i32
    %c0_i32_1 = arith.constant 0 : i32
    return %c0_i32, %c0_i32_0 : i32, i32
  }
  func.func @transform_7(%arg0: i32) -> (i32, i32) {
    %c0_i32 = arith.constant 0 : i32
    %c0_i32_0 = arith.constant 0 : i32
    %c0_i32_1 = arith.constant 0 : i32
    return %c0_i32, %c0_i32_0 : i32, i32
  }
  func.func @transform_8(%arg0: i32) -> (i32, i32) {
    %c0_i32 = arith.constant 0 : i32
    %c0_i32_0 = arith.constant 0 : i32
    %c0_i32_1 = arith.constant 0 : i32
    return %c0_i32, %c0_i32_0 : i32, i32
  }
  func.func @transform_9(%arg0: i32) -> (i32, i32) {
    %c0_i32 = arith.constant 0 : i32
    %c0_i32_0 = arith.constant 0 : i32
    %c0_i32_1 = arith.constant 0 : i32
    return %c0_i32, %c0_i32_0 : i32, i32
  }
  func.func @transform_10(%arg0: i32) -> (i32, i32) {
    %c0_i32 = arith.constant 0 : i32
    %c0_i32_0 = arith.constant 0 : i32
    %c0_i32_1 = arith.constant 0 : i32
    return %c0_i32, %c0_i32_0 : i32, i32
  }
  func.func @transform_11(%arg0: i32) -> (i32, i32) {
    %c0_i32 = arith.constant 0 : i32
    %c0_i32_0 = arith.constant 0 : i32
    %c0_i32_1 = arith.constant 0 : i32
    return %c0_i32, %c0_i32_0 : i32, i32
  }
  func.func @transform_12(%arg0: i32) -> (i32, i32) {
    %c0_i32 = arith.constant 0 : i32
    %c0_i32_0 = arith.constant 0 : i32
    %c0_i32_1 = arith.constant 0 : i32
    return %c0_i32, %c0_i32_0 : i32, i32
  }
  func.func @transform_13(%arg0: i32) -> (i32, i32) {
    %c0_i32 = arith.constant 0 : i32
    %c0_i32_0 = arith.constant 0 : i32
    return %arg0, %c0_i32 : i32, i32
  }
}

</mosaic_0001>

<llo_original>
// kernel: tpu_custom_call.1
$region0: #{tpu_custom_call.1}
  #allocation0 [shape = 'u32[]', space=smem, size = 0x4, offset = 0x4, fixed_abs, tag = 'smem constant byte address 0x4 - core index']
  #allocation1 [shape = 'u32[144,128]{1,0:T(1,128)}', space=vmem, size = 0x12000, scoped, tag = 'internal scratch']
  #allocation2 [shape = 'f32[12,8,128]{2,1,0:T(8,128)}', space=vmem, size = 0xc000, scoped, tag = 'scratch operand']
  %s0 = inlined_call_operand.vmem [shape: bf16[16,8,16], index: 0, kind: input, shape index: {}]
  %s1 = inlined_call_operand.vmem [shape: bf16[5,16,8], index: 1, kind: input, shape index: {}]
  %s2 = inlined_call_operand.hbm [shape: f32[1,8], index: 2, kind: input, shape index: {}]
  %s3 = inlined_call_operand.vmem [shape: bf16[5,8,4], index: 3, kind: input, shape index: {}]
  %s4 = inlined_call_operand.hbm [shape: f32[1,4], index: 4, kind: input, shape index: {}]
  %s5 = inlined_call_operand.hbm [shape: bf16[4,128], index: 5, kind: input, shape index: {}]
  %s6 = inlined_call_operand.vmem [shape: bf16[32,128], index: 6, kind: input, shape index: {}]
  %s7 = inlined_call_operand.hbm [shape: f32[1,128], index: 7, kind: input, shape index: {}]
  %s8 = inlined_call_operand.vmem [shape: bf16[32,128], index: 8, kind: input, shape index: {}]
  %s9 = inlined_call_operand.hbm [shape: bf16[32,128], index: 9, kind: input, shape index: {}]
  %s10 = inlined_call_operand.vmem [shape: f32[1,128], index: 10, kind: input, shape index: {}]
  %s11 = inlined_call_operand.hbm [shape: bf16[32,128], index: 11, kind: input, shape index: {}]
  %s12 = inlined_call_operand.vmem [shape: f32[1,128], index: 12, kind: input, shape index: {}]
  %s13 = inlined_call_operand.hbm [shape: f32[8,128], index: 13, kind: output, shape index: {}]
  %s14 = sld [smem:[#allocation0]]
  $region86: #{tpu_custom_call.1} parent=0
    _
  %s16 = ssub.s32 1, %s14
  %s17 = scalar_select 0, %s16, %s14
  $region1: #{tpu_custom_call.1} parent=0
    #allocation3 [shape = 'u8[512]{0}', space=vmem, size = 0x400, scoped, tag = 'input window, operand 2, single buffered']
    #allocation4 [shape = 's32[1]{0}', space=sflag, size = 0x4, scoped, tag = 'scoped memory for tpu_custom_call.1']
    #allocation5 [shape = 's32[1]{0}', space=sflag, size = 0x4, scoped, tag = 'scoped memory for tpu_custom_call.1']
    #allocation6 [shape = 'u8[512]{0}', space=vmem, size = 0x400, scoped, tag = 'input window, operand 4, single buffered']
    #allocation7 [shape = 's32[1]{0}', space=sflag, size = 0x4, scoped, tag = 'scoped memory for tpu_custom_call.1']
    #allocation8 [shape = 'u8[1024]{0}', space=vmem, size = 0x400, scoped, tag = 'input window, operand 5, single buffered']
    #allocation9 [shape = 'u8[512]{0}', space=vmem, size = 0x400, scoped, tag = 'input window, operand 7, single buffered']
    #allocation10 [shape = 's32[1]{0}', space=sflag, size = 0x4, scoped, tag = 'scoped memory for tpu_custom_call.1']
    #allocation11 [shape = 'u8[8192]{0}', space=vmem, size = 0x2000, scoped, tag = 'input window, operand 9, single buffered']
    #allocation12 [shape = 'u8[8192]{0}', space=vmem, size = 0x2000, scoped, tag = 'input window, operand 11, single buffered']
    #allocation13 [shape = 's32[1]{0}', space=sflag, size = 0x4, scoped, tag = 'scoped memory for tpu_custom_call.1']
    #allocation14 [shape = 'u8[4096]{0}', space=vmem, size = 0x1000, scoped, tag = 'output window, operand 0, single buffered']
    %18 = vsyncpa [#allocation4], 0
    %19 = vsyncpa [#allocation7], 0
    %20 = vsyncpa [#allocation10], 0
    %21 = vsyncpa [#allocation13], 0
    %22 = vsyncpa [#allocation5], 0
    // Predicated region
    $region2: #{tpu_custom_call.1} parent=1 // pred_check
      _
    $region3: #{tpu_custom_call.1} parent=1 // pred_check_branch
      %24 = sbr.rel (0) target = $region5
    $region4: #{tpu_custom_call.1} parent=1 // pred_region
      _
    $region5: #{tpu_custom_call.1} parent=1 // pred_fallthru
      _
    // Predicated region
    $region6: #{tpu_custom_call.1} parent=1 // pred_check
      _
    $region7: #{tpu_custom_call.1} parent=1 // pred_check_branch
      %26 = sbr.rel (0) target = $region9
    $region8: #{tpu_custom_call.1} parent=1 // pred_region
      _
    $region9: #{tpu_custom_call.1} parent=1 // pred_fallthru
      _
    // Predicated region
    $region10: #{tpu_custom_call.1} parent=1 // pred_check
      _
    $region11: #{tpu_custom_call.1} parent=1 // pred_check_branch
      %28 = sbr.rel (0) target = $region13
    $region12: #{tpu_custom_call.1} parent=1 // pred_region
      %s30 = ssub.s32 16, 16
      %31 = vsyncadd [#allocation4], %s30
      %s33 = sshll.u32 [#allocation3], 4
      %s34 = int_to_ptr.vmem [resolvable:$true] %s33
      %36 = dma.hbm_to_vmem [thread:$0]  %s2, 16, %s34, [#allocation4]
    $region13: #{tpu_custom_call.1} parent=1 // pred_fallthru
      _
    // Predicated region
    $region14: #{tpu_custom_call.1} parent=1 // pred_check
      _
    $region15: #{tpu_custom_call.1} parent=1 // pred_check_branch
      %38 = sbr.rel (0) target = $region17
    $region16: #{tpu_custom_call.1} parent=1 // pred_region
      _
    $region17: #{tpu_custom_call.1} parent=1 // pred_fallthru
      _
    // Predicated region
    $region18: #{tpu_custom_call.1} parent=1 // pred_check
      _
    $region19: #{tpu_custom_call.1} parent=1 // pred_check_branch
      %40 = sbr.rel (0) target = $region21
    $region20: #{tpu_custom_call.1} parent=1 // pred_region
      %s42 = ssub.s32 16, 16
      %43 = vsyncadd [#allocation7], %s42
      %s45 = sshll.u32 [#allocation6], 4
      %s46 = int_to_ptr.vmem [resolvable:$true] %s45
      %48 = dma.hbm_to_vmem [thread:$0]  %s4, 16, %s46, [#allocation7]
    $region21: #{tpu_custom_call.1} parent=1 // pred_fallthru
      _
    // Predicated region
    $region22: #{tpu_custom_call.1} parent=1 // pred_check
      _
    $region23: #{tpu_custom_call.1} parent=1 // pred_check_branch
      %50 = sbr.rel (0) target = $region25
    $region24: #{tpu_custom_call.1} parent=1 // pred_region
      %s52 = ssub.s32 32, 32
      %53 = vsyncadd [#allocation7], %s52
      %s55 = sshll.u32 [#allocation8], 4
      %s56 = int_to_ptr.vmem [resolvable:$true] %s55
      %58 = dma.hbm_to_vmem [thread:$0]  %s5, 32, %s56, [#allocation7]
    $region25: #{tpu_custom_call.1} parent=1 // pred_fallthru
      _
    // Predicated region
    $region26: #{tpu_custom_call.1} parent=1 // pred_check
      _
    $region27: #{tpu_custom_call.1} parent=1 // pred_check_branch
      %60 = sbr.rel (0) target = $region29
    $region28: #{tpu_custom_call.1} parent=1 // pred_region
      _
    $region29: #{tpu_custom_call.1} parent=1 // pred_fallthru
      _
    // Predicated region
    $region30: #{tpu_custom_call.1} parent=1 // pred_check
      _
    $region31: #{tpu_custom_call.1} parent=1 // pred_check_branch
      %62 = sbr.rel (0) target = $region33
    $region32: #{tpu_custom_call.1} parent=1 // pred_region
      %s64 = ssub.s32 16, 16
      %65 = vsyncadd [#allocation10], %s64
      %s67 = sshll.u32 [#allocation9], 4
      %s68 = int_to_ptr.vmem [resolvable:$true] %s67
      %70 = dma.hbm_to_vmem [thread:$0]  %s7, 16, %s68, [#allocation10]
    $region33: #{tpu_custom_call.1} parent=1 // pred_fallthru
      _
    // Predicated region
    $region34: #{tpu_custom_call.1} parent=1 // pred_check
      _
    $region35: #{tpu_custom_call.1} parent=1 // pred_check_branch
      %72 = sbr.rel (0) target = $region37
    $region36: #{tpu_custom_call.1} parent=1 // pred_region
      _
    $region37: #{tpu_custom_call.1} parent=1 // pred_fallthru
      _
    // Predicated region
    $region38: #{tpu_custom_call.1} parent=1 // pred_check
      _
    $region39: #{tpu_custom_call.1} parent=1 // pred_check_branch
      %74 = sbr.rel (0) target = $region41
    $region40: #{tpu_custom_call.1} parent=1 // pred_region
      %s76 = ssub.s32 256, 256
      %77 = vsyncadd [#allocation10], %s76
      %s78 = sshll.u32 [#allocation11], 4
      %s79 = int_to_ptr.vmem [resolvable:$true] %s78
      %84 = dma.hbm_to_vmem [thread:$0]  %s9, 256, %s79, [#allocation10], 64, 64, 4
    $region41: #{tpu_custom_call.1} parent=1 // pred_fallthru
      _
    // Predicated region
    $region42: #{tpu_custom_call.1} parent=1 // pred_check
      _
    $region43: #{tpu_custom_call.1} parent=1 // pred_check_branch
      %86 = sbr.rel (0) target = $region45
    $region44: #{tpu_custom_call.1} parent=1 // pred_region
      _
    $region45: #{tpu_custom_call.1} parent=1 // pred_fallthru
      _
    // Predicated region
    $region46: #{tpu_custom_call.1} parent=1 // pred_check
      _
    $region47: #{tpu_custom_call.1} parent=1 // pred_check_branch
      %88 = sbr.rel (0) target = $region49
    $region48: #{tpu_custom_call.1} parent=1 // pred_region
      %s90 = ssub.s32 256, 256
      %91 = vsyncadd [#allocation13], %s90
      %s92 = sshll.u32 [#allocation12], 4
      %s93 = int_to_ptr.vmem [resolvable:$true] %s92
      %98 = dma.hbm_to_vmem [thread:$0]  %s11, 256, %s93, [#allocation13], 64, 64, 4
    $region49: #{tpu_custom_call.1} parent=1 // pred_fallthru
      _
    // Predicated region
    $region50: #{tpu_custom_call.1} parent=1 // pred_check
      _
    $region51: #{tpu_custom_call.1} parent=1 // pred_check_branch
      %100 = sbr.rel (0) target = $region53
    $region52: #{tpu_custom_call.1} parent=1 // pred_region
      _
    $region53: #{tpu_custom_call.1} parent=1 // pred_fallthru
      _
    // Predicated region
    $region54: #{tpu_custom_call.1} parent=1 // pred_check
      _
    $region55: #{tpu_custom_call.1} parent=1 // pred_check_branch
      %102 = sbr.rel (0) target = $region57
    $region56: #{tpu_custom_call.1} parent=1 // pred_region
      %103 = dma.done [#allocation4], 16
    $region57: #{tpu_custom_call.1} parent=1 // pred_fallthru
      _
    // Predicated region
    $region58: #{tpu_custom_call.1} parent=1 // pred_check
      _
    $region59: #{tpu_custom_call.1} parent=1 // pred_check_branch
      %105 = sbr.rel (0) target = $region61
    $region60: #{tpu_custom_call.1} parent=1 // pred_region
      %106 = dma.done [#allocation7], 16
    $region61: #{tpu_custom_call.1} parent=1 // pred_fallthru
      _
    // Predicated region
    $region62: #{tpu_custom_call.1} parent=1 // pred_check
      _
    $region63: #{tpu_custom_call.1} parent=1 // pred_check_branch
      %108 = sbr.rel (0) target = $region65
    $region64: #{tpu_custom_call.1} parent=1 // pred_region
      %109 = dma.done [#allocation7], 32
    $region65: #{tpu_custom_call.1} parent=1 // pred_fallthru
      _
    // Predicated region
    $region66: #{tpu_custom_call.1} parent=1 // pred_check
      _
    $region67: #{tpu_custom_call.1} parent=1 // pred_check_branch
      %111 = sbr.rel (0) target = $region69
    $region68: #{tpu_custom_call.1} parent=1 // pred_region
      %112 = dma.done [#allocation10], 16
    $region69: #{tpu_custom_call.1} parent=1 // pred_fallthru
      _
    // Predicated region
    $region70: #{tpu_custom_call.1} parent=1 // pred_check
      _
    $region71: #{tpu_custom_call.1} parent=1 // pred_check_branch
      %114 = sbr.rel (0) target = $region73
    $region72: #{tpu_custom_call.1} parent=1 // pred_region
      %115 = dma.done [#allocation10], 256
    $region73: #{tpu_custom_call.1} parent=1 // pred_fallthru
      _
    // Predicated region
    $region74: #{tpu_custom_call.1} parent=1 // pred_check
      _
    $region75: #{tpu_custom_call.1} parent=1 // pred_check_branch
      %117 = sbr.rel (0) target = $region77
    $region76: #{tpu_custom_call.1} parent=1 // pred_region
      %118 = dma.done [#allocation13], 256
    $region77: #{tpu_custom_call.1} parent=1 // pred_fallthru
      _
    %v120 = vld [vmem:[%s0] sm:$0xf]
    %v121 = vld [vmem:[%s0 + $0x4] sm:$0xf]
    %v122 = vld [vmem:[%s0 + $0x8] sm:$0xf]
    %v123 = vld [vmem:[%s0 + $0xc] sm:$0xf]
    %v124 = vld [vmem:[%s0 + $0x10] sm:$0xf]
    %v125 = vld [vmem:[%s0 + $0x14] sm:$0xf]
    %v126 = vld [vmem:[%s0 + $0x18] sm:$0xf]
    %v127 = vld [vmem:[%s0 + $0x1c] sm:$0xf]
    %v128 = vld [vmem:[%s0 + $0x20] sm:$0xf]
    %v129 = vld [vmem:[%s0 + $0x24] sm:$0xf]
    %v130 = vld [vmem:[%s0 + $0x28] sm:$0xf]
    %v131 = vld [vmem:[%s0 + $0x2c] sm:$0xf]
    %v132 = vld [vmem:[%s0 + $0x30] sm:$0xf]
    %v133 = vld [vmem:[%s0 + $0x34] sm:$0xf]
    %v134 = vld [vmem:[%s0 + $0x38] sm:$0xf]
    %v135 = vld [vmem:[%s0 + $0x3c] sm:$0xf]
    %v136 = vld [vmem:[%s1] sm:$0xf]
    %v137 = vld [vmem:[%s1 + $0x4] sm:$0xf]
    %s138 = scalar_lea.vmem %s1, 8
    %v139 = vld [vmem:[%s138] sm:$0xf]
    %v140 = vld [vmem:[%s138 + $0x4] sm:$0xf]
    %v157 = vunpack.c.l.b16 0
    %v158 = vunpack.c.l.b16 %v120
    %v159 = vunpack.c.l.b16 %v121
    %v160 = vunpack.c.l.b16 %v122
    %v161 = vunpack.c.l.b16 %v123
    %v162 = vunpack.c.l.b16 %v124
    %v163 = vunpack.c.l.b16 %v125
    %v164 = vunpack.c.l.b16 %v126
    %v165 = vunpack.c.l.b16 %v127
    %v166 = vunpack.c.l.b16 %v128
    %v167 = vunpack.c.l.b16 %v129
    %v168 = vunpack.c.l.b16 %v130
    %v169 = vunpack.c.l.b16 %v131
    %v170 = vunpack.c.l.b16 %v132
    %v171 = vunpack.c.l.b16 %v133
    %v172 = vunpack.c.l.b16 %v134
    %v173 = vpack.c.b16 %v158, %v157
    %v174 = vpack.c.b16 %v160, %v159
    %v175 = vpack.c.b16 %v162, %v161
    %v176 = vpack.c.b16 %v164, %v163
    %v177 = vpack.c.b16 %v166, %v165
    %v178 = vpack.c.b16 %v168, %v167
    %v179 = vpack.c.b16 %v170, %v169
    %v180 = vpack.c.b16 %v172, %v171
    %v183 = vunpack.c.l.b16 %v139
    %v184 = vunpack.c.l.b16 %v140
    %v185 = vpack.c.b16 %v184, %v183
    %vm187 = vcmask 130048
    %v189 = vsel %vm187, %v173, 0
    %v192 = vsel %vm187, %v174, 0
    %v195 = vsel %vm187, %v175, 0
    %v198 = vsel %vm187, %v176, 0
    %v201 = vsel %vm187, %v177, 0
    %v204 = vsel %vm187, %v178, 0
    %v207 = vsel %vm187, %v179, 0
    %v210 = vsel %vm187, %v180, 0
    %212 = vmatprep.subr.bf16.mxu0 0
    %213 = vmatpush1.bf16.msra.mxu0 %v185
    %214 = vmatprep.subr.bf16.mxu0 0
    %215 = vmatpush1.bf16.msra.mxu0 0
    %216 = vmatprep.subr.bf16.mxu0 0
    %217 = vmatpush1.bf16.msra.mxu0 0
    %218 = vmatprep.subr.bf16.mxu0 0
    %219 = vmatpush1.bf16.msra.mxu0 0
    %220 = vmatprep.subr.bf16.mxu0 0
    %221 = vmatpush1.bf16.msra.mxu0 0
    %222 = vmatprep.subr.bf16.mxu0 0
    %223 = vmatpush1.bf16.msra.mxu0 0
    %224 = vmatprep.subr.bf16.mxu0 0
    %225 = vmatpush1.bf16.msra.mxu0 0
    %226 = vmatprep.subr.bf16.mxu0 0
    %227 = vmatpush1.bf16.msra.mxu0 0
    %228 = vmatprep.subr.bf16.mxu0 0
    %229 = vmatpush1.bf16.msra.mxu0 0
    %230 = vmatprep.subr.bf16.mxu0 0
    %231 = vmatpush1.bf16.msra.mxu0 0
    %232 = vmatprep.subr.bf16.mxu0 0
    %233 = vmatpush1.bf16.msra.mxu0 0
    %234 = vmatprep.subr.bf16.mxu0 0
    %235 = vmatpush1.bf16.msra.mxu0 0
    %236 = vmatprep.subr.bf16.mxu0 0
    %237 = vmatpush1.bf16.msra.mxu0 0
    %238 = vmatprep.subr.bf16.mxu0 0
    %239 = vmatpush1.bf16.msra.mxu0 0
    %240 = vmatprep.subr.bf16.mxu0 0
    %241 = vmatpush1.bf16.msra.mxu0 0
    %242 = vmatprep.subr.bf16.mxu0 0
    %243 = vmatpush1.bf16.msra.mxu0 0
    %244 = vmatprep.mubr.bf16.mxu0 0
    %245 = vmatmul.mubr.bf16.gmra.mrb[0].mxu0 %v189
    %v246 = vpop.f32.mrb[0].mxu0
    %v247 = vadd.f32 0.0, %v246
    %v248 = vpop.f32.mrb[0].mxu0
    %v249 = vpop.f32.mrb[0].mxu0
    %v250 = vadd.f32 0.0, %v249
    %v251 = vpop.f32.mrb[0].mxu0
    %252 = vmatprep.mubr.bf16.mxu0 0
    %253 = vmatmul.mubr.bf16.gmra.mrb[0].mxu0 %v192
    %v254 = vpop.f32.mrb[0].mxu0
    %v255 = vadd.f32 0.0, %v254
    %v256 = vpop.f32.mrb[0].mxu0
    %v257 = vpop.f32.mrb[0].mxu0
    %v258 = vadd.f32 0.0, %v257
    %v259 = vpop.f32.mrb[0].mxu0
    %260 = vmatprep.mubr.bf16.mxu0 0
    %261 = vmatmul.mubr.bf16.gmra.mrb[0].mxu0 %v195
    %v262 = vpop.f32.mrb[0].mxu0
    %v263 = vadd.f32 0.0, %v262
    %v264 = vpop.f32.mrb[0].mxu0
    %v265 = vpop.f32.mrb[0].mxu0
    %v266 = vadd.f32 0.0, %v265
    %v267 = vpop.f32.mrb[0].mxu0
    %268 = vmatprep.mubr.bf16.mxu0 0
    %269 = vmatmul.mubr.bf16.gmra.mrb[0].mxu0 %v198
    %v270 = vpop.f32.mrb[0].mxu0
    %v271 = vadd.f32 0.0, %v270
    %v272 = vpop.f32.mrb[0].mxu0
    %v273 = vpop.f32.mrb[0].mxu0
    %v274 = vadd.f32 0.0, %v273
    %v275 = vpop.f32.mrb[0].mxu0
    %276 = vmatprep.mubr.bf16.mxu0 0
    %277 = vmatmul.mubr.bf16.gmra.mrb[0].mxu0 %v201
    %v278 = vpop.f32.mrb[0].mxu0
    %v279 = vadd.f32 0.0, %v278
    %v280 = vpop.f32.mrb[0].mxu0
    %v281 = vpop.f32.mrb[0].mxu0
    %v282 = vadd.f32 0.0, %v281
    %v283 = vpop.f32.mrb[0].mxu0
    %284 = vmatprep.mubr.bf16.mxu0 0
    %285 = vmatmul.mubr.bf16.gmra.mrb[0].mxu0 %v204
    %v286 = vpop.f32.mrb[0].mxu0
    %v287 = vadd.f32 0.0, %v286
    %v288 = vpop.f32.mrb[0].mxu0
    %v289 = vpop.f32.mrb[0].mxu0
    %v290 = vadd.f32 0.0, %v289
    %v291 = vpop.f32.mrb[0].mxu0
    %292 = vmatprep.mubr.bf16.mxu0 0
    %293 = vmatmul.mubr.bf16.gmra.mrb[0].mxu0 %v207
    %v294 = vpop.f32.mrb[0].mxu0
    %v295 = vadd.f32 0.0, %v294
    %v296 = vpop.f32.mrb[0].mxu0
    %v297 = vpop.f32.mrb[0].mxu0
    %v298 = vadd.f32 0.0, %v297
    %v299 = vpop.f32.mrb[0].mxu0
    %300 = vmatprep.mubr.bf16.mxu0 0
    %301 = vmatmul.mubr.bf16.gmra.mrb[0].mxu0 %v210
    %v302 = vpop.f32.mrb[0].mxu0
    %v303 = vadd.f32 0.0, %v302
    %v304 = vpop.f32.mrb[0].mxu0
    %v305 = vpop.f32.mrb[0].mxu0
    %v306 = vadd.f32 0.0, %v305
    %v307 = vpop.f32.mrb[0].mxu0
    %308 = vdwg.mxu0
    %v309 = vpack.c.b16 %v157, %v157
    %v310 = vpack.c.b16 %v159, %v158
    %v311 = vpack.c.b16 %v161, %v160
    %v312 = vpack.c.b16 %v163, %v162
    %v313 = vpack.c.b16 %v165, %v164
    %v314 = vpack.c.b16 %v167, %v166
    %v315 = vpack.c.b16 %v169, %v168
    %v316 = vpack.c.b16 %v171, %v170
    %v319 = vunpack.c.l.b16 %v136
    %v320 = vunpack.c.l.b16 %v137
    %v321 = vpack.c.b16 %v320, %v319
    %v324 = vsel %vm187, %v309, 0
    %v327 = vsel %vm187, %v310, 0
    %v330 = vsel %vm187, %v311, 0
    %v333 = vsel %vm187, %v312, 0
    %v336 = vsel %vm187, %v313, 0
    %v339 = vsel %vm187, %v314, 0
    %v342 = vsel %vm187, %v315, 0
    %v345 = vsel %vm187, %v316, 0
    %347 = vmatprep.subr.bf16.mxu0 0
    %348 = vmatpush1.bf16.msra.mxu0 %v321
    %349 = vmatprep.subr.bf16.mxu0 0
    %350 = vmatpush1.bf16.msra.mxu0 0
    %351 = vmatprep.subr.bf16.mxu0 0
    %352 = vmatpush1.bf16.msra.mxu0 0
    %353 = vmatprep.subr.bf16.mxu0 0
    %354 = vmatpush1.bf16.msra.mxu0 0
    %355 = vmatprep.subr.bf16.mxu0 0
    %356 = vmatpush1.bf16.msra.mxu0 0
    %357 = vmatprep.subr.bf16.mxu0 0
    %358 = vmatpush1.bf16.msra.mxu0 0
    %359 = vmatprep.subr.bf16.mxu0 0
    %360 = vmatpush1.bf16.msra.mxu0 0
    %361 = vmatprep.subr.bf16.mxu0 0
    %362 = vmatpush1.bf16.msra.mxu0 0
    %363 = vmatprep.subr.bf16.mxu0 0
    %364 = vmatpush1.bf16.msra.mxu0 0
    %365 = vmatprep.subr.bf16.mxu0 0
    %366 = vmatpush1.bf16.msra.mxu0 0
    %367 = vmatprep.subr.bf16.mxu0 0
    %368 = vmatpush1.bf16.msra.mxu0 0
    %369 = vmatprep.subr.bf16.mxu0 0
    %370 = vmatpush1.bf16.msra.mxu0 0
    %371 = vmatprep.subr.bf16.mxu0 0
    %372 = vmatpush1.bf16.msra.mxu0 0
    %373 = vmatprep.subr.bf16.mxu0 0
    %374 = vmatpush1.bf16.msra.mxu0 0
    %375 = vmatprep.subr.bf16.mxu0 0
    %376 = vmatpush1.bf16.msra.mxu0 0
    %377 = vmatprep.subr.bf16.mxu0 0
    %378 = vmatpush1.bf16.msra.mxu0 0
    %379 = vmatprep.mubr.bf16.mxu0 0
    %380 = vmatmul.mubr.bf16.gmra.mrb[0].mxu0 %v324
    %v381 = vpop.f32.mrb[0].mxu0
    %v382 = vadd.f32 %v247, %v381
    %v383 = vpop.f32.mrb[0].mxu0
    %v384 = vpop.f32.mrb[0].mxu0
    %v385 = vadd.f32 %v250, %v384
    %v386 = vpop.f32.mrb[0].mxu0
    %387 = vmatprep.mubr.bf16.mxu0 0
    %388 = vmatmul.mubr.bf16.gmra.mrb[0].mxu0 %v327
    %v389 = vpop.f32.mrb[0].mxu0
    %v390 = vadd.f32 %v255, %v389
    %v391 = vpop.f32.mrb[0].mxu0
    %v392 = vpop.f32.mrb[0].mxu0
    %v393 = vadd.f32 %v258, %v392
    %v394 = vpop.f32.mrb[0].mxu0
    %395 = vmatprep.mubr.bf16.mxu0 0
    %396 = vmatmul.mubr.bf16.gmra.mrb[0].mxu0 %v330
    %v397 = vpop.f32.mrb[0].mxu0
    %v398 = vadd.f32 %v263, %v397
    %v399 = vpop.f32.mrb[0].mxu0
    %v400 = vpop.f32.mrb[0].mxu0
    %v401 = vadd.f32 %v266, %v400
    %v402 = vpop.f32.mrb[0].mxu0
    %403 = vmatprep.mubr.bf16.mxu0 0
    %404 = vmatmul.mubr.bf16.gmra.mrb[0].mxu0 %v333
    %v405 = vpop.f32.mrb[0].mxu0
    %v406 = vadd.f32 %v271, %v405
    %v407 = vpop.f32.mrb[0].mxu0
    %v408 = vpop.f32.mrb[0].mxu0
    %v409 = vadd.f32 %v274, %v408
    %v410 = vpop.f32.mrb[0].mxu0
    %411 = vmatprep.mubr.bf16.mxu0 0
    %412 = vmatmul.mubr.bf16.gmra.mrb[0].mxu0 %v336
    %v413 = vpop.f32.mrb[0].mxu0
    %v414 = vadd.f32 %v279, %v413
    %v415 = vpop.f32.mrb[0].mxu0
    %v416 = vpop.f32.mrb[0].mxu0
    %v417 = vadd.f32 %v282, %v416
    %v418 = vpop.f32.mrb[0].mxu0
    %419 = vmatprep.mubr.bf16.mxu0 0
    %420 = vmatmul.mubr.bf16.gmra.mrb[0].mxu0 %v339
    %v421 = vpop.f32.mrb[0].mxu0
    %v422 = vadd.f32 %v287, %v421
    %v423 = vpop.f32.mrb[0].mxu0
    %v424 = vpop.f32.mrb[0].mxu0
    %v425 = vadd.f32 %v290, %v424
    %v426 = vpop.f32.mrb[0].mxu0
    %427 = vmatprep.mubr.bf16.mxu0 0
    %428 = vmatmul.mubr.bf16.gmra.mrb[0].mxu0 %v342
    %v429 = vpop.f32.mrb[0].mxu0
    %v430 = vadd.f32 %v295, %v429
    %v431 = vpop.f32.mrb[0].mxu0
    %v432 = vpop.f32.mrb[0].mxu0
    %v433 = vadd.f32 %v298, %v432
    %v434 = vpop.f32.mrb[0].mxu0
    %435 = vmatprep.mubr.bf16.mxu0 0
    %436 = vmatmul.mubr.bf16.gmra.mrb[0].mxu0 %v345
    %v437 = vpop.f32.mrb[0].mxu0
    %v438 = vadd.f32 %v303, %v437
    %v439 = vpop.f32.mrb[0].mxu0
    %v440 = vpop.f32.mrb[0].mxu0
    %v441 = vadd.f32 %v306, %v440
    %v442 = vpop.f32.mrb[0].mxu0
    %443 = vdwg.mxu0
    %s444 = scalar_lea.vmem %s1, 16
    %v445 = vld [vmem:[%s444] sm:$0xf]
    %v446 = vld [vmem:[%s444 + $0x4] sm:$0xf]
    %v448 = vunpack.c.l.b16 %v135
    %v449 = vpack.c.b16 %v448, %v172
    %v452 = vunpack.c.l.b16 %v445
    %v453 = vunpack.c.l.b16 %v446
    %v454 = vpack.c.b16 %v453, %v452
    %v457 = vsel %vm187, %v449, 0
    %459 = vmatprep.subr.bf16.mxu0 0
    %460 = vmatpush1.bf16.msra.mxu0 %v454
    %461 = vmatprep.subr.bf16.mxu0 0
    %462 = vmatpush1.bf16.msra.mxu0 0
    %463 = vmatprep.subr.bf16.mxu0 0
    %464 = vmatpush1.bf16.msra.mxu0 0
    %465 = vmatprep.subr.bf16.mxu0 0
    %466 = vmatpush1.bf16.msra.mxu0 0
    %467 = vmatprep.subr.bf16.mxu0 0
    %468 = vmatpush1.bf16.msra.mxu0 0
    %469 = vmatprep.subr.bf16.mxu0 0
    %470 = vmatpush1.bf16.msra.mxu0 0
    %471 = vmatprep.subr.bf16.mxu0 0
    %472 = vmatpush1.bf16.msra.mxu0 0
    %473 = vmatprep.subr.bf16.mxu0 0
    %474 = vmatpush1.bf16.msra.mxu0 0
    %475 = vmatprep.subr.bf16.mxu0 0
    %476 = vmatpush1.bf16.msra.mxu0 0
    %477 = vmatprep.subr.bf16.mxu0 0
    %478 = vmatpush1.bf16.msra.mxu0 0
    %479 = vmatprep.subr.bf16.mxu0 0
    %480 = vmatpush1.bf16.msra.mxu0 0
    %481 = vmatprep.subr.bf16.mxu0 0
    %482 = vmatpush1.bf16.msra.mxu0 0
    %483 = vmatprep.subr.bf16.mxu0 0
    %484 = vmatpush1.bf16.msra.mxu0 0
    %485 = vmatprep.subr.bf16.mxu0 0
    %486 = vmatpush1.bf16.msra.mxu0 0
    %487 = vmatprep.subr.bf16.mxu0 0
    %488 = vmatpush1.bf16.msra.mxu0 0
    %489 = vmatprep.subr.bf16.mxu0 0
    %490 = vmatpush1.bf16.msra.mxu0 0
    %491 = vmatprep.mubr.bf16.mxu0 0
    %492 = vmatmul.mubr.bf16.gmra.mrb[0].mxu0 %v327
    %v493 = vpop.f32.mrb[0].mxu0
    %v494 = vadd.f32 0.0, %v493
    %v495 = vpop.f32.mrb[0].mxu0
    %v496 = vpop.f32.mrb[0].mxu0
    %v497 = vadd.f32 0.0, %v496
    %v498 = vpop.f32.mrb[0].mxu0
    %499 = vmatprep.mubr.bf16.mxu0 0
    %500 = vmatmul.mubr.bf16.gmra.mrb[0].mxu0 %v330
    %v501 = vpop.f32.mrb[0].mxu0
    %v502 = vadd.f32 0.0, %v501
    %v503 = vpop.f32.mrb[0].mxu0
    %v504 = vpop.f32.mrb[0].mxu0
    %v505 = vadd.f32 0.0, %v504
    %v506 = vpop.f32.mrb[0].mxu0
    %507 = vmatprep.mubr.bf16.mxu0 0
    %508 = vmatmul.mubr.bf16.gmra.mrb[0].mxu0 %v333
    %v509 = vpop.f32.mrb[0].mxu0
    %v510 = vadd.f32 0.0, %v509
    %v511 = vpop.f32.mrb[0].mxu0
    %v512 = vpop.f32.mrb[0].mxu0
    %v513 = vadd.f32 0.0, %v512
    %v514 = vpop.f32.mrb[0].mxu0
    %515 = vmatprep.mubr.bf16.mxu0 0
    %516 = vmatmul.mubr.bf16.gmra.mrb[0].mxu0 %v336
    %v517 = vpop.f32.mrb[0].mxu0
    %v518 = vadd.f32 0.0, %v517
    %v519 = vpop.f32.mrb[0].mxu0
    %v520 = vpop.f32.mrb[0].mxu0
    %v521 = vadd.f32 0.0, %v520
    %v522 = vpop.f32.mrb[0].mxu0
    %523 = vmatprep.mubr.bf16.mxu0 0
    %524 = vmatmul.mubr.bf16.gmra.mrb[0].mxu0 %v339
    %v525 = vpop.f32.mrb[0].mxu0
    %v526 = vadd.f32 0.0, %v525
    %v527 = vpop.f32.mrb[0].mxu0
    %v528 = vpop.f32.mrb[0].mxu0
    %v529 = vadd.f32 0.0, %v528
    %v530 = vpop.f32.mrb[0].mxu0
    %531 = vmatprep.mubr.bf16.mxu0 0
    %532 = vmatmul.mubr.bf16.gmra.mrb[0].mxu0 %v342
    %v533 = vpop.f32.mrb[0].mxu0
    %v534 = vadd.f32 0.0, %v533
    %v535 = vpop.f32.mrb[0].mxu0
    %v536 = vpop.f32.mrb[0].mxu0
    %v537 = vadd.f32 0.0, %v536
    %v538 = vpop.f32.mrb[0].mxu0
    %539 = vmatprep.mubr.bf16.mxu0 0
    %540 = vmatmul.mubr.bf16.gmra.mrb[0].mxu0 %v345
    %v541 = vpop.f32.mrb[0].mxu0
    %v542 = vadd.f32 0.0, %v541
    %v543 = vpop.f32.mrb[0].mxu0
    %v544 = vpop.f32.mrb[0].mxu0
    %v545 = vadd.f32 0.0, %v544
    %v546 = vpop.f32.mrb[0].mxu0
    %547 = vmatprep.mubr.bf16.mxu0 0
    %548 = vmatmul.mubr.bf16.gmra.mrb[0].mxu0 %v457
    %v549 = vpop.f32.mrb[0].mxu0
    %v550 = vadd.f32 0.0, %v549
    %v551 = vpop.f32.mrb[0].mxu0
    %v552 = vpop.f32.mrb[0].mxu0
    %v553 = vadd.f32 0.0, %v552
    %v554 = vpop.f32.mrb[0].mxu0
    %555 = vdwg.mxu0
    %v556 = vadd.f32 %v382, %v494
    %v557 = vadd.f32 %v385, %v497
    %v558 = vadd.f32 %v390, %v502
    %v559 = vadd.f32 %v393, %v505
    %v560 = vadd.f32 %v398, %v510
    %v561 = vadd.f32 %v401, %v513
    %v562 = vadd.f32 %v406, %v518
    %v563 = vadd.f32 %v409, %v521
    %v564 = vadd.f32 %v414, %v526
    %v565 = vadd.f32 %v417, %v529
    %v566 = vadd.f32 %v422, %v534
    %v567 = vadd.f32 %v425, %v537
    %v568 = vadd.f32 %v430, %v542
    %v569 = vadd.f32 %v433, %v545
    %v570 = vadd.f32 %v438, %v550
    %v571 = vadd.f32 %v441, %v553
    %s572 = scalar_lea.vmem %s1, 24
    %v573 = vld [vmem:[%s572] sm:$0xf]
    %v574 = vld [vmem:[%s572 + $0x4] sm:$0xf]
    %v575 = vpack.c.b16 %v157, %v448
    %v578 = vunpack.c.l.b16 %v573
    %v579 = vunpack.c.l.b16 %v574
    %v580 = vpack.c.b16 %v579, %v578
    %v583 = vsel %vm187, %v575, 0
    %585 = vmatprep.subr.bf16.mxu0 0
    %586 = vmatpush1.bf16.msra.mxu0 %v580
    %587 = vmatprep.subr.bf16.mxu0 0
    %588 = vmatpush1.bf16.msra.mxu0 0
    %589 = vmatprep.subr.bf16.mxu0 0
    %590 = vmatpush1.bf16.msra.mxu0 0
    %591 = vmatprep.subr.bf16.mxu0 0
    %592 = vmatpush1.bf16.msra.mxu0 0
    %593 = vmatprep.subr.bf16.mxu0 0
    %594 = vmatpush1.bf16.msra.mxu0 0
    %595 = vmatprep.subr.bf16.mxu0 0
    %596 = vmatpush1.bf16.msra.mxu0 0
    %597 = vmatprep.subr.bf16.mxu0 0
    %598 = vmatpush1.bf16.msra.mxu0 0
    %599 = vmatprep.subr.bf16.mxu0 0
    %600 = vmatpush1.bf16.msra.mxu0 0
    %601 = vmatprep.subr.bf16.mxu0 0
    %602 = vmatpush1.bf16.msra.mxu0 0
    %603 = vmatprep.subr.bf16.mxu0 0
    %604 = vmatpush1.bf16.msra.mxu0 0
    %605 = vmatprep.subr.bf16.mxu0 0
    %606 = vmatpush1.bf16.msra.mxu0 0
    %607 = vmatprep.subr.bf16.mxu0 0
    %608 = vmatpush1.bf16.msra.mxu0 0
    %609 = vmatprep.subr.bf16.mxu0 0
    %610 = vmatpush1.bf16.msra.mxu0 0
    %611 = vmatprep.subr.bf16.mxu0 0
    %612 = vmatpush1.bf16.msra.mxu0 0
    %613 = vmatprep.subr.bf16.mxu0 0
    %614 = vmatpush1.bf16.msra.mxu0 0
    %615 = vmatprep.subr.bf16.mxu0 0
    %616 = vmatpush1.bf16.msra.mxu0 0
    %617 = vmatprep.mubr.bf16.mxu0 0
    %618 = vmatmul.mubr.bf16.gmra.mrb[0].mxu0 %v192
    %v619 = vpop.f32.mrb[0].mxu0
    %v620 = vadd.f32 0.0, %v619
    %v621 = vpop.f32.mrb[0].mxu0
    %v622 = vpop.f32.mrb[0].mxu0
    %v623 = vadd.f32 0.0, %v622
    %v624 = vpop.f32.mrb[0].mxu0
    %625 = vmatprep.mubr.bf16.mxu0 0
    %626 = vmatmul.mubr.bf16.gmra.mrb[0].mxu0 %v195
    %v627 = vpop.f32.mrb[0].mxu0
    %v628 = vadd.f32 0.0, %v627
    %v629 = vpop.f32.mrb[0].mxu0
    %v630 = vpop.f32.mrb[0].mxu0
    %v631 = vadd.f32 0.0, %v630
    %v632 = vpop.f32.mrb[0].mxu0
    %633 = vmatprep.mubr.bf16.mxu0 0
    %634 = vmatmul.mubr.bf16.gmra.mrb[0].mxu0 %v198
    %v635 = vpop.f32.mrb[0].mxu0
    %v636 = vadd.f32 0.0, %v635
    %v637 = vpop.f32.mrb[0].mxu0
    %v638 = vpop.f32.mrb[0].mxu0
    %v639 = vadd.f32 0.0, %v638
    %v640 = vpop.f32.mrb[0].mxu0
    %641 = vmatprep.mubr.bf16.mxu0 0
    %642 = vmatmul.mubr.bf16.gmra.mrb[0].mxu0 %v201
    %v643 = vpop.f32.mrb[0].mxu0
    %v644 = vadd.f32 0.0, %v643
    %v645 = vpop.f32.mrb[0].mxu0
    %v646 = vpop.f32.mrb[0].mxu0
    %v647 = vadd.f32 0.0, %v646
    %v648 = vpop.f32.mrb[0].mxu0
    %649 = vmatprep.mubr.bf16.mxu0 0
    %650 = vmatmul.mubr.bf16.gmra.mrb[0].mxu0 %v204
    %v651 = vpop.f32.mrb[0].mxu0
    %v652 = vadd.f32 0.0, %v651
    %v653 = vpop.f32.mrb[0].mxu0
    %v654 = vpop.f32.mrb[0].mxu0
    %v655 = vadd.f32 0.0, %v654
    %v656 = vpop.f32.mrb[0].mxu0
    %657 = vmatprep.mubr.bf16.mxu0 0
    %658 = vmatmul.mubr.bf16.gmra.mrb[0].mxu0 %v207
    %v659 = vpop.f32.mrb[0].mxu0
    %v660 = vadd.f32 0.0, %v659
    %v661 = vpop.f32.mrb[0].mxu0
    %v662 = vpop.f32.mrb[0].mxu0
    %v663 = vadd.f32 0.0, %v662
    %v664 = vpop.f32.mrb[0].mxu0
    %665 = vmatprep.mubr.bf16.mxu0 0
    %666 = vmatmul.mubr.bf16.gmra.mrb[0].mxu0 %v210
    %v667 = vpop.f32.mrb[0].mxu0
    %v668 = vadd.f32 0.0, %v667
    %v669 = vpop.f32.mrb[0].mxu0
    %v670 = vpop.f32.mrb[0].mxu0
    %v671 = vadd.f32 0.0, %v670
    %v672 = vpop.f32.mrb[0].mxu0
    %673 = vmatprep.mubr.bf16.mxu0 0
    %674 = vmatmul.mubr.bf16.gmra.mrb[0].mxu0 %v583
    %v675 = vpop.f32.mrb[0].mxu0
    %v676 = vadd.f32 0.0, %v675
    %v677 = vpop.f32.mrb[0].mxu0
    %v678 = vpop.f32.mrb[0].mxu0
    %v679 = vadd.f32 0.0, %v678
    %v680 = vpop.f32.mrb[0].mxu0
    %681 = vdwg.mxu0
    %v682 = vadd.f32 %v556, %v620
    %v683 = vadd.f32 %v557, %v623
    %v684 = vadd.f32 %v558, %v628
    %v685 = vadd.f32 %v559, %v631
    %v686 = vadd.f32 %v560, %v636
    %v687 = vadd.f32 %v561, %v639
    %v688 = vadd.f32 %v562, %v644
    %v689 = vadd.f32 %v563, %v647
    %v690 = vadd.f32 %v564, %v652
    %v691 = vadd.f32 %v565, %v655
    %v692 = vadd.f32 %v566, %v660
    %v693 = vadd.f32 %v567, %v663
    %v694 = vadd.f32 %v568, %v668
    %v695 = vadd.f32 %v569, %v671
    %v696 = vadd.f32 %v570, %v676
    %v697 = vadd.f32 %v571, %v679
    %s698 = scalar_lea.vmem %s1, 32
    %v699 = vld [vmem:[%s698] sm:$0xf]
    %v700 = vld [vmem:[%s698 + $0x4] sm:$0xf]
    %v703 = vunpack.c.l.b16 %v699
    %v704 = vunpack.c.l.b16 %v700
    %v705 = vpack.c.b16 %v704, %v703
    %707 = vmatprep.subr.bf16.mxu0 0
    %708 = vmatpush1.bf16.msra.mxu0 %v705
    %709 = vmatprep.subr.bf16.mxu0 0
    %710 = vmatpush1.bf16.msra.mxu0 0
    %711 = vmatprep.subr.bf16.mxu0 0
    %712 = vmatpush1.bf16.msra.mxu0 0
    %713 = vmatprep.subr.bf16.mxu0 0
    %714 = vmatpush1.bf16.msra.mxu0 0
    %715 = vmatprep.subr.bf16.mxu0 0
    %716 = vmatpush1.bf16.msra.mxu0 0
    %717 = vmatprep.subr.bf16.mxu0 0
    %718 = vmatpush1.bf16.msra.mxu0 0
    %719 = vmatprep.subr.bf16.mxu0 0
    %720 = vmatpush1.bf16.msra.mxu0 0
    %721 = vmatprep.subr.bf16.mxu0 0
    %722 = vmatpush1.bf16.msra.mxu0 0
    %723 = vmatprep.subr.bf16.mxu0 0
    %724 = vmatpush1.bf16.msra.mxu0 0
    %725 = vmatprep.subr.bf16.mxu0 0
    %726 = vmatpush1.bf16.msra.mxu0 0
    %727 = vmatprep.subr.bf16.mxu0 0
    %728 = vmatpush1.bf16.msra.mxu0 0
    %729 = vmatprep.subr.bf16.mxu0 0
    %730 = vmatpush1.bf16.msra.mxu0 0
    %731 = vmatprep.subr.bf16.mxu0 0
    %732 = vmatpush1.bf16.msra.mxu0 0
    %733 = vmatprep.subr.bf16.mxu0 0
    %734 = vmatpush1.bf16.msra.mxu0 0
    %735 = vmatprep.subr.bf16.mxu0 0
    %736 = vmatpush1.bf16.msra.mxu0 0
    %737 = vmatprep.subr.bf16.mxu0 0
    %738 = vmatpush1.bf16.msra.mxu0 0
    %739 = vmatprep.mubr.bf16.mxu0 0
    %740 = vmatmul.mubr.bf16.gmra.mrb[0].mxu0 %v330
    %v741 = vpop.f32.mrb[0].mxu0
    %v742 = vadd.f32 0.0, %v741
    %v743 = vpop.f32.mrb[0].mxu0
    %v744 = vpop.f32.mrb[0].mxu0
    %v745 = vadd.f32 0.0, %v744
    %v746 = vpop.f32.mrb[0].mxu0
    %747 = vmatprep.mubr.bf16.mxu0 0
    %748 = vmatmul.mubr.bf16.gmra.mrb[0].mxu0 %v333
    %v749 = vpop.f32.mrb[0].mxu0
    %v750 = vadd.f32 0.0, %v749
    %v751 = vpop.f32.mrb[0].mxu0
    %v752 = vpop.f32.mrb[0].mxu0
    %v753 = vadd.f32 0.0, %v752
    %v754 = vpop.f32.mrb[0].mxu0
    %755 = vmatprep.mubr.bf16.mxu0 0
    %756 = vmatmul.mubr.bf16.gmra.mrb[0].mxu0 %v336
    %v757 = vpop.f32.mrb[0].mxu0
    %v758 = vadd.f32 0.0, %v757
    %v759 = vpop.f32.mrb[0].mxu0
    %v760 = vpop.f32.mrb[0].mxu0
    %v761 = vadd.f32 0.0, %v760
    %v762 = vpop.f32.mrb[0].mxu0
    %763 = vmatprep.mubr.bf16.mxu0 0
    %764 = vmatmul.mubr.bf16.gmra.mrb[0].mxu0 %v339
    %v765 = vpop.f32.mrb[0].mxu0
    %v766 = vadd.f32 0.0, %v765
    %v767 = vpop.f32.mrb[0].mxu0
    %v768 = vpop.f32.mrb[0].mxu0
    %v769 = vadd.f32 0.0, %v768
    %v770 = vpop.f32.mrb[0].mxu0
    %771 = vmatprep.mubr.bf16.mxu0 0
    %772 = vmatmul.mubr.bf16.gmra.mrb[0].mxu0 %v342
    %v773 = vpop.f32.mrb[0].mxu0
    %v774 = vadd.f32 0.0, %v773
    %v775 = vpop.f32.mrb[0].mxu0
    %v776 = vpop.f32.mrb[0].mxu0
    %v777 = vadd.f32 0.0, %v776
    %v778 = vpop.f32.mrb[0].mxu0
    %779 = vmatprep.mubr.bf16.mxu0 0
    %780 = vmatmul.mubr.bf16.gmra.mrb[0].mxu0 %v345
    %v781 = vpop.f32.mrb[0].mxu0
    %v782 = vadd.f32 0.0, %v781
    %v783 = vpop.f32.mrb[0].mxu0
    %v784 = vpop.f32.mrb[0].mxu0
    %v785 = vadd.f32 0.0, %v784
    %v786 = vpop.f32.mrb[0].mxu0
    %787 = vmatprep.mubr.bf16.mxu0 0
    %788 = vmatmul.mubr.bf16.gmra.mrb[0].mxu0 %v457
    %v789 = vpop.f32.mrb[0].mxu0
    %v790 = vadd.f32 0.0, %v789
    %v791 = vpop.f32.mrb[0].mxu0
    %v792 = vpop.f32.mrb[0].mxu0
    %v793 = vadd.f32 0.0, %v792
    %v794 = vpop.f32.mrb[0].mxu0
    %795 = vmatprep.mubr.bf16.mxu0 0
    %796 = vmatmul.mubr.bf16.gmra.mrb[0].mxu0 %v324
    %v797 = vpop.f32.mrb[0].mxu0
    %v798 = vadd.f32 0.0, %v797
    %v799 = vpop.f32.mrb[0].mxu0
    %v800 = vpop.f32.mrb[0].mxu0
    %v801 = vadd.f32 0.0, %v800
    %v802 = vpop.f32.mrb[0].mxu0
    %803 = vdwg.mxu0
    %v804 = vadd.f32 %v682, %v742
    %v805 = vadd.f32 %v683, %v745
    %v806 = vadd.f32 %v684, %v750
    %v807 = vadd.f32 %v685, %v753
    %v808 = vadd.f32 %v686, %v758
    %v809 = vadd.f32 %v687, %v761
    %v810 = vadd.f32 %v688, %v766
    %v811 = vadd.f32 %v689, %v769
    %v812 = vadd.f32 %v690, %v774
    %v813 = vadd.f32 %v691, %v777
    %v814 = vadd.f32 %v692, %v782
    %v815 = vadd.f32 %v693, %v785
    %v816 = vadd.f32 %v694, %v790
    %v817 = vadd.f32 %v695, %v793
    %v818 = vadd.f32 %v696, %v798
    %v819 = vadd.f32 %v697, %v801
    %v820 = vld [vmem:[#allocation3] sm:$0x1]
    %v822 = vlaneseq
    %v823 = vshrl.u32 %v822, 7
    %v824 = vsub.s32 0, %v823
    %v825 = vrot.slane %v820, %v824
    %v827 = vadd.f32 %v804, %v825
    %v828 = vadd.f32 %v805, %v825
    %v829 = vadd.f32 %v806, %v825
    %v830 = vadd.f32 %v807, %v825
    %v831 = vadd.f32 %v808, %v825
    %v832 = vadd.f32 %v809, %v825
    %v833 = vadd.f32 %v810, %v825
    %v834 = vadd.f32 %v811, %v825
    %v835 = vadd.f32 %v812, %v825
    %v836 = vadd.f32 %v813, %v825
    %v837 = vadd.f32 %v814, %v825
    %v838 = vadd.f32 %v815, %v825
    %v839 = vadd.f32 %v816, %v825
    %v840 = vadd.f32 %v817, %v825
    %v841 = vadd.f32 %v818, %v825
    %v842 = vadd.f32 %v819, %v825
    %v843 = vmax.f32 %v827, 0.0
    %v844 = vmax.f32 %v828, 0.0
    %v845 = vmax.f32 %v829, 0.0
    %v846 = vmax.f32 %v830, 0.0
    %v847 = vmax.f32 %v831, 0.0
    %v848 = vmax.f32 %v832, 0.0
    %v849 = vmax.f32 %v833, 0.0
    %v850 = vmax.f32 %v834, 0.0
    %v851 = vmax.f32 %v835, 0.0
    %v852 = vmax.f32 %v836, 0.0
    %v853 = vmax.f32 %v837, 0.0
    %v854 = vmax.f32 %v838, 0.0
    %v855 = vmax.f32 %v839, 0.0
    %v856 = vmax.f32 %v840, 0.0
    %v857 = vmax.f32 %v841, 0.0
    %v858 = vmax.f32 %v842, 0.0
    %v859 = vmax.f32 %v843, %v844
    %v860 = vmax.f32 %v844, %v845
    %v861 = vmax.f32 %v845, %v846
    %v862 = vmax.f32 %v846, %v847
    %v863 = vmax.f32 %v847, %v848
    %v864 = vmax.f32 %v848, %v849
    %v865 = vmax.f32 %v849, %v850
    %v866 = vmax.f32 %v850, %v851
    %v867 = vmax.f32 %v851, %v852
    %v868 = vmax.f32 %v852, %v853
    %v869 = vmax.f32 %v853, %v854
    %v870 = vmax.f32 %v854, %v855
    %v871 = vmax.f32 %v855, %v856
    %v872 = vmax.f32 %v856, %v857
    %v873 = vmax.f32 %v859, %v845
    %v874 = vmax.f32 %v860, %v846
    %v875 = vmax.f32 %v861, %v847
    %v876 = vmax.f32 %v862, %v848
    %v877 = vmax.f32 %v863, %v849
    %v878 = vmax.f32 %v864, %v850
    %v879 = vmax.f32 %v865, %v851
    %v880 = vmax.f32 %v866, %v852
    %v881 = vmax.f32 %v867, %v853
    %v882 = vmax.f32 %v868, %v854
    %v883 = vmax.f32 %v869, %v855
    %v884 = vmax.f32 %v870, %v856
    %v885 = vmax.f32 %v871, %v857
    %v886 = vmax.f32 %v872, %v858
    %v887 = vpack.c.bf16 %v873, %v873
    %v888 = vpack.c.bf16 %v874, %v874
    %v889 = vpack.c.bf16 %v875, %v875
    %v890 = vpack.c.bf16 %v876, %v876
    %v891 = vpack.c.bf16 %v877, %v877
    %v892 = vpack.c.bf16 %v878, %v878
    %v893 = vpack.c.bf16 %v879, %v879
    %v894 = vpack.c.bf16 %v880, %v880
    %v895 = vpack.c.bf16 %v881, %v881
    %v896 = vpack.c.bf16 %v882, %v882
    %v897 = vpack.c.bf16 %v883, %v883
    %v898 = vpack.c.bf16 %v884, %v884
    %v899 = vpack.c.bf16 %v885, %v885
    %v900 = vpack.c.bf16 %v886, %v886
    %v901 = vld [vmem:[%s3] sm:$0xf]
    %s902 = scalar_lea.vmem %s3, 4
    %v903 = vld [vmem:[%s902] sm:$0xf]
    %v917 = vunpack.c.l.b16 %v887
    %v918 = vunpack.c.l.b16 %v888
    %v919 = vunpack.c.l.b16 %v889
    %v920 = vunpack.c.l.b16 %v890
    %v921 = vunpack.c.l.b16 %v891
    %v922 = vunpack.c.l.b16 %v892
    %v923 = vunpack.c.l.b16 %v893
    %v924 = vunpack.c.l.b16 %v894
    %v925 = vunpack.c.l.b16 %v895
    %v926 = vunpack.c.l.b16 %v896
    %v927 = vunpack.c.l.b16 %v897
    %v928 = vunpack.c.l.b16 %v898
    %v929 = vunpack.c.l.b16 %v899
    %v930 = vpack.c.b16 %v917, %v157
    %v931 = vpack.c.b16 %v919, %v918
    %v932 = vpack.c.b16 %v921, %v920
    %v933 = vpack.c.b16 %v923, %v922
    %v934 = vpack.c.b16 %v925, %v924
    %v935 = vpack.c.b16 %v927, %v926
    %v936 = vpack.c.b16 %v929, %v928
    %vm937 = vcmask 64512
    %v939 = vsel %vm937, %v930, 0
    %v942 = vsel %vm937, %v931, 0
    %v945 = vsel %vm937, %v932, 0
    %v948 = vsel %vm937, %v933, 0
    %v951 = vsel %vm937, %v934, 0
    %v954 = vsel %vm937, %v935, 0
    %v957 = vsel %vm937, %v936, 0
    %vm959 = vcmask 1043456
    %v961 = vsel %vm959, %v903, 0
    %963 = vmatprep.subr.bf16.mxu0 0
    %964 = vmatpush1.bf16.msra.mxu0 %v961
    %965 = vmatprep.subr.bf16.mxu0 0
    %966 = vmatpush1.bf16.msra.mxu0 0
    %967 = vmatprep.subr.bf16.mxu0 0
    %968 = vmatpush1.bf16.msra.mxu0 0
    %969 = vmatprep.subr.bf16.mxu0 0
    %970 = vmatpush1.bf16.msra.mxu0 0
    %971 = vmatprep.subr.bf16.mxu0 0
    %972 = vmatpush1.bf16.msra.mxu0 0
    %973 = vmatprep.subr.bf16.mxu0 0
    %974 = vmatpush1.bf16.msra.mxu0 0
    %975 = vmatprep.subr.bf16.mxu0 0
    %976 = vmatpush1.bf16.msra.mxu0 0
    %977 = vmatprep.subr.bf16.mxu0 0
    %978 = vmatpush1.bf16.msra.mxu0 0
    %979 = vmatprep.subr.bf16.mxu0 0
    %980 = vmatpush1.bf16.msra.mxu0 0
    %981 = vmatprep.subr.bf16.mxu0 0
    %982 = vmatpush1.bf16.msra.mxu0 0
    %983 = vmatprep.subr.bf16.mxu0 0
    %984 = vmatpush1.bf16.msra.mxu0 0
    %985 = vmatprep.subr.bf16.mxu0 0
    %986 = vmatpush1.bf16.msra.mxu0 0
    %987 = vmatprep.subr.bf16.mxu0 0
    %988 = vmatpush1.bf16.msra.mxu0 0
    %989 = vmatprep.subr.bf16.mxu0 0
    %990 = vmatpush1.bf16.msra.mxu0 0
    %991 = vmatprep.subr.bf16.mxu0 0
    %992 = vmatpush1.bf16.msra.mxu0 0
    %993 = vmatprep.subr.bf16.mxu0 0
    %994 = vmatpush1.bf16.msra.mxu0 0
    %995 = vmatprep.mubr.bf16.mxu0 0
    %996 = vmatmul.mubr.bf16.gmra.mrb[0].mxu0 %v939
    %v997 = vpop.f32.mrb[0].mxu0
    %v998 = vadd.f32 0.0, %v997
    %v999 = vpop.f32.mrb[0].mxu0
    %v1000 = vpop.f32.mrb[0].mxu0
    %v1001 = vadd.f32 0.0, %v1000
    %v1002 = vpop.f32.mrb[0].mxu0
    %1003 = vmatprep.mubr.bf16.mxu0 0
    %1004 = vmatmul.mubr.bf16.gmra.mrb[0].mxu0 %v942
    %v1005 = vpop.f32.mrb[0].mxu0
    %v1006 = vadd.f32 0.0, %v1005
    %v1007 = vpop.f32.mrb[0].mxu0
    %v1008 = vpop.f32.mrb[0].mxu0
    %v1009 = vadd.f32 0.0, %v1008
    %v1010 = vpop.f32.mrb[0].mxu0
    %1011 = vmatprep.mubr.bf16.mxu0 0
    %1012 = vmatmul.mubr.bf16.gmra.mrb[0].mxu0 %v945
    %v1013 = vpop.f32.mrb[0].mxu0
    %v1014 = vadd.f32 0.0, %v1013
    %v1015 = vpop.f32.mrb[0].mxu0
    %v1016 = vpop.f32.mrb[0].mxu0
    %v1017 = vadd.f32 0.0, %v1016
    %v1018 = vpop.f32.mrb[0].mxu0
    %1019 = vmatprep.mubr.bf16.mxu0 0
    %1020 = vmatmul.mubr.bf16.gmra.mrb[0].mxu0 %v948
    %v1021 = vpop.f32.mrb[0].mxu0
    %v1022 = vadd.f32 0.0, %v1021
    %v1023 = vpop.f32.mrb[0].mxu0
    %v1024 = vpop.f32.mrb[0].mxu0
    %v1025 = vadd.f32 0.0, %v1024
    %v1026 = vpop.f32.mrb[0].mxu0
    %1027 = vmatprep.mubr.bf16.mxu0 0
    %1028 = vmatmul.mubr.bf16.gmra.mrb[0].mxu0 %v951
    %v1029 = vpop.f32.mrb[0].mxu0
    %v1030 = vadd.f32 0.0, %v1029
    %v1031 = vpop.f32.mrb[0].mxu0
    %v1032 = vpop.f32.mrb[0].mxu0
    %v1033 = vadd.f32 0.0, %v1032
    %v1034 = vpop.f32.mrb[0].mxu0
    %1035 = vmatprep.mubr.bf16.mxu0 0
    %1036 = vmatmul.mubr.bf16.gmra.mrb[0].mxu0 %v954
    %v1037 = vpop.f32.mrb[0].mxu0
    %v1038 = vadd.f32 0.0, %v1037
    %v1039 = vpop.f32.mrb[0].mxu0
    %v1040 = vpop.f32.mrb[0].mxu0
    %v1041 = vadd.f32 0.0, %v1040
    %v1042 = vpop.f32.mrb[0].mxu0
    %1043 = vmatprep.mubr.bf16.mxu0 0
    %1044 = vmatmul.mubr.bf16.gmra.mrb[0].mxu0 %v957
    %v1045 = vpop.f32.mrb[0].mxu0
    %v1046 = vadd.f32 0.0, %v1045
    %v1047 = vpop.f32.mrb[0].mxu0
    %v1048 = vpop.f32.mrb[0].mxu0
    %v1049 = vadd.f32 0.0, %v1048
    %v1050 = vpop.f32.mrb[0].mxu0
    %1051 = vdwg.mxu0
    %v1052 = vpack.c.b16 %v918, %v917
    %v1053 = vpack.c.b16 %v920, %v919
    %v1054 = vpack.c.b16 %v922, %v921
    %v1055 = vpack.c.b16 %v924, %v923
    %v1056 = vpack.c.b16 %v926, %v925
    %v1057 = vpack.c.b16 %v928, %v927
    %v1058 = vsel %vm937, %v309, 0
    %v1061 = vsel %vm937, %v1052, 0
    %v1064 = vsel %vm937, %v1053, 0
    %v1067 = vsel %vm937, %v1054, 0
    %v1070 = vsel %vm937, %v1055, 0
    %v1073 = vsel %vm937, %v1056, 0
    %v1076 = vsel %vm937, %v1057, 0
    %v1079 = vsel %vm959, %v901, 0
    %1081 = vmatprep.subr.bf16.mxu0 0
    %1082 = vmatpush1.bf16.msra.mxu0 %v1079
    %1083 = vmatprep.subr.bf16.mxu0 0
    %1084 = vmatpush1.bf16.msra.mxu0 0
    %1085 = vmatprep.subr.bf16.mxu0 0
    %1086 = vmatpush1.bf16.msra.mxu0 0
    %1087 = vmatprep.subr.bf16.mxu0 0
    %1088 = vmatpush1.bf16.msra.mxu0 0
    %1089 = vmatprep.subr.bf16.mxu0 0
    %1090 = vmatpush1.bf16.msra.mxu0 0
    %1091 = vmatprep.subr.bf16.mxu0 0
    %1092 = vmatpush1.bf16.msra.mxu0 0
    %1093 = vmatprep.subr.bf16.mxu0 0
    %1094 = vmatpush1.bf16.msra.mxu0 0
    %1095 = vmatprep.subr.bf16.mxu0 0
    %1096 = vmatpush1.bf16.msra.mxu0 0
    %1097 = vmatprep.subr.bf16.mxu0 0
    %1098 = vmatpush1.bf16.msra.mxu0 0
    %1099 = vmatprep.subr.bf16.mxu0 0
    %1100 = vmatpush1.bf16.msra.mxu0 0
    %1101 = vmatprep.subr.bf16.mxu0 0
    %1102 = vmatpush1.bf16.msra.mxu0 0
    %1103 = vmatprep.subr.bf16.mxu0 0
    %1104 = vmatpush1.bf16.msra.mxu0 0
    %1105 = vmatprep.subr.bf16.mxu0 0
    %1106 = vmatpush1.bf16.msra.mxu0 0
    %1107 = vmatprep.subr.bf16.mxu0 0
    %1108 = vmatpush1.bf16.msra.mxu0 0
    %1109 = vmatprep.subr.bf16.mxu0 0
    %1110 = vmatpush1.bf16.msra.mxu0 0
    %1111 = vmatprep.subr.bf16.mxu0 0
    %1112 = vmatpush1.bf16.msra.mxu0 0
    %1113 = vmatprep.mubr.bf16.mxu0 0
    %1114 = vmatmul.mubr.bf16.gmra.mrb[0].mxu0 %v1058
    %v1115 = vpop.f32.mrb[0].mxu0
    %v1116 = vadd.f32 %v998, %v1115
    %v1117 = vpop.f32.mrb[0].mxu0
    %v1118 = vpop.f32.mrb[0].mxu0
    %v1119 = vadd.f32 %v1001, %v1118
    %v1120 = vpop.f32.mrb[0].mxu0
    %1121 = vmatprep.mubr.bf16.mxu0 0
    %1122 = vmatmul.mubr.bf16.gmra.mrb[0].mxu0 %v1061
    %v1123 = vpop.f32.mrb[0].mxu0
    %v1124 = vadd.f32 %v1006, %v1123
    %v1125 = vpop.f32.mrb[0].mxu0
    %v1126 = vpop.f32.mrb[0].mxu0
    %v1127 = vadd.f32 %v1009, %v1126
    %v1128 = vpop.f32.mrb[0].mxu0
    %1129 = vmatprep.mubr.bf16.mxu0 0
    %1130 = vmatmul.mubr.bf16.gmra.mrb[0].mxu0 %v1064
    %v1131 = vpop.f32.mrb[0].mxu0
    %v1132 = vadd.f32 %v1014, %v1131
    %v1133 = vpop.f32.mrb[0].mxu0
    %v1134 = vpop.f32.mrb[0].mxu0
    %v1135 = vadd.f32 %v1017, %v1134
    %v1136 = vpop.f32.mrb[0].mxu0
    %1137 = vmatprep.mubr.bf16.mxu0 0
    %1138 = vmatmul.mubr.bf16.gmra.mrb[0].mxu0 %v1067
    %v1139 = vpop.f32.mrb[0].mxu0
    %v1140 = vadd.f32 %v1022, %v1139
    %v1141 = vpop.f32.mrb[0].mxu0
    %v1142 = vpop.f32.mrb[0].mxu0
    %v1143 = vadd.f32 %v1025, %v1142
    %v1144 = vpop.f32.mrb[0].mxu0
    %1145 = vmatprep.mubr.bf16.mxu0 0
    %1146 = vmatmul.mubr.bf16.gmra.mrb[0].mxu0 %v1070
    %v1147 = vpop.f32.mrb[0].mxu0
    %v1148 = vadd.f32 %v1030, %v1147
    %v1149 = vpop.f32.mrb[0].mxu0
    %v1150 = vpop.f32.mrb[0].mxu0
    %v1151 = vadd.f32 %v1033, %v1150
    %v1152 = vpop.f32.mrb[0].mxu0
    %1153 = vmatprep.mubr.bf16.mxu0 0
    %1154 = vmatmul.mubr.bf16.gmra.mrb[0].mxu0 %v1073
    %v1155 = vpop.f32.mrb[0].mxu0
    %v1156 = vadd.f32 %v1038, %v1155
    %v1157 = vpop.f32.mrb[0].mxu0
    %v1158 = vpop.f32.mrb[0].mxu0
    %v1159 = vadd.f32 %v1041, %v1158
    %v1160 = vpop.f32.mrb[0].mxu0
    %1161 = vmatprep.mubr.bf16.mxu0 0
    %1162 = vmatmul.mubr.bf16.gmra.mrb[0].mxu0 %v1076
    %v1163 = vpop.f32.mrb[0].mxu0
    %v1164 = vadd.f32 %v1046, %v1163
    %v1165 = vpop.f32.mrb[0].mxu0
    %v1166 = vpop.f32.mrb[0].mxu0
    %v1167 = vadd.f32 %v1049, %v1166
    %v1168 = vpop.f32.mrb[0].mxu0
    %1169 = vdwg.mxu0
    %s1170 = scalar_lea.vmem %s3, 8
    %v1171 = vld [vmem:[%s1170] sm:$0xf]
    %v1173 = vunpack.c.l.b16 %v900
    %v1174 = vpack.c.b16 %v1173, %v929
    %v1176 = vsel %vm937, %v1174, 0
    %v1179 = vsel %vm959, %v1171, 0
    %1181 = vmatprep.subr.bf16.mxu0 0
    %1182 = vmatpush1.bf16.msra.mxu0 %v1179
    %1183 = vmatprep.subr.bf16.mxu0 0
    %1184 = vmatpush1.bf16.msra.mxu0 0
    %1185 = vmatprep.subr.bf16.mxu0 0
    %1186 = vmatpush1.bf16.msra.mxu0 0
    %1187 = vmatprep.subr.bf16.mxu0 0
    %1188 = vmatpush1.bf16.msra.mxu0 0
    %1189 = vmatprep.subr.bf16.mxu0 0
    %1190 = vmatpush1.bf16.msra.mxu0 0
    %1191 = vmatprep.subr.bf16.mxu0 0
    %1192 = vmatpush1.bf16.msra.mxu0 0
    %1193 = vmatprep.subr.bf16.mxu0 0
    %1194 = vmatpush1.bf16.msra.mxu0 0
    %1195 = vmatprep.subr.bf16.mxu0 0
    %1196 = vmatpush1.bf16.msra.mxu0 0
    %1197 = vmatprep.subr.bf16.mxu0 0
    %1198 = vmatpush1.bf16.msra.mxu0 0
    %1199 = vmatprep.subr.bf16.mxu0 0
    %1200 = vmatpush1.bf16.msra.mxu0 0
    %1201 = vmatprep.subr.bf16.mxu0 0
    %1202 = vmatpush1.bf16.msra.mxu0 0
    %1203 = vmatprep.subr.bf16.mxu0 0
    %1204 = vmatpush1.bf16.msra.mxu0 0
    %1205 = vmatprep.subr.bf16.mxu0 0
    %1206 = vmatpush1.bf16.msra.mxu0 0
    %1207 = vmatprep.subr.bf16.mxu0 0
    %1208 = vmatpush1.bf16.msra.mxu0 0
    %1209 = vmatprep.subr.bf16.mxu0 0
    %1210 = vmatpush1.bf16.msra.mxu0 0
    %1211 = vmatprep.subr.bf16.mxu0 0
    %1212 = vmatpush1.bf16.msra.mxu0 0
    %1213 = vmatprep.mubr.bf16.mxu0 0
    %1214 = vmatmul.mubr.bf16.gmra.mrb[0].mxu0 %v1061
    %v1215 = vpop.f32.mrb[0].mxu0
    %v1216 = vadd.f32 0.0, %v1215
    %v1217 = vpop.f32.mrb[0].mxu0
    %v1218 = vpop.f32.mrb[0].mxu0
    %v1219 = vadd.f32 0.0, %v1218
    %v1220 = vpop.f32.mrb[0].mxu0
    %1221 = vmatprep.mubr.bf16.mxu0 0
    %1222 = vmatmul.mubr.bf16.gmra.mrb[0].mxu0 %v1064
    %v1223 = vpop.f32.mrb[0].mxu0
    %v1224 = vadd.f32 0.0, %v1223
    %v1225 = vpop.f32.mrb[0].mxu0
    %v1226 = vpop.f32.mrb[0].mxu0
    %v1227 = vadd.f32 0.0, %v1226
    %v1228 = vpop.f32.mrb[0].mxu0
    %1229 = vmatprep.mubr.bf16.mxu0 0
    %1230 = vmatmul.mubr.bf16.gmra.mrb[0].mxu0 %v1067
    %v1231 = vpop.f32.mrb[0].mxu0
    %v1232 = vadd.f32 0.0, %v1231
    %v1233 = vpop.f32.mrb[0].mxu0
    %v1234 = vpop.f32.mrb[0].mxu0
    %v1235 = vadd.f32 0.0, %v1234
    %v1236 = vpop.f32.mrb[0].mxu0
    %1237 = vmatprep.mubr.bf16.mxu0 0
    %1238 = vmatmul.mubr.bf16.gmra.mrb[0].mxu0 %v1070
    %v1239 = vpop.f32.mrb[0].mxu0
    %v1240 = vadd.f32 0.0, %v1239
    %v1241 = vpop.f32.mrb[0].mxu0
    %v1242 = vpop.f32.mrb[0].mxu0
    %v1243 = vadd.f32 0.0, %v1242
    %v1244 = vpop.f32.mrb[0].mxu0
    %1245 = vmatprep.mubr.bf16.mxu0 0
    %1246 = vmatmul.mubr.bf16.gmra.mrb[0].mxu0 %v1073
    %v1247 = vpop.f32.mrb[0].mxu0
    %v1248 = vadd.f32 0.0, %v1247
    %v1249 = vpop.f32.mrb[0].mxu0
    %v1250 = vpop.f32.mrb[0].mxu0
    %v1251 = vadd.f32 0.0, %v1250
    %v1252 = vpop.f32.mrb[0].mxu0
    %1253 = vmatprep.mubr.bf16.mxu0 0
    %1254 = vmatmul.mubr.bf16.gmra.mrb[0].mxu0 %v1076
    %v1255 = vpop.f32.mrb[0].mxu0
    %v1256 = vadd.f32 0.0, %v1255
    %v1257 = vpop.f32.mrb[0].mxu0
    %v1258 = vpop.f32.mrb[0].mxu0
    %v1259 = vadd.f32 0.0, %v1258
    %v1260 = vpop.f32.mrb[0].mxu0
    %1261 = vmatprep.mubr.bf16.mxu0 0
    %1262 = vmatmul.mubr.bf16.gmra.mrb[0].mxu0 %v1176
    %v1263 = vpop.f32.mrb[0].mxu0
    %v1264 = vadd.f32 0.0, %v1263
    %v1265 = vpop.f32.mrb[0].mxu0
    %v1266 = vpop.f32.mrb[0].mxu0
    %v1267 = vadd.f32 0.0, %v1266
    %v1268 = vpop.f32.mrb[0].mxu0
    %1269 = vdwg.mxu0
    %v1270 = vadd.f32 %v1116, %v1216
    %v1271 = vadd.f32 %v1119, %v1219
    %v1272 = vadd.f32 %v1124, %v1224
    %v1273 = vadd.f32 %v1127, %v1227
    %v1274 = vadd.f32 %v1132, %v1232
    %v1275 = vadd.f32 %v1135, %v1235
    %v1276 = vadd.f32 %v1140, %v1240
    %v1277 = vadd.f32 %v1143, %v1243
    %v1278 = vadd.f32 %v1148, %v1248
    %v1279 = vadd.f32 %v1151, %v1251
    %v1280 = vadd.f32 %v1156, %v1256
    %v1281 = vadd.f32 %v1159, %v1259
    %v1282 = vadd.f32 %v1164, %v1264
    %v1283 = vadd.f32 %v1167, %v1267
    %s1284 = scalar_lea.vmem %s3, 12
    %v1285 = vld [vmem:[%s1284] sm:$0xf]
    %v1286 = vpack.c.b16 %v157, %v1173
    %v1288 = vsel %vm937, %v1286, 0
    %v1291 = vsel %vm959, %v1285, 0
    %1293 = vmatprep.subr.bf16.mxu0 0
    %1294 = vmatpush1.bf16.msra.mxu0 %v1291
    %1295 = vmatprep.subr.bf16.mxu0 0
    %1296 = vmatpush1.bf16.msra.mxu0 0
    %1297 = vmatprep.subr.bf16.mxu0 0
    %1298 = vmatpush1.bf16.msra.mxu0 0
    %1299 = vmatprep.subr.bf16.mxu0 0
    %1300 = vmatpush1.bf16.msra.mxu0 0
    %1301 = vmatprep.subr.bf16.mxu0 0
    %1302 = vmatpush1.bf16.msra.mxu0 0
    %1303 = vmatprep.subr.bf16.mxu0 0
    %1304 = vmatpush1.bf16.msra.mxu0 0
    %1305 = vmatprep.subr.bf16.mxu0 0
    %1306 = vmatpush1.bf16.msra.mxu0 0
    %1307 = vmatprep.subr.bf16.mxu0 0
    %1308 = vmatpush1.bf16.msra.mxu0 0
    %1309 = vmatprep.subr.bf16.mxu0 0
    %1310 = vmatpush1.bf16.msra.mxu0 0
    %1311 = vmatprep.subr.bf16.mxu0 0
    %1312 = vmatpush1.bf16.msra.mxu0 0
    %1313 = vmatprep.subr.bf16.mxu0 0
    %1314 = vmatpush1.bf16.msra.mxu0 0
    %1315 = vmatprep.subr.bf16.mxu0 0
    %1316 = vmatpush1.bf16.msra.mxu0 0
    %1317 = vmatprep.subr.bf16.mxu0 0
    %1318 = vmatpush1.bf16.msra.mxu0 0
    %1319 = vmatprep.subr.bf16.mxu0 0
    %1320 = vmatpush1.bf16.msra.mxu0 0
    %1321 = vmatprep.subr.bf16.mxu0 0
    %1322 = vmatpush1.bf16.msra.mxu0 0
    %1323 = vmatprep.subr.bf16.mxu0 0
    %1324 = vmatpush1.bf16.msra.mxu0 0
    %1325 = vmatprep.mubr.bf16.mxu0 0
    %1326 = vmatmul.mubr.bf16.gmra.mrb[0].mxu0 %v942
    %v1327 = vpop.f32.mrb[0].mxu0
    %v1328 = vadd.f32 0.0, %v1327
    %v1329 = vpop.f32.mrb[0].mxu0
    %v1330 = vpop.f32.mrb[0].mxu0
    %v1331 = vadd.f32 0.0, %v1330
    %v1332 = vpop.f32.mrb[0].mxu0
    %1333 = vmatprep.mubr.bf16.mxu0 0
    %1334 = vmatmul.mubr.bf16.gmra.mrb[0].mxu0 %v945
    %v1335 = vpop.f32.mrb[0].mxu0
    %v1336 = vadd.f32 0.0, %v1335
    %v1337 = vpop.f32.mrb[0].mxu0
    %v1338 = vpop.f32.mrb[0].mxu0
    %v1339 = vadd.f32 0.0, %v1338
    %v1340 = vpop.f32.mrb[0].mxu0
    %1341 = vmatprep.mubr.bf16.mxu0 0
    %1342 = vmatmul.mubr.bf16.gmra.mrb[0].mxu0 %v948
    %v1343 = vpop.f32.mrb[0].mxu0
    %v1344 = vadd.f32 0.0, %v1343
    %v1345 = vpop.f32.mrb[0].mxu0
    %v1346 = vpop.f32.mrb[0].mxu0
    %v1347 = vadd.f32 0.0, %v1346
    %v1348 = vpop.f32.mrb[0].mxu0
    %1349 = vmatprep.mubr.bf16.mxu0 0
    %1350 = vmatmul.mubr.bf16.gmra.mrb[0].mxu0 %v951
    %v1351 = vpop.f32.mrb[0].mxu0
    %v1352 = vadd.f32 0.0, %v1351
    %v1353 = vpop.f32.mrb[0].mxu0
    %v1354 = vpop.f32.mrb[0].mxu0
    %v1355 = vadd.f32 0.0, %v1354
    %v1356 = vpop.f32.mrb[0].mxu0
    %1357 = vmatprep.mubr.bf16.mxu0 0
    %1358 = vmatmul.mubr.bf16.gmra.mrb[0].mxu0 %v954
    %v1359 = vpop.f32.mrb[0].mxu0
    %v1360 = vadd.f32 0.0, %v1359
    %v1361 = vpop.f32.mrb[0].mxu0
    %v1362 = vpop.f32.mrb[0].mxu0
    %v1363 = vadd.f32 0.0, %v1362
    %v1364 = vpop.f32.mrb[0].mxu0
    %1365 = vmatprep.mubr.bf16.mxu0 0
    %1366 = vmatmul.mubr.bf16.gmra.mrb[0].mxu0 %v957
    %v1367 = vpop.f32.mrb[0].mxu0
    %v1368 = vadd.f32 0.0, %v1367
    %v1369 = vpop.f32.mrb[0].mxu0
    %v1370 = vpop.f32.mrb[0].mxu0
    %v1371 = vadd.f32 0.0, %v1370
    %v1372 = vpop.f32.mrb[0].mxu0
    %1373 = vmatprep.mubr.bf16.mxu0 0
    %1374 = vmatmul.mubr.bf16.gmra.mrb[0].mxu0 %v1288
    %v1375 = vpop.f32.mrb[0].mxu0
    %v1376 = vadd.f32 0.0, %v1375
    %v1377 = vpop.f32.mrb[0].mxu0
    %v1378 = vpop.f32.mrb[0].mxu0
    %v1379 = vadd.f32 0.0, %v1378
    %v1380 = vpop.f32.mrb[0].mxu0
    %1381 = vdwg.mxu0
    %v1382 = vadd.f32 %v1270, %v1328
    %v1383 = vadd.f32 %v1271, %v1331
    %v1384 = vadd.f32 %v1272, %v1336
    %v1385 = vadd.f32 %v1273, %v1339
    %v1386 = vadd.f32 %v1274, %v1344
    %v1387 = vadd.f32 %v1275, %v1347
    %v1388 = vadd.f32 %v1276, %v1352
    %v1389 = vadd.f32 %v1277, %v1355
    %v1390 = vadd.f32 %v1278, %v1360
    %v1391 = vadd.f32 %v1279, %v1363
    %v1392 = vadd.f32 %v1280, %v1368
    %v1393 = vadd.f32 %v1281, %v1371
    %v1394 = vadd.f32 %v1282, %v1376
    %v1395 = vadd.f32 %v1283, %v1379
    %s1396 = scalar_lea.vmem %s3, 16
    %v1397 = vld [vmem:[%s1396] sm:$0xf]
    %v1399 = vsel %vm959, %v1397, 0
    %1401 = vmatprep.subr.bf16.mxu0 0
    %1402 = vmatpush1.bf16.msra.mxu0 %v1399
    %1403 = vmatprep.subr.bf16.mxu0 0
    %1404 = vmatpush1.bf16.msra.mxu0 0
    %1405 = vmatprep.subr.bf16.mxu0 0
    %1406 = vmatpush1.bf16.msra.mxu0 0
    %1407 = vmatprep.subr.bf16.mxu0 0
    %1408 = vmatpush1.bf16.msra.mxu0 0
    %1409 = vmatprep.subr.bf16.mxu0 0
    %1410 = vmatpush1.bf16.msra.mxu0 0
    %1411 = vmatprep.subr.bf16.mxu0 0
    %1412 = vmatpush1.bf16.msra.mxu0 0
    %1413 = vmatprep.subr.bf16.mxu0 0
    %1414 = vmatpush1.bf16.msra.mxu0 0
    %1415 = vmatprep.subr.bf16.mxu0 0
    %1416 = vmatpush1.bf16.msra.mxu0 0
    %1417 = vmatprep.subr.bf16.mxu0 0
    %1418 = vmatpush1.bf16.msra.mxu0 0
    %1419 = vmatprep.subr.bf16.mxu0 0
    %1420 = vmatpush1.bf16.msra.mxu0 0
    %1421 = vmatprep.subr.bf16.mxu0 0
    %1422 = vmatpush1.bf16.msra.mxu0 0
    %1423 = vmatprep.subr.bf16.mxu0 0
    %1424 = vmatpush1.bf16.msra.mxu0 0
    %1425 = vmatprep.subr.bf16.mxu0 0
    %1426 = vmatpush1.bf16.msra.mxu0 0
    %1427 = vmatprep.subr.bf16.mxu0 0
    %1428 = vmatpush1.bf16.msra.mxu0 0
    %1429 = vmatprep.subr.bf16.mxu0 0
    %1430 = vmatpush1.bf16.msra.mxu0 0
    %1431 = vmatprep.subr.bf16.mxu0 0
    %1432 = vmatpush1.bf16.msra.mxu0 0
    %1433 = vmatprep.mubr.bf16.mxu0 0
    %1434 = vmatmul.mubr.bf16.gmra.mrb[0].mxu0 %v1064
    %v1435 = vpop.f32.mrb[0].mxu0
    %v1436 = vadd.f32 0.0, %v1435
    %v1437 = vpop.f32.mrb[0].mxu0
    %v1438 = vpop.f32.mrb[0].mxu0
    %v1439 = vadd.f32 0.0, %v1438
    %v1440 = vpop.f32.mrb[0].mxu0
    %1441 = vmatprep.mubr.bf16.mxu0 0
    %1442 = vmatmul.mubr.bf16.gmra.mrb[0].mxu0 %v1067
    %v1443 = vpop.f32.mrb[0].mxu0
    %v1444 = vadd.f32 0.0, %v1443
    %v1445 = vpop.f32.mrb[0].mxu0
    %v1446 = vpop.f32.mrb[0].mxu0
    %v1447 = vadd.f32 0.0, %v1446
    %v1448 = vpop.f32.mrb[0].mxu0
    %1449 = vmatprep.mubr.bf16.mxu0 0
    %1450 = vmatmul.mubr.bf16.gmra.mrb[0].mxu0 %v1070
    %v1451 = vpop.f32.mrb[0].mxu0
    %v1452 = vadd.f32 0.0, %v1451
    %v1453 = vpop.f32.mrb[0].mxu0
    %v1454 = vpop.f32.mrb[0].mxu0
    %v1455 = vadd.f32 0.0, %v1454
    %v1456 = vpop.f32.mrb[0].mxu0
    %1457 = vmatprep.mubr.bf16.mxu0 0
    %1458 = vmatmul.mubr.bf16.gmra.mrb[0].mxu0 %v1073
    %v1459 = vpop.f32.mrb[0].mxu0
    %v1460 = vadd.f32 0.0, %v1459
    %v1461 = vpop.f32.mrb[0].mxu0
    %v1462 = vpop.f32.mrb[0].mxu0
    %v1463 = vadd.f32 0.0, %v1462
    %v1464 = vpop.f32.mrb[0].mxu0
    %1465 = vmatprep.mubr.bf16.mxu0 0
    %1466 = vmatmul.mubr.bf16.gmra.mrb[0].mxu0 %v1076
    %v1467 = vpop.f32.mrb[0].mxu0
    %v1468 = vadd.f32 0.0, %v1467
    %v1469 = vpop.f32.mrb[0].mxu0
    %v1470 = vpop.f32.mrb[0].mxu0
    %v1471 = vadd.f32 0.0, %v1470
    %v1472 = vpop.f32.mrb[0].mxu0
    %1473 = vmatprep.mubr.bf16.mxu0 0
    %1474 = vmatmul.mubr.bf16.gmra.mrb[0].mxu0 %v1176
    %v1475 = vpop.f32.mrb[0].mxu0
    %v1476 = vadd.f32 0.0, %v1475
    %v1477 = vpop.f32.mrb[0].mxu0
    %v1478 = vpop.f32.mrb[0].mxu0
    %v1479 = vadd.f32 0.0, %v1478
    %v1480 = vpop.f32.mrb[0].mxu0
    %1481 = vmatprep.mubr.bf16.mxu0 0
    %1482 = vmatmul.mubr.bf16.gmra.mrb[0].mxu0 %v1058
    %v1483 = vpop.f32.mrb[0].mxu0
    %v1484 = vadd.f32 0.0, %v1483
    %v1485 = vpop.f32.mrb[0].mxu0
    %v1486 = vpop.f32.mrb[0].mxu0
    %v1487 = vadd.f32 0.0, %v1486
    %v1488 = vpop.f32.mrb[0].mxu0
    %1489 = vdwg.mxu0
    %v1490 = vadd.f32 %v1382, %v1436
    %v1491 = vadd.f32 %v1383, %v1439
    %v1492 = vadd.f32 %v1384, %v1444
    %v1493 = vadd.f32 %v1385, %v1447
    %v1494 = vadd.f32 %v1386, %v1452
    %v1495 = vadd.f32 %v1387, %v1455
    %v1496 = vadd.f32 %v1388, %v1460
    %v1497 = vadd.f32 %v1389, %v1463
    %v1498 = vadd.f32 %v1390, %v1468
    %v1499 = vadd.f32 %v1391, %v1471
    %v1500 = vadd.f32 %v1392, %v1476
    %v1501 = vadd.f32 %v1393, %v1479
    %v1502 = vadd.f32 %v1394, %v1484
    %v1503 = vadd.f32 %v1395, %v1487
    %v1504 = vld [vmem:[#allocation6] sm:$0x1]
    %v1506 = vlaneseq
    %v1507 = vshrl.u32 %v1506, 7
    %v1508 = vsub.s32 0, %v1507
    %v1509 = vrot.slane %v1504, %v1508
    %v1511 = vadd.f32 %v1490, %v1509
    %v1512 = vadd.f32 %v1491, %v1509
    %v1513 = vadd.f32 %v1492, %v1509
    %v1514 = vadd.f32 %v1493, %v1509
    %v1515 = vadd.f32 %v1494, %v1509
    %v1516 = vadd.f32 %v1495, %v1509
    %v1517 = vadd.f32 %v1496, %v1509
    %v1518 = vadd.f32 %v1497, %v1509
    %v1519 = vadd.f32 %v1498, %v1509
    %v1520 = vadd.f32 %v1499, %v1509
    %v1521 = vadd.f32 %v1500, %v1509
    %v1522 = vadd.f32 %v1501, %v1509
    %v1523 = vadd.f32 %v1502, %v1509
    %v1524 = vadd.f32 %v1503, %v1509
    %v1525 = vmax.f32 %v1511, 0.0
    %v1526 = vmax.f32 %v1512, 0.0
    %v1527 = vmax.f32 %v1513, 0.0
    %v1528 = vmax.f32 %v1514, 0.0
    %v1529 = vmax.f32 %v1515, 0.0
    %v1530 = vmax.f32 %v1516, 0.0
    %v1531 = vmax.f32 %v1517, 0.0
    %v1532 = vmax.f32 %v1518, 0.0
    %v1533 = vmax.f32 %v1519, 0.0
    %v1534 = vmax.f32 %v1520, 0.0
    %v1535 = vmax.f32 %v1521, 0.0
    %v1536 = vmax.f32 %v1522, 0.0
    %v1537 = vmax.f32 %v1523, 0.0
    %v1538 = vmax.f32 %v1524, 0.0
    %v1539 = vmax.f32 %v1525, %v1526
    %v1540 = vmax.f32 %v1526, %v1527
    %v1541 = vmax.f32 %v1527, %v1528
    %v1542 = vmax.f32 %v1528, %v1529
    %v1543 = vmax.f32 %v1529, %v1530
    %v1544 = vmax.f32 %v1530, %v1531
    %v1545 = vmax.f32 %v1531, %v1532
    %v1546 = vmax.f32 %v1532, %v1533
    %v1547 = vmax.f32 %v1533, %v1534
    %v1548 = vmax.f32 %v1534, %v1535
    %v1549 = vmax.f32 %v1535, %v1536
    %v1550 = vmax.f32 %v1536, %v1537
    %v1551 = vmax.f32 %v1539, %v1527
    %v1552 = vmax.f32 %v1540, %v1528
    %v1553 = vmax.f32 %v1541, %v1529
    %v1554 = vmax.f32 %v1542, %v1530
    %v1555 = vmax.f32 %v1543, %v1531
    %v1556 = vmax.f32 %v1544, %v1532
    %v1557 = vmax.f32 %v1545, %v1533
    %v1558 = vmax.f32 %v1546, %v1534
    %v1559 = vmax.f32 %v1547, %v1535
    %v1560 = vmax.f32 %v1548, %v1536
    %v1561 = vmax.f32 %v1549, %v1537
    %v1562 = vmax.f32 %v1550, %v1538
    %v1563 = vpack.c.bf16 %v1552, %v1551
    %v1564 = vpack.c.bf16 %v1554, %v1553
    %v1565 = vpack.c.bf16 %v1556, %v1555
    %v1566 = vpack.c.bf16 %v1558, %v1557
    %v1567 = vpack.c.bf16 %v1560, %v1559
    %v1568 = vpack.c.bf16 %v1562, %v1561
    %v1569 = vld [vmem:[#allocation8] sm:$0x3]
    %v1570 = vld [vmem:[#allocation9] sm:$0x1]
    %v1572 = vlaneseq
    %v1573 = vshrl.u32 %v1572, 7
    %v1574 = vsub.s32 0, %v1573
    %v1575 = vrot.slane %v1570, %v1574
    %vm1577 = vcmask 31744
    %v1579 = vsel %vm1577, %v1563, 0
    %v1582 = vsel %vm1577, %v1564, 0
    %v1585 = vsel %vm1577, %v1565, 0
    %v1588 = vsel %vm1577, %v1566, 0
    %v1591 = vsel %vm1577, %v1567, 0
    %v1594 = vsel %vm1577, %v1568, 0
    %vm1596 = vcmask 1041408
    %v1598 = vsel %vm1596, %v1569, 0
    %1600 = vmatprep.subr.bf16.mxu0 0
    %1601 = vmatpush1.bf16.msra.mxu0 %v1598
    %1602 = vmatprep.subr.bf16.mxu0 0
    %1603 = vmatpush1.bf16.msra.mxu0 0
    %1604 = vmatprep.subr.bf16.mxu0 0
    %1605 = vmatpush1.bf16.msra.mxu0 0
    %1606 = vmatprep.subr.bf16.mxu0 0
    %1607 = vmatpush1.bf16.msra.mxu0 0
    %1608 = vmatprep.subr.bf16.mxu0 0
    %1609 = vmatpush1.bf16.msra.mxu0 0
    %1610 = vmatprep.subr.bf16.mxu0 0
    %1611 = vmatpush1.bf16.msra.mxu0 0
    %1612 = vmatprep.subr.bf16.mxu0 0
    %1613 = vmatpush1.bf16.msra.mxu0 0
    %1614 = vmatprep.subr.bf16.mxu0 0
    %1615 = vmatpush1.bf16.msra.mxu0 0
    %1616 = vmatprep.subr.bf16.mxu0 0
    %1617 = vmatpush1.bf16.msra.mxu0 0
    %1618 = vmatprep.subr.bf16.mxu0 0
    %1619 = vmatpush1.bf16.msra.mxu0 0
    %1620 = vmatprep.subr.bf16.mxu0 0
    %1621 = vmatpush1.bf16.msra.mxu0 0
    %1622 = vmatprep.subr.bf16.mxu0 0
    %1623 = vmatpush1.bf16.msra.mxu0 0
    %1624 = vmatprep.subr.bf16.mxu0 0
    %1625 = vmatpush1.bf16.msra.mxu0 0
    %1626 = vmatprep.subr.bf16.mxu0 0
    %1627 = vmatpush1.bf16.msra.mxu0 0
    %1628 = vmatprep.subr.bf16.mxu0 0
    %1629 = vmatpush1.bf16.msra.mxu0 0
    %1630 = vmatprep.subr.bf16.mxu0 0
    %1631 = vmatpush1.bf16.msra.mxu0 0
    %1632 = vmatprep.mubr.bf16.mxu0 0
    %1633 = vmatmul.mubr.bf16.gmra.mrb[0].mxu0 %v1579
    %v1634 = vpop.f32.mrb[0].mxu0
    %v1635 = vadd.f32 %v1575, %v1634
    %v1636 = vpop.f32.mrb[0].mxu0
    %v1637 = vpop.f32.mrb[0].mxu0
    %v1638 = vadd.f32 %v1575, %v1637
    %v1639 = vpop.f32.mrb[0].mxu0
    %1640 = vmatprep.mubr.bf16.mxu0 0
    %1641 = vmatmul.mubr.bf16.gmra.mrb[0].mxu0 %v1582
    %v1642 = vpop.f32.mrb[0].mxu0
    %v1643 = vadd.f32 %v1575, %v1642
    %v1644 = vpop.f32.mrb[0].mxu0
    %v1645 = vpop.f32.mrb[0].mxu0
    %v1646 = vadd.f32 %v1575, %v1645
    %v1647 = vpop.f32.mrb[0].mxu0
    %1648 = vmatprep.mubr.bf16.mxu0 0
    %1649 = vmatmul.mubr.bf16.gmra.mrb[0].mxu0 %v1585
    %v1650 = vpop.f32.mrb[0].mxu0
    %v1651 = vadd.f32 %v1575, %v1650
    %v1652 = vpop.f32.mrb[0].mxu0
    %v1653 = vpop.f32.mrb[0].mxu0
    %v1654 = vadd.f32 %v1575, %v1653
    %v1655 = vpop.f32.mrb[0].mxu0
    %1656 = vmatprep.mubr.bf16.mxu0 0
    %1657 = vmatmul.mubr.bf16.gmra.mrb[0].mxu0 %v1588
    %v1658 = vpop.f32.mrb[0].mxu0
    %v1659 = vadd.f32 %v1575, %v1658
    %v1660 = vpop.f32.mrb[0].mxu0
    %v1661 = vpop.f32.mrb[0].mxu0
    %v1662 = vadd.f32 %v1575, %v1661
    %v1663 = vpop.f32.mrb[0].mxu0
    %1664 = vmatprep.mubr.bf16.mxu0 0
    %1665 = vmatmul.mubr.bf16.gmra.mrb[0].mxu0 %v1591
    %v1666 = vpop.f32.mrb[0].mxu0
    %v1667 = vadd.f32 %v1575, %v1666
    %v1668 = vpop.f32.mrb[0].mxu0
    %v1669 = vpop.f32.mrb[0].mxu0
    %v1670 = vadd.f32 %v1575, %v1669
    %v1671 = vpop.f32.mrb[0].mxu0
    %1672 = vmatprep.mubr.bf16.mxu0 0
    %1673 = vmatmul.mubr.bf16.gmra.mrb[0].mxu0 %v1594
    %v1674 = vpop.f32.mrb[0].mxu0
    %v1675 = vadd.f32 %v1575, %v1674
    %v1676 = vpop.f32.mrb[0].mxu0
    %v1677 = vpop.f32.mrb[0].mxu0
    %v1678 = vadd.f32 %v1575, %v1677
    %v1679 = vpop.f32.mrb[0].mxu0
    %1680 = vdwg.mxu0
    %1681 = vst [vmem:[#allocation2] sm:$0xff] %v1635
    %1682 = vst [vmem:[#allocation2 + $0x8] sm:$0xff] %v1638
    %1683 = vst [vmem:[#allocation2 + $0x10] sm:$0xff] %v1643
    %1684 = vst [vmem:[#allocation2 + $0x18] sm:$0xff] %v1646
    %1685 = vst [vmem:[#allocation2 + $0x20] sm:$0xff] %v1651
    %1686 = vst [vmem:[#allocation2 + $0x28] sm:$0xff] %v1654
    %1687 = vst [vmem:[#allocation2 + $0x30] sm:$0xff] %v1659
    %1688 = vst [vmem:[#allocation2 + $0x38] sm:$0xff] %v1662
    %1689 = vst [vmem:[#allocation2 + $0x40] sm:$0xff] %v1667
    %1690 = vst [vmem:[#allocation2 + $0x48] sm:$0xff] %v1670
    %1691 = vst [vmem:[#allocation2 + $0x50] sm:$0xff] %v1675
    %1692 = vst [vmem:[#allocation2 + $0x58] sm:$0xff] %v1678
    %v1693 = vld [vmem:[%s6] sm:$0xf]
    %v1694 = vld [vmem:[%s6 + $0x4] sm:$0xf]
    %v1695 = vld [vmem:[%s6 + $0x8] sm:$0xf]
    %v1696 = vld [vmem:[%s6 + $0xc] sm:$0xf]
    %v1697 = vld [vmem:[%s8] sm:$0xf]
    %v1698 = vld [vmem:[%s8 + $0x4] sm:$0xf]
    %v1699 = vld [vmem:[%s8 + $0x8] sm:$0xf]
    %v1700 = vld [vmem:[%s8 + $0xc] sm:$0xf]
    %v1701 = vld [vmem:[#allocation11] sm:$0xf]
    %v1702 = vld [vmem:[#allocation11 + $0x4] sm:$0xf]
    %v1703 = vld [vmem:[#allocation11 + $0x8] sm:$0xf]
    %v1704 = vld [vmem:[#allocation11 + $0xc] sm:$0xf]
    %v1705 = vld [vmem:[%s10] sm:$0x1]
    %v1707 = vlaneseq
    %v1708 = vshrl.u32 %v1707, 7
    %v1709 = vsub.s32 0, %v1708
    %v1710 = vrot.slane %v1705, %v1709
    %v1712 = vlaneseq
    %v1713 = vand.u32 %v1712, 127
    %vm1714 = vcmp.ge.s32.totalorder %v1713, 96
    %v1715 = vld [vmem:[#allocation2] sm:$0xff]
    %v1720 = vunpack.c.l.b16 %v1693
    %v1721 = vunpack.c.l.b16 %v1694
    %v1722 = vunpack.c.l.b16 %v1695
    %v1723 = vunpack.c.l.b16 %v1696
    %v1724 = vpack.c.b16 %v1721, %v1720
    %v1725 = vpack.c.b16 %v1723, %v1722
    %vm1728 = vcmask 261120
    %v1730 = vsel %vm1728, 0, 0
    %1732 = vmatprep.subr.bf16.mxu0 0
    %1733 = vmatpush1.bf16.msra.mxu0 %v1724
    %1734 = vmatprep.subr.bf16.mxu0 0
    %1735 = vmatpush1.bf16.msra.mxu0 %v1725
    %1736 = vmatprep.subr.bf16.mxu0 0
    %1737 = vmatpush1.bf16.msra.mxu0 0
    %1738 = vmatprep.subr.bf16.mxu0 0
    %1739 = vmatpush1.bf16.msra.mxu0 0
    %1740 = vmatprep.subr.bf16.mxu0 0
    %1741 = vmatpush1.bf16.msra.mxu0 0
    %1742 = vmatprep.subr.bf16.mxu0 0
    %1743 = vmatpush1.bf16.msra.mxu0 0
    %1744 = vmatprep.subr.bf16.mxu0 0
    %1745 = vmatpush1.bf16.msra.mxu0 0
    %1746 = vmatprep.subr.bf16.mxu0 0
    %1747 = vmatpush1.bf16.msra.mxu0 0
    %1748 = vmatprep.subr.bf16.mxu0 0
    %1749 = vmatpush1.bf16.msra.mxu0 0
    %1750 = vmatprep.subr.bf16.mxu0 0
    %1751 = vmatpush1.bf16.msra.mxu0 0
    %1752 = vmatprep.subr.bf16.mxu0 0
    %1753 = vmatpush1.bf16.msra.mxu0 0
    %1754 = vmatprep.subr.bf16.mxu0 0
    %1755 = vmatpush1.bf16.msra.mxu0 0
    %1756 = vmatprep.subr.bf16.mxu0 0
    %1757 = vmatpush1.bf16.msra.mxu0 0
    %1758 = vmatprep.subr.bf16.mxu0 0
    %1759 = vmatpush1.bf16.msra.mxu0 0
    %1760 = vmatprep.subr.bf16.mxu0 0
    %1761 = vmatpush1.bf16.msra.mxu0 0
    %1762 = vmatprep.subr.bf16.mxu0 0
    %1763 = vmatpush1.bf16.msra.mxu0 0
    %1764 = vmatprep.mubr.bf16.mxu0 0
    %1765 = vmatmul.mubr.bf16.gmra.mrb[0].mxu0 %v1730
    %v1766 = vpop.f32.mrb[0].mxu0
    %v1767 = vadd.f32 0.0, %v1766
    %v1768 = vpop.f32.mrb[0].mxu0
    %v1769 = vpop.f32.mrb[0].mxu0
    %v1770 = vpop.f32.mrb[0].mxu0
    %1771 = vdwg.mxu0
    %v1772 = vadd.f32 %v1715, %v1767
    %v1773 = vadd.f32 %v1772, %v1772
    %v1774 = vsel %vm1714, %v1773, %v1772
    %v1775 = vsub.f32 0.0, %v1774
    %v1776 = vmul.f32 %v1775, 1.442695
    %v1777 = vpow.pop %v1776
    %v1778 = vadd.f32 %v1777, 1.0
    %v1779 = vrcp.pop %v1778
    %v1780 = vadd.f32 %v1779, %v1779
    %v1781 = vsub.f32 %v1780, 1.0
    %v1782 = vsel %vm1714, %v1781, %v1779
    %1783 = vrot.lane.b32.xlu0 %v1782, 96
    %v1784 = vpop.permute.xlu0 %1783
    %1785 = vrot.lane.b32.xlu0 %v1782, 64
    %v1786 = vpop.permute.xlu0 %1785
    %v1787 = vmul.f32 %v1782, 0.0
    %v1788 = vmul.f32 %v1784, %v1786
    %v1789 = vadd.f32 %v1787, %v1788
    %v1790 = vtanh.pop %v1789
    %1791 = vrot.lane.b32.xlu0 %v1790, 96
    %v1792 = vpop.permute.xlu0 %1791
    %v1793 = vmul.f32 %v1782, %v1792
    %v1794 = vpack.c.bf16 %v1793, %v1793
    %v1799 = vunpack.c.l.b16 %v1697
    %v1800 = vunpack.c.l.b16 %v1698
    %v1801 = vunpack.c.l.b16 %v1699
    %v1802 = vunpack.c.l.b16 %v1700
    %v1803 = vpack.c.b16 %v1800, %v1799
    %v1804 = vpack.c.b16 %v1802, %v1801
    %v1808 = vsel %vm1728, %v1794, 0
    %1810 = vmatprep.subr.bf16.mxu0 0
    %1811 = vmatpush1.bf16.msra.mxu0 %v1803
    %1812 = vmatprep.subr.bf16.mxu0 0
    %1813 = vmatpush1.bf16.msra.mxu0 %v1804
    %1814 = vmatprep.subr.bf16.mxu0 0
    %1815 = vmatpush1.bf16.msra.mxu0 0
    %1816 = vmatprep.subr.bf16.mxu0 0
    %1817 = vmatpush1.bf16.msra.mxu0 0
    %1818 = vmatprep.subr.bf16.mxu0 0
    %1819 = vmatpush1.bf16.msra.mxu0 0
    %1820 = vmatprep.subr.bf16.mxu0 0
    %1821 = vmatpush1.bf16.msra.mxu0 0
    %1822 = vmatprep.subr.bf16.mxu0 0
    %1823 = vmatpush1.bf16.msra.mxu0 0
    %1824 = vmatprep.subr.bf16.mxu0 0
    %1825 = vmatpush1.bf16.msra.mxu0 0
    %1826 = vmatprep.subr.bf16.mxu0 0
    %1827 = vmatpush1.bf16.msra.mxu0 0
    %1828 = vmatprep.subr.bf16.mxu0 0
    %1829 = vmatpush1.bf16.msra.mxu0 0
    %1830 = vmatprep.subr.bf16.mxu0 0
    %1831 = vmatpush1.bf16.msra.mxu0 0
    %1832 = vmatprep.subr.bf16.mxu0 0
    %1833 = vmatpush1.bf16.msra.mxu0 0
    %1834 = vmatprep.subr.bf16.mxu0 0
    %1835 = vmatpush1.bf16.msra.mxu0 0
    %1836 = vmatprep.subr.bf16.mxu0 0
    %1837 = vmatpush1.bf16.msra.mxu0 0
    %1838 = vmatprep.subr.bf16.mxu0 0
    %1839 = vmatpush1.bf16.msra.mxu0 0
    %1840 = vmatprep.subr.bf16.mxu0 0
    %1841 = vmatpush1.bf16.msra.mxu0 0
    %1842 = vmatprep.mubr.bf16.mxu0 0
    %1843 = vmatmul.mubr.bf16.gmra.mrb[0].mxu0 %v1808
    %v1844 = vpop.f32.mrb[0].mxu0
    %v1845 = vadd.f32 0.0, %v1844
    %v1846 = vpop.f32.mrb[0].mxu0
    %v1847 = vpop.f32.mrb[0].mxu0
    %v1848 = vpop.f32.mrb[0].mxu0
    %1849 = vdwg.mxu0
    %v1850 = vadd.f32 %v1710, %v1845
    %v1855 = vunpack.c.l.b16 %v1701
    %v1856 = vunpack.c.l.b16 %v1702
    %v1857 = vunpack.c.l.b16 %v1703
    %v1858 = vunpack.c.l.b16 %v1704
    %v1859 = vpack.c.b16 %v1856, %v1855
    %v1860 = vpack.c.b16 %v1858, %v1857
    %1863 = vmatprep.subr.bf16.mxu0 0
    %1864 = vmatpush1.bf16.msra.mxu0 %v1859
    %1865 = vmatprep.subr.bf16.mxu0 0
    %1866 = vmatpush1.bf16.msra.mxu0 %v1860
    %1867 = vmatprep.subr.bf16.mxu0 0
    %1868 = vmatpush1.bf16.msra.mxu0 0
    %1869 = vmatprep.subr.bf16.mxu0 0
    %1870 = vmatpush1.bf16.msra.mxu0 0
    %1871 = vmatprep.subr.bf16.mxu0 0
    %1872 = vmatpush1.bf16.msra.mxu0 0
    %1873 = vmatprep.subr.bf16.mxu0 0
    %1874 = vmatpush1.bf16.msra.mxu0 0
    %1875 = vmatprep.subr.bf16.mxu0 0
    %1876 = vmatpush1.bf16.msra.mxu0 0
    %1877 = vmatprep.subr.bf16.mxu0 0
    %1878 = vmatpush1.bf16.msra.mxu0 0
    %1879 = vmatprep.subr.bf16.mxu0 0
    %1880 = vmatpush1.bf16.msra.mxu0 0
    %1881 = vmatprep.subr.bf16.mxu0 0
    %1882 = vmatpush1.bf16.msra.mxu0 0
    %1883 = vmatprep.subr.bf16.mxu0 0
    %1884 = vmatpush1.bf16.msra.mxu0 0
    %1885 = vmatprep.subr.bf16.mxu0 0
    %1886 = vmatpush1.bf16.msra.mxu0 0
    %1887 = vmatprep.subr.bf16.mxu0 0
    %1888 = vmatpush1.bf16.msra.mxu0 0
    %1889 = vmatprep.subr.bf16.mxu0 0
    %1890 = vmatpush1.bf16.msra.mxu0 0
    %1891 = vmatprep.subr.bf16.mxu0 0
    %1892 = vmatpush1.bf16.msra.mxu0 0
    %1893 = vmatprep.subr.bf16.mxu0 0
    %1894 = vmatpush1.bf16.msra.mxu0 0
    %1895 = vmatprep.mubr.bf16.mxu0 0
    %1896 = vmatmul.mubr.bf16.gmra.mrb[0].mxu0 %v1730
    %v1897 = vpop.f32.mrb[0].mxu0
    %v1898 = vadd.f32 0.0, %v1897
    %v1899 = vpop.f32.mrb[0].mxu0
    %v1900 = vpop.f32.mrb[0].mxu0
    %v1901 = vpop.f32.mrb[0].mxu0
    %1902 = vdwg.mxu0
    %v1903 = vadd.f32 %v1850, %v1898
    %v1904 = vadd.f32 %v1903, %v1903
    %v1905 = vsel %vm1714, %v1904, %v1903
    %v1906 = vsub.f32 0.0, %v1905
    %v1907 = vmul.f32 %v1906, 1.442695
    %v1908 = vpow.pop %v1907
    %v1909 = vadd.f32 %v1908, 1.0
    %v1910 = vrcp.pop %v1909
    %v1911 = vadd.f32 %v1910, %v1910
    %v1912 = vsub.f32 %v1911, 1.0
    %v1913 = vsel %vm1714, %v1912, %v1910
    %1914 = vrot.lane.b32.xlu0 %v1913, 96
    %v1915 = vpop.permute.xlu0 %1914
    %1916 = vrot.lane.b32.xlu0 %v1913, 64
    %v1917 = vpop.permute.xlu0 %1916
    %v1918 = vmul.f32 %v1913, 0.0
    %v1919 = vmul.f32 %v1915, %v1917
    %v1920 = vadd.f32 %v1918, %v1919
    %v1921 = vtanh.pop %v1920
    %1922 = vrot.lane.b32.xlu0 %v1921, 96
    %v1923 = vpop.permute.xlu0 %1922
    %v1924 = vmul.f32 %v1913, %v1923
    %s1925 = scalar_lea.vmem [#allocation2], 8
    %v1926 = vld [vmem:[%s1925] sm:$0xff]
    %1927 = vmatprep.subr.bf16.mxu0 0
    %1928 = vmatpush1.bf16.msra.mxu0 %v1724
    %1929 = vmatprep.subr.bf16.mxu0 0
    %1930 = vmatpush1.bf16.msra.mxu0 %v1725
    %1931 = vmatprep.subr.bf16.mxu0 0
    %1932 = vmatpush1.bf16.msra.mxu0 0
    %1933 = vmatprep.subr.bf16.mxu0 0
    %1934 = vmatpush1.bf16.msra.mxu0 0
    %1935 = vmatprep.subr.bf16.mxu0 0
    %1936 = vmatpush1.bf16.msra.mxu0 0
    %1937 = vmatprep.subr.bf16.mxu0 0
    %1938 = vmatpush1.bf16.msra.mxu0 0
    %1939 = vmatprep.subr.bf16.mxu0 0
    %1940 = vmatpush1.bf16.msra.mxu0 0
    %1941 = vmatprep.subr.bf16.mxu0 0
    %1942 = vmatpush1.bf16.msra.mxu0 0
    %1943 = vmatprep.subr.bf16.mxu0 0
    %1944 = vmatpush1.bf16.msra.mxu0 0
    %1945 = vmatprep.subr.bf16.mxu0 0
    %1946 = vmatpush1.bf16.msra.mxu0 0
    %1947 = vmatprep.subr.bf16.mxu0 0
    %1948 = vmatpush1.bf16.msra.mxu0 0
    %1949 = vmatprep.subr.bf16.mxu0 0
    %1950 = vmatpush1.bf16.msra.mxu0 0
    %1951 = vmatprep.subr.bf16.mxu0 0
    %1952 = vmatpush1.bf16.msra.mxu0 0
    %1953 = vmatprep.subr.bf16.mxu0 0
    %1954 = vmatpush1.bf16.msra.mxu0 0
    %1955 = vmatprep.subr.bf16.mxu0 0
    %1956 = vmatpush1.bf16.msra.mxu0 0
    %1957 = vmatprep.subr.bf16.mxu0 0
    %1958 = vmatpush1.bf16.msra.mxu0 0
    %1959 = vmatprep.mubr.bf16.mxu0 0
    %1960 = vmatmul.mubr.bf16.gmra.mrb[0].mxu0 %v1808
    %v1961 = vpop.f32.mrb[0].mxu0
    %v1962 = vadd.f32 0.0, %v1961
    %v1963 = vpop.f32.mrb[0].mxu0
    %v1964 = vpop.f32.mrb[0].mxu0
    %v1965 = vpop.f32.mrb[0].mxu0
    %1966 = vdwg.mxu0
    %v1967 = vadd.f32 %v1926, %v1962
    %v1968 = vadd.f32 %v1967, %v1967
    %v1969 = vsel %vm1714, %v1968, %v1967
    %v1970 = vsub.f32 0.0, %v1969
    %v1971 = vmul.f32 %v1970, 1.442695
    %v1972 = vpow.pop %v1971
    %v1973 = vadd.f32 %v1972, 1.0
    %v1974 = vrcp.pop %v1973
    %v1975 = vadd.f32 %v1974, %v1974
    %v1976 = vsub.f32 %v1975, 1.0
    %v1977 = vsel %vm1714, %v1976, %v1974
    %1978 = vrot.lane.b32.xlu0 %v1977, 96
    %v1979 = vpop.permute.xlu0 %1978
    %1980 = vrot.lane.b32.xlu0 %v1977, 64
    %v1981 = vpop.permute.xlu0 %1980
    %v1982 = vmul.f32 %v1977, %v1789
    %v1983 = vmul.f32 %v1979, %v1981
    %v1984 = vadd.f32 %v1982, %v1983
    %v1985 = vtanh.pop %v1984
    %1986 = vrot.lane.b32.xlu0 %v1985, 96
    %v1987 = vpop.permute.xlu0 %1986
    %v1988 = vmul.f32 %v1977, %v1987
    %v1989 = vpack.c.bf16 %v1988, %v1988
    %v1991 = vsel %vm1728, %v1989, 0
    %1993 = vmatprep.subr.bf16.mxu0 0
    %1994 = vmatpush1.bf16.msra.mxu0 %v1803
    %1995 = vmatprep.subr.bf16.mxu0 0
    %1996 = vmatpush1.bf16.msra.mxu0 %v1804
    %1997 = vmatprep.subr.bf16.mxu0 0
    %1998 = vmatpush1.bf16.msra.mxu0 0
    %1999 = vmatprep.subr.bf16.mxu0 0
    %2000 = vmatpush1.bf16.msra.mxu0 0
    %2001 = vmatprep.subr.bf16.mxu0 0
    %2002 = vmatpush1.bf16.msra.mxu0 0
    %2003 = vmatprep.subr.bf16.mxu0 0
    %2004 = vmatpush1.bf16.msra.mxu0 0
    %2005 = vmatprep.subr.bf16.mxu0 0
    %2006 = vmatpush1.bf16.msra.mxu0 0
    %2007 = vmatprep.subr.bf16.mxu0 0
    %2008 = vmatpush1.bf16.msra.mxu0 0
    %2009 = vmatprep.subr.bf16.mxu0 0
    %2010 = vmatpush1.bf16.msra.mxu0 0
    %2011 = vmatprep.subr.bf16.mxu0 0
    %2012 = vmatpush1.bf16.msra.mxu0 0
    %2013 = vmatprep.subr.bf16.mxu0 0
    %2014 = vmatpush1.bf16.msra.mxu0 0
    %2015 = vmatprep.subr.bf16.mxu0 0
    %2016 = vmatpush1.bf16.msra.mxu0 0
    %2017 = vmatprep.subr.bf16.mxu0 0
    %2018 = vmatpush1.bf16.msra.mxu0 0
    %2019 = vmatprep.subr.bf16.mxu0 0
    %2020 = vmatpush1.bf16.msra.mxu0 0
    %2021 = vmatprep.subr.bf16.mxu0 0
    %2022 = vmatpush1.bf16.msra.mxu0 0
    %2023 = vmatprep.subr.bf16.mxu0 0
    %2024 = vmatpush1.bf16.msra.mxu0 0
    %2025 = vmatprep.mubr.bf16.mxu0 0
    %2026 = vmatmul.mubr.bf16.gmra.mrb[0].mxu0 %v1991
    %v2027 = vpop.f32.mrb[0].mxu0
    %v2028 = vadd.f32 0.0, %v2027
    %v2029 = vpop.f32.mrb[0].mxu0
    %v2030 = vpop.f32.mrb[0].mxu0
    %v2031 = vpop.f32.mrb[0].mxu0
    %2032 = vdwg.mxu0
    %v2033 = vadd.f32 %v1710, %v2028
    %v2034 = vpack.c.bf16 %v1924, %v1924
    %v2036 = vsel %vm1728, %v2034, 0
    %2038 = vmatprep.subr.bf16.mxu0 0
    %2039 = vmatpush1.bf16.msra.mxu0 %v1859
    %2040 = vmatprep.subr.bf16.mxu0 0
    %2041 = vmatpush1.bf16.msra.mxu0 %v1860
    %2042 = vmatprep.subr.bf16.mxu0 0
    %2043 = vmatpush1.bf16.msra.mxu0 0
    %2044 = vmatprep.subr.bf16.mxu0 0
    %2045 = vmatpush1.bf16.msra.mxu0 0
    %2046 = vmatprep.subr.bf16.mxu0 0
    %2047 = vmatpush1.bf16.msra.mxu0 0
    %2048 = vmatprep.subr.bf16.mxu0 0
    %2049 = vmatpush1.bf16.msra.mxu0 0
    %2050 = vmatprep.subr.bf16.mxu0 0
    %2051 = vmatpush1.bf16.msra.mxu0 0
    %2052 = vmatprep.subr.bf16.mxu0 0
    %2053 = vmatpush1.bf16.msra.mxu0 0
    %2054 = vmatprep.subr.bf16.mxu0 0
    %2055 = vmatpush1.bf16.msra.mxu0 0
    %2056 = vmatprep.subr.bf16.mxu0 0
    %2057 = vmatpush1.bf16.msra.mxu0 0
    %2058 = vmatprep.subr.bf16.mxu0 0
    %2059 = vmatpush1.bf16.msra.mxu0 0
    %2060 = vmatprep.subr.bf16.mxu0 0
    %2061 = vmatpush1.bf16.msra.mxu0 0
    %2062 = vmatprep.subr.bf16.mxu0 0
    %2063 = vmatpush1.bf16.msra.mxu0 0
    %2064 = vmatprep.subr.bf16.mxu0 0
    %2065 = vmatpush1.bf16.msra.mxu0 0
    %2066 = vmatprep.subr.bf16.mxu0 0
    %2067 = vmatpush1.bf16.msra.mxu0 0
    %2068 = vmatprep.subr.bf16.mxu0 0
    %2069 = vmatpush1.bf16.msra.mxu0 0
    %2070 = vmatprep.mubr.bf16.mxu0 0
    %2071 = vmatmul.mubr.bf16.gmra.mrb[0].mxu0 %v2036
    %v2072 = vpop.f32.mrb[0].mxu0
    %v2073 = vadd.f32 0.0, %v2072
    %v2074 = vpop.f32.mrb[0].mxu0
    %v2075 = vpop.f32.mrb[0].mxu0
    %v2076 = vpop.f32.mrb[0].mxu0
    %2077 = vdwg.mxu0
    %v2078 = vadd.f32 %v2033, %v2073
    %v2079 = vadd.f32 %v2078, %v2078
    %v2080 = vsel %vm1714, %v2079, %v2078
    %v2081 = vsub.f32 0.0, %v2080
    %v2082 = vmul.f32 %v2081, 1.442695
    %v2083 = vpow.pop %v2082
    %v2084 = vadd.f32 %v2083, 1.0
    %v2085 = vrcp.pop %v2084
    %v2086 = vadd.f32 %v2085, %v2085
    %v2087 = vsub.f32 %v2086, 1.0
    %v2088 = vsel %vm1714, %v2087, %v2085
    %2089 = vrot.lane.b32.xlu0 %v2088, 96
    %v2090 = vpop.permute.xlu0 %2089
    %2091 = vrot.lane.b32.xlu0 %v2088, 64
    %v2092 = vpop.permute.xlu0 %2091
    %v2093 = vmul.f32 %v2088, %v1920
    %v2094 = vmul.f32 %v2090, %v2092
    %v2095 = vadd.f32 %v2093, %v2094
    %v2096 = vtanh.pop %v2095
    %2097 = vrot.lane.b32.xlu0 %v2096, 96
    %v2098 = vpop.permute.xlu0 %2097
    %v2099 = vmul.f32 %v2088, %v2098
    %s2100 = scalar_lea.vmem [#allocation2], 16
    %v2101 = vld [vmem:[%s2100] sm:$0xff]
    %2102 = vmatprep.subr.bf16.mxu0 0
    %2103 = vmatpush1.bf16.msra.mxu0 %v1724
    %2104 = vmatprep.subr.bf16.mxu0 0
    %2105 = vmatpush1.bf16.msra.mxu0 %v1725
    %2106 = vmatprep.subr.bf16.mxu0 0
    %2107 = vmatpush1.bf16.msra.mxu0 0
    %2108 = vmatprep.subr.bf16.mxu0 0
    %2109 = vmatpush1.bf16.msra.mxu0 0
    %2110 = vmatprep.subr.bf16.mxu0 0
    %2111 = vmatpush1.bf16.msra.mxu0 0
    %2112 = vmatprep.subr.bf16.mxu0 0
    %2113 = vmatpush1.bf16.msra.mxu0 0
    %2114 = vmatprep.subr.bf16.mxu0 0
    %2115 = vmatpush1.bf16.msra.mxu0 0
    %2116 = vmatprep.subr.bf16.mxu0 0
    %2117 = vmatpush1.bf16.msra.mxu0 0
    %2118 = vmatprep.subr.bf16.mxu0 0
    %2119 = vmatpush1.bf16.msra.mxu0 0
    %2120 = vmatprep.subr.bf16.mxu0 0
    %2121 = vmatpush1.bf16.msra.mxu0 0
    %2122 = vmatprep.subr.bf16.mxu0 0
    %2123 = vmatpush1.bf16.msra.mxu0 0
    %2124 = vmatprep.subr.bf16.mxu0 0
    %2125 = vmatpush1.bf16.msra.mxu0 0
    %2126 = vmatprep.subr.bf16.mxu0 0
    %2127 = vmatpush1.bf16.msra.mxu0 0
    %2128 = vmatprep.subr.bf16.mxu0 0
    %2129 = vmatpush1.bf16.msra.mxu0 0
    %2130 = vmatprep.subr.bf16.mxu0 0
    %2131 = vmatpush1.bf16.msra.mxu0 0
    %2132 = vmatprep.subr.bf16.mxu0 0
    %2133 = vmatpush1.bf16.msra.mxu0 0
    %2134 = vmatprep.mubr.bf16.mxu0 0
    %2135 = vmatmul.mubr.bf16.gmra.mrb[0].mxu0 %v1991
    %v2136 = vpop.f32.mrb[0].mxu0
    %v2137 = vadd.f32 0.0, %v2136
    %v2138 = vpop.f32.mrb[0].mxu0
    %v2139 = vpop.f32.mrb[0].mxu0
    %v2140 = vpop.f32.mrb[0].mxu0
    %2141 = vdwg.mxu0
    %v2142 = vadd.f32 %v2101, %v2137
    %v2143 = vadd.f32 %v2142, %v2142
    %v2144 = vsel %vm1714, %v2143, %v2142
    %v2145 = vsub.f32 0.0, %v2144
    %v2146 = vmul.f32 %v2145, 1.442695
    %v2147 = vpow.pop %v2146
    %v2148 = vadd.f32 %v2147, 1.0
    %v2149 = vrcp.pop %v2148
    %v2150 = vadd.f32 %v2149, %v2149
    %v2151 = vsub.f32 %v2150, 1.0
    %v2152 = vsel %vm1714, %v2151, %v2149
    %2153 = vrot.lane.b32.xlu0 %v2152, 96
    %v2154 = vpop.permute.xlu0 %2153
    %2155 = vrot.lane.b32.xlu0 %v2152, 64
    %v2156 = vpop.permute.xlu0 %2155
    %v2157 = vmul.f32 %v2152, %v1984
    %v2158 = vmul.f32 %v2154, %v2156
    %v2159 = vadd.f32 %v2157, %v2158
    %v2160 = vtanh.pop %v2159
    %2161 = vrot.lane.b32.xlu0 %v2160, 96
    %v2162 = vpop.permute.xlu0 %2161
    %v2163 = vmul.f32 %v2152, %v2162
    %v2164 = vpack.c.bf16 %v2163, %v2163
    %v2166 = vsel %vm1728, %v2164, 0
    %2168 = vmatprep.subr.bf16.mxu0 0
    %2169 = vmatpush1.bf16.msra.mxu0 %v1803
    %2170 = vmatprep.subr.bf16.mxu0 0
    %2171 = vmatpush1.bf16.msra.mxu0 %v1804
    %2172 = vmatprep.subr.bf16.mxu0 0
    %2173 = vmatpush1.bf16.msra.mxu0 0
    %2174 = vmatprep.subr.bf16.mxu0 0
    %2175 = vmatpush1.bf16.msra.mxu0 0
    %2176 = vmatprep.subr.bf16.mxu0 0
    %2177 = vmatpush1.bf16.msra.mxu0 0
    %2178 = vmatprep.subr.bf16.mxu0 0
    %2179 = vmatpush1.bf16.msra.mxu0 0
    %2180 = vmatprep.subr.bf16.mxu0 0
    %2181 = vmatpush1.bf16.msra.mxu0 0
    %2182 = vmatprep.subr.bf16.mxu0 0
    %2183 = vmatpush1.bf16.msra.mxu0 0
    %2184 = vmatprep.subr.bf16.mxu0 0
    %2185 = vmatpush1.bf16.msra.mxu0 0
    %2186 = vmatprep.subr.bf16.mxu0 0
    %2187 = vmatpush1.bf16.msra.mxu0 0
    %2188 = vmatprep.subr.bf16.mxu0 0
    %2189 = vmatpush1.bf16.msra.mxu0 0
    %2190 = vmatprep.subr.bf16.mxu0 0
    %2191 = vmatpush1.bf16.msra.mxu0 0
    %2192 = vmatprep.subr.bf16.mxu0 0
    %2193 = vmatpush1.bf16.msra.mxu0 0
    %2194 = vmatprep.subr.bf16.mxu0 0
    %2195 = vmatpush1.bf16.msra.mxu0 0
    %2196 = vmatprep.subr.bf16.mxu0 0
    %2197 = vmatpush1.bf16.msra.mxu0 0
    %2198 = vmatprep.subr.bf16.mxu0 0
    %2199 = vmatpush1.bf16.msra.mxu0 0
    %2200 = vmatprep.mubr.bf16.mxu0 0
    %2201 = vmatmul.mubr.bf16.gmra.mrb[0].mxu0 %v2166
    %v2202 = vpop.f32.mrb[0].mxu0
    %v2203 = vadd.f32 0.0, %v2202
    %v2204 = vpop.f32.mrb[0].mxu0
    %v2205 = vpop.f32.mrb[0].mxu0
    %v2206 = vpop.f32.mrb[0].mxu0
    %2207 = vdwg.mxu0
    %v2208 = vadd.f32 %v1710, %v2203
    %v2209 = vpack.c.bf16 %v2099, %v2099
    %v2211 = vsel %vm1728, %v2209, 0
    %2213 = vmatprep.subr.bf16.mxu0 0
    %2214 = vmatpush1.bf16.msra.mxu0 %v1859
    %2215 = vmatprep.subr.bf16.mxu0 0
    %2216 = vmatpush1.bf16.msra.mxu0 %v1860
    %2217 = vmatprep.subr.bf16.mxu0 0
    %2218 = vmatpush1.bf16.msra.mxu0 0
    %2219 = vmatprep.subr.bf16.mxu0 0
    %2220 = vmatpush1.bf16.msra.mxu0 0
    %2221 = vmatprep.subr.bf16.mxu0 0
    %2222 = vmatpush1.bf16.msra.mxu0 0
    %2223 = vmatprep.subr.bf16.mxu0 0
    %2224 = vmatpush1.bf16.msra.mxu0 0
    %2225 = vmatprep.subr.bf16.mxu0 0
    %2226 = vmatpush1.bf16.msra.mxu0 0
    %2227 = vmatprep.subr.bf16.mxu0 0
    %2228 = vmatpush1.bf16.msra.mxu0 0
    %2229 = vmatprep.subr.bf16.mxu0 0
    %2230 = vmatpush1.bf16.msra.mxu0 0
    %2231 = vmatprep.subr.bf16.mxu0 0
    %2232 = vmatpush1.bf16.msra.mxu0 0
    %2233 = vmatprep.subr.bf16.mxu0 0
    %2234 = vmatpush1.bf16.msra.mxu0 0
    %2235 = vmatprep.subr.bf16.mxu0 0
    %2236 = vmatpush1.bf16.msra.mxu0 0
    %2237 = vmatprep.subr.bf16.mxu0 0
    %2238 = vmatpush1.bf16.msra.mxu0 0
    %2239 = vmatprep.subr.bf16.mxu0 0
    %2240 = vmatpush1.bf16.msra.mxu0 0
    %2241 = vmatprep.subr.bf16.mxu0 0
    %2242 = vmatpush1.bf16.msra.mxu0 0
    %2243 = vmatprep.subr.bf16.mxu0 0
    %2244 = vmatpush1.bf16.msra.mxu0 0
    %2245 = vmatprep.mubr.bf16.mxu0 0
    %2246 = vmatmul.mubr.bf16.gmra.mrb[0].mxu0 %v2211
    %v2247 = vpop.f32.mrb[0].mxu0
    %v2248 = vadd.f32 0.0, %v2247
    %v2249 = vpop.f32.mrb[0].mxu0
    %v2250 = vpop.f32.mrb[0].mxu0
    %v2251 = vpop.f32.mrb[0].mxu0
    %2252 = vdwg.mxu0
    %v2253 = vadd.f32 %v2208, %v2248
    %v2254 = vadd.f32 %v2253, %v2253
    %v2255 = vsel %vm1714, %v2254, %v2253
    %v2256 = vsub.f32 0.0, %v2255
    %v2257 = vmul.f32 %v2256, 1.442695
    %v2258 = vpow.pop %v2257
    %v2259 = vadd.f32 %v2258, 1.0
    %v2260 = vrcp.pop %v2259
    %v2261 = vadd.f32 %v2260, %v2260
    %v2262 = vsub.f32 %v2261, 1.0
    %v2263 = vsel %vm1714, %v2262, %v2260
    %2264 = vrot.lane.b32.xlu0 %v2263, 96
    %v2265 = vpop.permute.xlu0 %2264
    %2266 = vrot.lane.b32.xlu0 %v2263, 64
    %v2267 = vpop.permute.xlu0 %2266
    %v2268 = vmul.f32 %v2263, %v2095
    %v2269 = vmul.f32 %v2265, %v2267
    %v2270 = vadd.f32 %v2268, %v2269
    %v2271 = vtanh.pop %v2270
    %2272 = vrot.lane.b32.xlu0 %v2271, 96
    %v2273 = vpop.permute.xlu0 %2272
    %v2274 = vmul.f32 %v2263, %v2273
    %s2275 = scalar_lea.vmem [#allocation2], 24
    %v2276 = vld [vmem:[%s2275] sm:$0xff]
    %2277 = vmatprep.subr.bf16.mxu0 0
    %2278 = vmatpush1.bf16.msra.mxu0 %v1724
    %2279 = vmatprep.subr.bf16.mxu0 0
    %2280 = vmatpush1.bf16.msra.mxu0 %v1725
    %2281 = vmatprep.subr.bf16.mxu0 0
    %2282 = vmatpush1.bf16.msra.mxu0 0
    %2283 = vmatprep.subr.bf16.mxu0 0
    %2284 = vmatpush1.bf16.msra.mxu0 0
    %2285 = vmatprep.subr.bf16.mxu0 0
    %2286 = vmatpush1.bf16.msra.mxu0 0
    %2287 = vmatprep.subr.bf16.mxu0 0
    %2288 = vmatpush1.bf16.msra.mxu0 0
    %2289 = vmatprep.subr.bf16.mxu0 0
    %2290 = vmatpush1.bf16.msra.mxu0 0
    %2291 = vmatprep.subr.bf16.mxu0 0
    %2292 = vmatpush1.bf16.msra.mxu0 0
    %2293 = vmatprep.subr.bf16.mxu0 0
    %2294 = vmatpush1.bf16.msra.mxu0 0
    %2295 = vmatprep.subr.bf16.mxu0 0
    %2296 = vmatpush1.bf16.msra.mxu0 0
    %2297 = vmatprep.subr.bf16.mxu0 0
    %2298 = vmatpush1.bf16.msra.mxu0 0
    %2299 = vmatprep.subr.bf16.mxu0 0
    %2300 = vmatpush1.bf16.msra.mxu0 0
    %2301 = vmatprep.subr.bf16.mxu0 0
    %2302 = vmatpush1.bf16.msra.mxu0 0
    %2303 = vmatprep.subr.bf16.mxu0 0
    %2304 = vmatpush1.bf16.msra.mxu0 0
    %2305 = vmatprep.subr.bf16.mxu0 0
    %2306 = vmatpush1.bf16.msra.mxu0 0
    %2307 = vmatprep.subr.bf16.mxu0 0
    %2308 = vmatpush1.bf16.msra.mxu0 0
    %2309 = vmatprep.mubr.bf16.mxu0 0
    %2310 = vmatmul.mubr.bf16.gmra.mrb[0].mxu0 %v2166
    %v2311 = vpop.f32.mrb[0].mxu0
    %v2312 = vadd.f32 0.0, %v2311
    %v2313 = vpop.f32.mrb[0].mxu0
    %v2314 = vpop.f32.mrb[0].mxu0
    %v2315 = vpop.f32.mrb[0].mxu0
    %2316 = vdwg.mxu0
    %v2317 = vadd.f32 %v2276, %v2312
    %v2318 = vadd.f32 %v2317, %v2317
    %v2319 = vsel %vm1714, %v2318, %v2317
    %v2320 = vsub.f32 0.0, %v2319
    %v2321 = vmul.f32 %v2320, 1.442695
    %v2322 = vpow.pop %v2321
    %v2323 = vadd.f32 %v2322, 1.0
    %v2324 = vrcp.pop %v2323
    %v2325 = vadd.f32 %v2324, %v2324
    %v2326 = vsub.f32 %v2325, 1.0
    %v2327 = vsel %vm1714, %v2326, %v2324
    %2328 = vrot.lane.b32.xlu0 %v2327, 96
    %v2329 = vpop.permute.xlu0 %2328
    %2330 = vrot.lane.b32.xlu0 %v2327, 64
    %v2331 = vpop.permute.xlu0 %2330
    %v2332 = vmul.f32 %v2327, %v2159
    %v2333 = vmul.f32 %v2329, %v2331
    %v2334 = vadd.f32 %v2332, %v2333
    %v2335 = vtanh.pop %v2334
    %2336 = vrot.lane.b32.xlu0 %v2335, 96
    %v2337 = vpop.permute.xlu0 %2336
    %v2338 = vmul.f32 %v2327, %v2337
    %v2339 = vpack.c.bf16 %v2338, %v2338
    %v2341 = vsel %vm1728, %v2339, 0
    %2343 = vmatprep.subr.bf16.mxu0 0
    %2344 = vmatpush1.bf16.msra.mxu0 %v1803
    %2345 = vmatprep.subr.bf16.mxu0 0
    %2346 = vmatpush1.bf16.msra.mxu0 %v1804
    %2347 = vmatprep.subr.bf16.mxu0 0
    %2348 = vmatpush1.bf16.msra.mxu0 0
    %2349 = vmatprep.subr.bf16.mxu0 0
    %2350 = vmatpush1.bf16.msra.mxu0 0
    %2351 = vmatprep.subr.bf16.mxu0 0
    %2352 = vmatpush1.bf16.msra.mxu0 0
    %2353 = vmatprep.subr.bf16.mxu0 0
    %2354 = vmatpush1.bf16.msra.mxu0 0
    %2355 = vmatprep.subr.bf16.mxu0 0
    %2356 = vmatpush1.bf16.msra.mxu0 0
    %2357 = vmatprep.subr.bf16.mxu0 0
    %2358 = vmatpush1.bf16.msra.mxu0 0
    %2359 = vmatprep.subr.bf16.mxu0 0
    %2360 = vmatpush1.bf16.msra.mxu0 0
    %2361 = vmatprep.subr.bf16.mxu0 0
    %2362 = vmatpush1.bf16.msra.mxu0 0
    %2363 = vmatprep.subr.bf16.mxu0 0
    %2364 = vmatpush1.bf16.msra.mxu0 0
    %2365 = vmatprep.subr.bf16.mxu0 0
    %2366 = vmatpush1.bf16.msra.mxu0 0
    %2367 = vmatprep.subr.bf16.mxu0 0
    %2368 = vmatpush1.bf16.msra.mxu0 0
    %2369 = vmatprep.subr.bf16.mxu0 0
    %2370 = vmatpush1.bf16.msra.mxu0 0
    %2371 = vmatprep.subr.bf16.mxu0 0
    %2372 = vmatpush1.bf16.msra.mxu0 0
    %2373 = vmatprep.subr.bf16.mxu0 0
    %2374 = vmatpush1.bf16.msra.mxu0 0
    %2375 = vmatprep.mubr.bf16.mxu0 0
    %2376 = vmatmul.mubr.bf16.gmra.mrb[0].mxu0 %v2341
    %v2377 = vpop.f32.mrb[0].mxu0
    %v2378 = vadd.f32 0.0, %v2377
    %v2379 = vpop.f32.mrb[0].mxu0
    %v2380 = vpop.f32.mrb[0].mxu0
    %v2381 = vpop.f32.mrb[0].mxu0
    %2382 = vdwg.mxu0
    %v2383 = vadd.f32 %v1710, %v2378
    %v2384 = vpack.c.bf16 %v2274, %v2274
    %v2386 = vsel %vm1728, %v2384, 0
    %2388 = vmatprep.subr.bf16.mxu0 0
    %2389 = vmatpush1.bf16.msra.mxu0 %v1859
    %2390 = vmatprep.subr.bf16.mxu0 0
    %2391 = vmatpush1.bf16.msra.mxu0 %v1860
    %2392 = vmatprep.subr.bf16.mxu0 0
    %2393 = vmatpush1.bf16.msra.mxu0 0
    %2394 = vmatprep.subr.bf16.mxu0 0
    %2395 = vmatpush1.bf16.msra.mxu0 0
    %2396 = vmatprep.subr.bf16.mxu0 0
    %2397 = vmatpush1.bf16.msra.mxu0 0
    %2398 = vmatprep.subr.bf16.mxu0 0
    %2399 = vmatpush1.bf16.msra.mxu0 0
    %2400 = vmatprep.subr.bf16.mxu0 0
    %2401 = vmatpush1.bf16.msra.mxu0 0
    %2402 = vmatprep.subr.bf16.mxu0 0
    %2403 = vmatpush1.bf16.msra.mxu0 0
    %2404 = vmatprep.subr.bf16.mxu0 0
    %2405 = vmatpush1.bf16.msra.mxu0 0
    %2406 = vmatprep.subr.bf16.mxu0 0
    %2407 = vmatpush1.bf16.msra.mxu0 0
    %2408 = vmatprep.subr.bf16.mxu0 0
    %2409 = vmatpush1.bf16.msra.mxu0 0
    %2410 = vmatprep.subr.bf16.mxu0 0
    %2411 = vmatpush1.bf16.msra.mxu0 0
    %2412 = vmatprep.subr.bf16.mxu0 0
    %2413 = vmatpush1.bf16.msra.mxu0 0
    %2414 = vmatprep.subr.bf16.mxu0 0
    %2415 = vmatpush1.bf16.msra.mxu0 0
    %2416 = vmatprep.subr.bf16.mxu0 0
    %2417 = vmatpush1.bf16.msra.mxu0 0
    %2418 = vmatprep.subr.bf16.mxu0 0
    %2419 = vmatpush1.bf16.msra.mxu0 0
    %2420 = vmatprep.mubr.bf16.mxu0 0
    %2421 = vmatmul.mubr.bf16.gmra.mrb[0].mxu0 %v2386
    %v2422 = vpop.f32.mrb[0].mxu0
    %v2423 = vadd.f32 0.0, %v2422
    %v2424 = vpop.f32.mrb[0].mxu0
    %v2425 = vpop.f32.mrb[0].mxu0
    %v2426 = vpop.f32.mrb[0].mxu0
    %2427 = vdwg.mxu0
    %v2428 = vadd.f32 %v2383, %v2423
    %v2429 = vadd.f32 %v2428, %v2428
    %v2430 = vsel %vm1714, %v2429, %v2428
    %v2431 = vsub.f32 0.0, %v2430
    %v2432 = vmul.f32 %v2431, 1.442695
    %v2433 = vpow.pop %v2432
    %v2434 = vadd.f32 %v2433, 1.0
    %v2435 = vrcp.pop %v2434
    %v2436 = vadd.f32 %v2435, %v2435
    %v2437 = vsub.f32 %v2436, 1.0
    %v2438 = vsel %vm1714, %v2437, %v2435
    %2439 = vrot.lane.b32.xlu0 %v2438, 96
    %v2440 = vpop.permute.xlu0 %2439
    %2441 = vrot.lane.b32.xlu0 %v2438, 64
    %v2442 = vpop.permute.xlu0 %2441
    %v2443 = vmul.f32 %v2438, %v2270
    %v2444 = vmul.f32 %v2440, %v2442
    %v2445 = vadd.f32 %v2443, %v2444
    %v2446 = vtanh.pop %v2445
    %2447 = vrot.lane.b32.xlu0 %v2446, 96
    %v2448 = vpop.permute.xlu0 %2447
    %v2449 = vmul.f32 %v2438, %v2448
    %s2450 = scalar_lea.vmem [#allocation2], 32
    %v2451 = vld [vmem:[%s2450] sm:$0xff]
    %2452 = vmatprep.subr.bf16.mxu0 0
    %2453 = vmatpush1.bf16.msra.mxu0 %v1724
    %2454 = vmatprep.subr.bf16.mxu0 0
    %2455 = vmatpush1.bf16.msra.mxu0 %v1725
    %2456 = vmatprep.subr.bf16.mxu0 0
    %2457 = vmatpush1.bf16.msra.mxu0 0
    %2458 = vmatprep.subr.bf16.mxu0 0
    %2459 = vmatpush1.bf16.msra.mxu0 0
    %2460 = vmatprep.subr.bf16.mxu0 0
    %2461 = vmatpush1.bf16.msra.mxu0 0
    %2462 = vmatprep.subr.bf16.mxu0 0
    %2463 = vmatpush1.bf16.msra.mxu0 0
    %2464 = vmatprep.subr.bf16.mxu0 0
    %2465 = vmatpush1.bf16.msra.mxu0 0
    %2466 = vmatprep.subr.bf16.mxu0 0
    %2467 = vmatpush1.bf16.msra.mxu0 0
    %2468 = vmatprep.subr.bf16.mxu0 0
    %2469 = vmatpush1.bf16.msra.mxu0 0
    %2470 = vmatprep.subr.bf16.mxu0 0
    %2471 = vmatpush1.bf16.msra.mxu0 0
    %2472 = vmatprep.subr.bf16.mxu0 0
    %2473 = vmatpush1.bf16.msra.mxu0 0
    %2474 = vmatprep.subr.bf16.mxu0 0
    %2475 = vmatpush1.bf16.msra.mxu0 0
    %2476 = vmatprep.subr.bf16.mxu0 0
    %2477 = vmatpush1.bf16.msra.mxu0 0
    %2478 = vmatprep.subr.bf16.mxu0 0
    %2479 = vmatpush1.bf16.msra.mxu0 0
    %2480 = vmatprep.subr.bf16.mxu0 0
    %2481 = vmatpush1.bf16.msra.mxu0 0
    %2482 = vmatprep.subr.bf16.mxu0 0
    %2483 = vmatpush1.bf16.msra.mxu0 0
    %2484 = vmatprep.mubr.bf16.mxu0 0
    %2485 = vmatmul.mubr.bf16.gmra.mrb[0].mxu0 %v2341
    %v2486 = vpop.f32.mrb[0].mxu0
    %v2487 = vadd.f32 0.0, %v2486
    %v2488 = vpop.f32.mrb[0].mxu0
    %v2489 = vpop.f32.mrb[0].mxu0
    %v2490 = vpop.f32.mrb[0].mxu0
    %2491 = vdwg.mxu0
    %v2492 = vadd.f32 %v2451, %v2487
    %v2493 = vadd.f32 %v2492, %v2492
    %v2494 = vsel %vm1714, %v2493, %v2492
    %v2495 = vsub.f32 0.0, %v2494
    %v2496 = vmul.f32 %v2495, 1.442695
    %v2497 = vpow.pop %v2496
    %v2498 = vadd.f32 %v2497, 1.0
    %v2499 = vrcp.pop %v2498
    %v2500 = vadd.f32 %v2499, %v2499
    %v2501 = vsub.f32 %v2500, 1.0
    %v2502 = vsel %vm1714, %v2501, %v2499
    %2503 = vrot.lane.b32.xlu0 %v2502, 96
    %v2504 = vpop.permute.xlu0 %2503
    %2505 = vrot.lane.b32.xlu0 %v2502, 64
    %v2506 = vpop.permute.xlu0 %2505
    %v2507 = vmul.f32 %v2502, %v2334
    %v2508 = vmul.f32 %v2504, %v2506
    %v2509 = vadd.f32 %v2507, %v2508
    %v2510 = vtanh.pop %v2509
    %2511 = vrot.lane.b32.xlu0 %v2510, 96
    %v2512 = vpop.permute.xlu0 %2511
    %v2513 = vmul.f32 %v2502, %v2512
    %v2514 = vpack.c.bf16 %v2513, %v2513
    %v2516 = vsel %vm1728, %v2514, 0
    %2518 = vmatprep.subr.bf16.mxu0 0
    %2519 = vmatpush1.bf16.msra.mxu0 %v1803
    %2520 = vmatprep.subr.bf16.mxu0 0
    %2521 = vmatpush1.bf16.msra.mxu0 %v1804
    %2522 = vmatprep.subr.bf16.mxu0 0
    %2523 = vmatpush1.bf16.msra.mxu0 0
    %2524 = vmatprep.subr.bf16.mxu0 0
    %2525 = vmatpush1.bf16.msra.mxu0 0
    %2526 = vmatprep.subr.bf16.mxu0 0
    %2527 = vmatpush1.bf16.msra.mxu0 0
    %2528 = vmatprep.subr.bf16.mxu0 0
    %2529 = vmatpush1.bf16.msra.mxu0 0
    %2530 = vmatprep.subr.bf16.mxu0 0
    %2531 = vmatpush1.bf16.msra.mxu0 0
    %2532 = vmatprep.subr.bf16.mxu0 0
    %2533 = vmatpush1.bf16.msra.mxu0 0
    %2534 = vmatprep.subr.bf16.mxu0 0
    %2535 = vmatpush1.bf16.msra.mxu0 0
    %2536 = vmatprep.subr.bf16.mxu0 0
    %2537 = vmatpush1.bf16.msra.mxu0 0
    %2538 = vmatprep.subr.bf16.mxu0 0
    %2539 = vmatpush1.bf16.msra.mxu0 0
    %2540 = vmatprep.subr.bf16.mxu0 0
    %2541 = vmatpush1.bf16.msra.mxu0 0
    %2542 = vmatprep.subr.bf16.mxu0 0
    %2543 = vmatpush1.bf16.msra.mxu0 0
    %2544 = vmatprep.subr.bf16.mxu0 0
    %2545 = vmatpush1.bf16.msra.mxu0 0
    %2546 = vmatprep.subr.bf16.mxu0 0
    %2547 = vmatpush1.bf16.msra.mxu0 0
    %2548 = vmatprep.subr.bf16.mxu0 0
    %2549 = vmatpush1.bf16.msra.mxu0 0
    %2550 = vmatprep.mubr.bf16.mxu0 0
    %2551 = vmatmul.mubr.bf16.gmra.mrb[0].mxu0 %v2516
    %v2552 = vpop.f32.mrb[0].mxu0
    %v2553 = vadd.f32 0.0, %v2552
    %v2554 = vpop.f32.mrb[0].mxu0
    %v2555 = vpop.f32.mrb[0].mxu0
    %v2556 = vpop.f32.mrb[0].mxu0
    %2557 = vdwg.mxu0
    %v2558 = vadd.f32 %v1710, %v2553
    %v2559 = vpack.c.bf16 %v2449, %v2449
    %v2561 = vsel %vm1728, %v2559, 0
    %2563 = vmatprep.subr.bf16.mxu0 0
    %2564 = vmatpush1.bf16.msra.mxu0 %v1859
    %2565 = vmatprep.subr.bf16.mxu0 0
    %2566 = vmatpush1.bf16.msra.mxu0 %v1860
    %2567 = vmatprep.subr.bf16.mxu0 0
    %2568 = vmatpush1.bf16.msra.mxu0 0
    %2569 = vmatprep.subr.bf16.mxu0 0
    %2570 = vmatpush1.bf16.msra.mxu0 0
    %2571 = vmatprep.subr.bf16.mxu0 0
    %2572 = vmatpush1.bf16.msra.mxu0 0
    %2573 = vmatprep.subr.bf16.mxu0 0
    %2574 = vmatpush1.bf16.msra.mxu0 0
    %2575 = vmatprep.subr.bf16.mxu0 0
    %2576 = vmatpush1.bf16.msra.mxu0 0
    %2577 = vmatprep.subr.bf16.mxu0 0
    %2578 = vmatpush1.bf16.msra.mxu0 0
    %2579 = vmatprep.subr.bf16.mxu0 0
    %2580 = vmatpush1.bf16.msra.mxu0 0
    %2581 = vmatprep.subr.bf16.mxu0 0
    %2582 = vmatpush1.bf16.msra.mxu0 0
    %2583 = vmatprep.subr.bf16.mxu0 0
    %2584 = vmatpush1.bf16.msra.mxu0 0
    %2585 = vmatprep.subr.bf16.mxu0 0
    %2586 = vmatpush1.bf16.msra.mxu0 0
    %2587 = vmatprep.subr.bf16.mxu0 0
    %2588 = vmatpush1.bf16.msra.mxu0 0
    %2589 = vmatprep.subr.bf16.mxu0 0
    %2590 = vmatpush1.bf16.msra.mxu0 0
    %2591 = vmatprep.subr.bf16.mxu0 0
    %2592 = vmatpush1.bf16.msra.mxu0 0
    %2593 = vmatprep.subr.bf16.mxu0 0
    %2594 = vmatpush1.bf16.msra.mxu0 0
    %2595 = vmatprep.mubr.bf16.mxu0 0
    %2596 = vmatmul.mubr.bf16.gmra.mrb[0].mxu0 %v2561
    %v2597 = vpop.f32.mrb[0].mxu0
    %v2598 = vadd.f32 0.0, %v2597
    %v2599 = vpop.f32.mrb[0].mxu0
    %v2600 = vpop.f32.mrb[0].mxu0
    %v2601 = vpop.f32.mrb[0].mxu0
    %2602 = vdwg.mxu0
    %v2603 = vadd.f32 %v2558, %v2598
    %v2604 = vadd.f32 %v2603, %v2603
    %v2605 = vsel %vm1714, %v2604, %v2603
    %v2606 = vsub.f32 0.0, %v2605
    %v2607 = vmul.f32 %v2606, 1.442695
    %v2608 = vpow.pop %v2607
    %v2609 = vadd.f32 %v2608, 1.0
    %v2610 = vrcp.pop %v2609
    %v2611 = vadd.f32 %v2610, %v2610
    %v2612 = vsub.f32 %v2611, 1.0
    %v2613 = vsel %vm1714, %v2612, %v2610
    %2614 = vrot.lane.b32.xlu0 %v2613, 96
    %v2615 = vpop.permute.xlu0 %2614
    %2616 = vrot.lane.b32.xlu0 %v2613, 64
    %v2617 = vpop.permute.xlu0 %2616
    %v2618 = vmul.f32 %v2613, %v2445
    %v2619 = vmul.f32 %v2615, %v2617
    %v2620 = vadd.f32 %v2618, %v2619
    %v2621 = vtanh.pop %v2620
    %2622 = vrot.lane.b32.xlu0 %v2621, 96
    %v2623 = vpop.permute.xlu0 %2622
    %v2624 = vmul.f32 %v2613, %v2623
    %s2625 = scalar_lea.vmem [#allocation2], 40
    %v2626 = vld [vmem:[%s2625] sm:$0xff]
    %2627 = vmatprep.subr.bf16.mxu0 0
    %2628 = vmatpush1.bf16.msra.mxu0 %v1724
    %2629 = vmatprep.subr.bf16.mxu0 0
    %2630 = vmatpush1.bf16.msra.mxu0 %v1725
    %2631 = vmatprep.subr.bf16.mxu0 0
    %2632 = vmatpush1.bf16.msra.mxu0 0
    %2633 = vmatprep.subr.bf16.mxu0 0
    %2634 = vmatpush1.bf16.msra.mxu0 0
    %2635 = vmatprep.subr.bf16.mxu0 0
    %2636 = vmatpush1.bf16.msra.mxu0 0
    %2637 = vmatprep.subr.bf16.mxu0 0
    %2638 = vmatpush1.bf16.msra.mxu0 0
    %2639 = vmatprep.subr.bf16.mxu0 0
    %2640 = vmatpush1.bf16.msra.mxu0 0
    %2641 = vmatprep.subr.bf16.mxu0 0
    %2642 = vmatpush1.bf16.msra.mxu0 0
    %2643 = vmatprep.subr.bf16.mxu0 0
    %2644 = vmatpush1.bf16.msra.mxu0 0
    %2645 = vmatprep.subr.bf16.mxu0 0
    %2646 = vmatpush1.bf16.msra.mxu0 0
    %2647 = vmatprep.subr.bf16.mxu0 0
    %2648 = vmatpush1.bf16.msra.mxu0 0
    %2649 = vmatprep.subr.bf16.mxu0 0
    %2650 = vmatpush1.bf16.msra.mxu0 0
    %2651 = vmatprep.subr.bf16.mxu0 0
    %2652 = vmatpush1.bf16.msra.mxu0 0
    %2653 = vmatprep.subr.bf16.mxu0 0
    %2654 = vmatpush1.bf16.msra.mxu0 0
    %2655 = vmatprep.subr.bf16.mxu0 0
    %2656 = vmatpush1.bf16.msra.mxu0 0
    %2657 = vmatprep.subr.bf16.mxu0 0
    %2658 = vmatpush1.bf16.msra.mxu0 0
    %2659 = vmatprep.mubr.bf16.mxu0 0
    %2660 = vmatmul.mubr.bf16.gmra.mrb[0].mxu0 %v2516
    %v2661 = vpop.f32.mrb[0].mxu0
    %v2662 = vadd.f32 0.0, %v2661
    %v2663 = vpop.f32.mrb[0].mxu0
    %v2664 = vpop.f32.mrb[0].mxu0
    %v2665 = vpop.f32.mrb[0].mxu0
    %2666 = vdwg.mxu0
    %v2667 = vadd.f32 %v2626, %v2662
    %v2668 = vadd.f32 %v2667, %v2667
    %v2669 = vsel %vm1714, %v2668, %v2667
    %v2670 = vsub.f32 0.0, %v2669
    %v2671 = vmul.f32 %v2670, 1.442695
    %v2672 = vpow.pop %v2671
    %v2673 = vadd.f32 %v2672, 1.0
    %v2674 = vrcp.pop %v2673
    %v2675 = vadd.f32 %v2674, %v2674
    %v2676 = vsub.f32 %v2675, 1.0
    %v2677 = vsel %vm1714, %v2676, %v2674
    %2678 = vrot.lane.b32.xlu0 %v2677, 96
    %v2679 = vpop.permute.xlu0 %2678
    %2680 = vrot.lane.b32.xlu0 %v2677, 64
    %v2681 = vpop.permute.xlu0 %2680
    %v2682 = vmul.f32 %v2677, %v2509
    %v2683 = vmul.f32 %v2679, %v2681
    %v2684 = vadd.f32 %v2682, %v2683
    %v2685 = vtanh.pop %v2684
    %2686 = vrot.lane.b32.xlu0 %v2685, 96
    %v2687 = vpop.permute.xlu0 %2686
    %v2688 = vmul.f32 %v2677, %v2687
    %v2689 = vpack.c.bf16 %v2688, %v2688
    %v2691 = vsel %vm1728, %v2689, 0
    %2693 = vmatprep.subr.bf16.mxu0 0
    %2694 = vmatpush1.bf16.msra.mxu0 %v1803
    %2695 = vmatprep.subr.bf16.mxu0 0
    %2696 = vmatpush1.bf16.msra.mxu0 %v1804
    %2697 = vmatprep.subr.bf16.mxu0 0
    %2698 = vmatpush1.bf16.msra.mxu0 0
    %2699 = vmatprep.subr.bf16.mxu0 0
    %2700 = vmatpush1.bf16.msra.mxu0 0
    %2701 = vmatprep.subr.bf16.mxu0 0
    %2702 = vmatpush1.bf16.msra.mxu0 0
    %2703 = vmatprep.subr.bf16.mxu0 0
    %2704 = vmatpush1.bf16.msra.mxu0 0
    %2705 = vmatprep.subr.bf16.mxu0 0
    %2706 = vmatpush1.bf16.msra.mxu0 0
    %2707 = vmatprep.subr.bf16.mxu0 0
    %2708 = vmatpush1.bf16.msra.mxu0 0
    %2709 = vmatprep.subr.bf16.mxu0 0
    %2710 = vmatpush1.bf16.msra.mxu0 0
    %2711 = vmatprep.subr.bf16.mxu0 0
    %2712 = vmatpush1.bf16.msra.mxu0 0
    %2713 = vmatprep.subr.bf16.mxu0 0
    %2714 = vmatpush1.bf16.msra.mxu0 0
    %2715 = vmatprep.subr.bf16.mxu0 0
    %2716 = vmatpush1.bf16.msra.mxu0 0
    %2717 = vmatprep.subr.bf16.mxu0 0
    %2718 = vmatpush1.bf16.msra.mxu0 0
    %2719 = vmatprep.subr.bf16.mxu0 0
    %2720 = vmatpush1.bf16.msra.mxu0 0
    %2721 = vmatprep.subr.bf16.mxu0 0
    %2722 = vmatpush1.bf16.msra.mxu0 0
    %2723 = vmatprep.subr.bf16.mxu0 0
    %2724 = vmatpush1.bf16.msra.mxu0 0
    %2725 = vmatprep.mubr.bf16.mxu0 0
    %2726 = vmatmul.mubr.bf16.gmra.mrb[0].mxu0 %v2691
    %v2727 = vpop.f32.mrb[0].mxu0
    %v2728 = vadd.f32 0.0, %v2727
    %v2729 = vpop.f32.mrb[0].mxu0
    %v2730 = vpop.f32.mrb[0].mxu0
    %v2731 = vpop.f32.mrb[0].mxu0
    %2732 = vdwg.mxu0
    %v2733 = vadd.f32 %v1710, %v2728
    %v2734 = vpack.c.bf16 %v2624, %v2624
    %v2736 = vsel %vm1728, %v2734, 0
    %2738 = vmatprep.subr.bf16.mxu0 0
    %2739 = vmatpush1.bf16.msra.mxu0 %v1859
    %2740 = vmatprep.subr.bf16.mxu0 0
    %2741 = vmatpush1.bf16.msra.mxu0 %v1860
    %2742 = vmatprep.subr.bf16.mxu0 0
    %2743 = vmatpush1.bf16.msra.mxu0 0
    %2744 = vmatprep.subr.bf16.mxu0 0
    %2745 = vmatpush1.bf16.msra.mxu0 0
    %2746 = vmatprep.subr.bf16.mxu0 0
    %2747 = vmatpush1.bf16.msra.mxu0 0
    %2748 = vmatprep.subr.bf16.mxu0 0
    %2749 = vmatpush1.bf16.msra.mxu0 0
    %2750 = vmatprep.subr.bf16.mxu0 0
    %2751 = vmatpush1.bf16.msra.mxu0 0
    %2752 = vmatprep.subr.bf16.mxu0 0
    %2753 = vmatpush1.bf16.msra.mxu0 0
    %2754 = vmatprep.subr.bf16.mxu0 0
    %2755 = vmatpush1.bf16.msra.mxu0 0
    %2756 = vmatprep.subr.bf16.mxu0 0
    %2757 = vmatpush1.bf16.msra.mxu0 0
    %2758 = vmatprep.subr.bf16.mxu0 0
    %2759 = vmatpush1.bf16.msra.mxu0 0
    %2760 = vmatprep.subr.bf16.mxu0 0
    %2761 = vmatpush1.bf16.msra.mxu0 0
    %2762 = vmatprep.subr.bf16.mxu0 0
    %2763 = vmatpush1.bf16.msra.mxu0 0
    %2764 = vmatprep.subr.bf16.mxu0 0
    %2765 = vmatpush1.bf16.msra.mxu0 0
    %2766 = vmatprep.subr.bf16.mxu0 0
    %2767 = vmatpush1.bf16.msra.mxu0 0
    %2768 = vmatprep.subr.bf16.mxu0 0
    %2769 = vmatpush1.bf16.msra.mxu0 0
    %2770 = vmatprep.mubr.bf16.mxu0 0
    %2771 = vmatmul.mubr.bf16.gmra.mrb[0].mxu0 %v2736
    %v2772 = vpop.f32.mrb[0].mxu0
    %v2773 = vadd.f32 0.0, %v2772
    %v2774 = vpop.f32.mrb[0].mxu0
    %v2775 = vpop.f32.mrb[0].mxu0
    %v2776 = vpop.f32.mrb[0].mxu0
    %2777 = vdwg.mxu0
    %v2778 = vadd.f32 %v2733, %v2773
    %v2779 = vadd.f32 %v2778, %v2778
    %v2780 = vsel %vm1714, %v2779, %v2778
    %v2781 = vsub.f32 0.0, %v2780
    %v2782 = vmul.f32 %v2781, 1.442695
    %v2783 = vpow.pop %v2782
    %v2784 = vadd.f32 %v2783, 1.0
    %v2785 = vrcp.pop %v2784
    %v2786 = vadd.f32 %v2785, %v2785
    %v2787 = vsub.f32 %v2786, 1.0
    %v2788 = vsel %vm1714, %v2787, %v2785
    %2789 = vrot.lane.b32.xlu0 %v2788, 96
    %v2790 = vpop.permute.xlu0 %2789
    %2791 = vrot.lane.b32.xlu0 %v2788, 64
    %v2792 = vpop.permute.xlu0 %2791
    %v2793 = vmul.f32 %v2788, %v2620
    %v2794 = vmul.f32 %v2790, %v2792
    %v2795 = vadd.f32 %v2793, %v2794
    %v2796 = vtanh.pop %v2795
    %2797 = vrot.lane.b32.xlu0 %v2796, 96
    %v2798 = vpop.permute.xlu0 %2797
    %v2799 = vmul.f32 %v2788, %v2798
    %s2800 = scalar_lea.vmem [#allocation2], 48
    %v2801 = vld [vmem:[%s2800] sm:$0xff]
    %2802 = vmatprep.subr.bf16.mxu0 0
    %2803 = vmatpush1.bf16.msra.mxu0 %v1724
    %2804 = vmatprep.subr.bf16.mxu0 0
    %2805 = vmatpush1.bf16.msra.mxu0 %v1725
    %2806 = vmatprep.subr.bf16.mxu0 0
    %2807 = vmatpush1.bf16.msra.mxu0 0
    %2808 = vmatprep.subr.bf16.mxu0 0
    %2809 = vmatpush1.bf16.msra.mxu0 0
    %2810 = vmatprep.subr.bf16.mxu0 0
    %2811 = vmatpush1.bf16.msra.mxu0 0
    %2812 = vmatprep.subr.bf16.mxu0 0
    %2813 = vmatpush1.bf16.msra.mxu0 0
    %2814 = vmatprep.subr.bf16.mxu0 0
    %2815 = vmatpush1.bf16.msra.mxu0 0
    %2816 = vmatprep.subr.bf16.mxu0 0
    %2817 = vmatpush1.bf16.msra.mxu0 0
    %2818 = vmatprep.subr.bf16.mxu0 0
    %2819 = vmatpush1.bf16.msra.mxu0 0
    %2820 = vmatprep.subr.bf16.mxu0 0
    %2821 = vmatpush1.bf16.msra.mxu0 0
    %2822 = vmatprep.subr.bf16.mxu0 0
    %2823 = vmatpush1.bf16.msra.mxu0 0
    %2824 = vmatprep.subr.bf16.mxu0 0
    %2825 = vmatpush1.bf16.msra.mxu0 0
    %2826 = vmatprep.subr.bf16.mxu0 0
    %2827 = vmatpush1.bf16.msra.mxu0 0
    %2828 = vmatprep.subr.bf16.mxu0 0
    %2829 = vmatpush1.bf16.msra.mxu0 0
    %2830 = vmatprep.subr.bf16.mxu0 0
    %2831 = vmatpush1.bf16.msra.mxu0 0
    %2832 = vmatprep.subr.bf16.mxu0 0
    %2833 = vmatpush1.bf16.msra.mxu0 0
    %2834 = vmatprep.mubr.bf16.mxu0 0
    %2835 = vmatmul.mubr.bf16.gmra.mrb[0].mxu0 %v2691
    %v2836 = vpop.f32.mrb[0].mxu0
    %v2837 = vadd.f32 0.0, %v2836
    %v2838 = vpop.f32.mrb[0].mxu0
    %v2839 = vpop.f32.mrb[0].mxu0
    %v2840 = vpop.f32.mrb[0].mxu0
    %2841 = vdwg.mxu0
    %v2842 = vadd.f32 %v2801, %v2837
    %v2843 = vadd.f32 %v2842, %v2842
    %v2844 = vsel %vm1714, %v2843, %v2842
    %v2845 = vsub.f32 0.0, %v2844
    %v2846 = vmul.f32 %v2845, 1.442695
    %v2847 = vpow.pop %v2846
    %v2848 = vadd.f32 %v2847, 1.0
    %v2849 = vrcp.pop %v2848
    %v2850 = vadd.f32 %v2849, %v2849
    %v2851 = vsub.f32 %v2850, 1.0
    %v2852 = vsel %vm1714, %v2851, %v2849
    %2853 = vrot.lane.b32.xlu0 %v2852, 96
    %v2854 = vpop.permute.xlu0 %2853
    %2855 = vrot.lane.b32.xlu0 %v2852, 64
    %v2856 = vpop.permute.xlu0 %2855
    %v2857 = vmul.f32 %v2852, %v2684
    %v2858 = vmul.f32 %v2854, %v2856
    %v2859 = vadd.f32 %v2857, %v2858
    %v2860 = vtanh.pop %v2859
    %2861 = vrot.lane.b32.xlu0 %v2860, 96
    %v2862 = vpop.permute.xlu0 %2861
    %v2863 = vmul.f32 %v2852, %v2862
    %v2864 = vpack.c.bf16 %v2863, %v2863
    %v2866 = vsel %vm1728, %v2864, 0
    %2868 = vmatprep.subr.bf16.mxu0 0
    %2869 = vmatpush1.bf16.msra.mxu0 %v1803
    %2870 = vmatprep.subr.bf16.mxu0 0
    %2871 = vmatpush1.bf16.msra.mxu0 %v1804
    %2872 = vmatprep.subr.bf16.mxu0 0
    %2873 = vmatpush1.bf16.msra.mxu0 0
    %2874 = vmatprep.subr.bf16.mxu0 0
    %2875 = vmatpush1.bf16.msra.mxu0 0
    %2876 = vmatprep.subr.bf16.mxu0 0
    %2877 = vmatpush1.bf16.msra.mxu0 0
    %2878 = vmatprep.subr.bf16.mxu0 0
    %2879 = vmatpush1.bf16.msra.mxu0 0
    %2880 = vmatprep.subr.bf16.mxu0 0
    %2881 = vmatpush1.bf16.msra.mxu0 0
    %2882 = vmatprep.subr.bf16.mxu0 0
    %2883 = vmatpush1.bf16.msra.mxu0 0
    %2884 = vmatprep.subr.bf16.mxu0 0
    %2885 = vmatpush1.bf16.msra.mxu0 0
    %2886 = vmatprep.subr.bf16.mxu0 0
    %2887 = vmatpush1.bf16.msra.mxu0 0
    %2888 = vmatprep.subr.bf16.mxu0 0
    %2889 = vmatpush1.bf16.msra.mxu0 0
    %2890 = vmatprep.subr.bf16.mxu0 0
    %2891 = vmatpush1.bf16.msra.mxu0 0
    %2892 = vmatprep.subr.bf16.mxu0 0
    %2893 = vmatpush1.bf16.msra.mxu0 0
    %2894 = vmatprep.subr.bf16.mxu0 0
    %2895 = vmatpush1.bf16.msra.mxu0 0
    %2896 = vmatprep.subr.bf16.mxu0 0
    %2897 = vmatpush1.bf16.msra.mxu0 0
    %2898 = vmatprep.subr.bf16.mxu0 0
    %2899 = vmatpush1.bf16.msra.mxu0 0
    %2900 = vmatprep.mubr.bf16.mxu0 0
    %2901 = vmatmul.mubr.bf16.gmra.mrb[0].mxu0 %v2866
    %v2902 = vpop.f32.mrb[0].mxu0
    %v2903 = vadd.f32 0.0, %v2902
    %v2904 = vpop.f32.mrb[0].mxu0
    %v2905 = vpop.f32.mrb[0].mxu0
    %v2906 = vpop.f32.mrb[0].mxu0
    %2907 = vdwg.mxu0
    %v2908 = vadd.f32 %v1710, %v2903
    %v2909 = vpack.c.bf16 %v2799, %v2799
    %v2911 = vsel %vm1728, %v2909, 0
    %2913 = vmatprep.subr.bf16.mxu0 0
    %2914 = vmatpush1.bf16.msra.mxu0 %v1859
    %2915 = vmatprep.subr.bf16.mxu0 0
    %2916 = vmatpush1.bf16.msra.mxu0 %v1860
    %2917 = vmatprep.subr.bf16.mxu0 0
    %2918 = vmatpush1.bf16.msra.mxu0 0
    %2919 = vmatprep.subr.bf16.mxu0 0
    %2920 = vmatpush1.bf16.msra.mxu0 0
    %2921 = vmatprep.subr.bf16.mxu0 0
    %2922 = vmatpush1.bf16.msra.mxu0 0
    %2923 = vmatprep.subr.bf16.mxu0 0
    %2924 = vmatpush1.bf16.msra.mxu0 0
    %2925 = vmatprep.subr.bf16.mxu0 0
    %2926 = vmatpush1.bf16.msra.mxu0 0
    %2927 = vmatprep.subr.bf16.mxu0 0
    %2928 = vmatpush1.bf16.msra.mxu0 0
    %2929 = vmatprep.subr.bf16.mxu0 0
    %2930 = vmatpush1.bf16.msra.mxu0 0
    %2931 = vmatprep.subr.bf16.mxu0 0
    %2932 = vmatpush1.bf16.msra.mxu0 0
    %2933 = vmatprep.subr.bf16.mxu0 0
    %2934 = vmatpush1.bf16.msra.mxu0 0
    %2935 = vmatprep.subr.bf16.mxu0 0
    %2936 = vmatpush1.bf16.msra.mxu0 0
    %2937 = vmatprep.subr.bf16.mxu0 0
    %2938 = vmatpush1.bf16.msra.mxu0 0
    %2939 = vmatprep.subr.bf16.mxu0 0
    %2940 = vmatpush1.bf16.msra.mxu0 0
    %2941 = vmatprep.subr.bf16.mxu0 0
    %2942 = vmatpush1.bf16.msra.mxu0 0
    %2943 = vmatprep.subr.bf16.mxu0 0
    %2944 = vmatpush1.bf16.msra.mxu0 0
    %2945 = vmatprep.mubr.bf16.mxu0 0
    %2946 = vmatmul.mubr.bf16.gmra.mrb[0].mxu0 %v2911
    %v2947 = vpop.f32.mrb[0].mxu0
    %v2948 = vadd.f32 0.0, %v2947
    %v2949 = vpop.f32.mrb[0].mxu0
    %v2950 = vpop.f32.mrb[0].mxu0
    %v2951 = vpop.f32.mrb[0].mxu0
    %2952 = vdwg.mxu0
    %v2953 = vadd.f32 %v2908, %v2948
    %v2954 = vadd.f32 %v2953, %v2953
    %v2955 = vsel %vm1714, %v2954, %v2953
    %v2956 = vsub.f32 0.0, %v2955
    %v2957 = vmul.f32 %v2956, 1.442695
    %v2958 = vpow.pop %v2957
    %v2959 = vadd.f32 %v2958, 1.0
    %v2960 = vrcp.pop %v2959
    %v2961 = vadd.f32 %v2960, %v2960
    %v2962 = vsub.f32 %v2961, 1.0
    %v2963 = vsel %vm1714, %v2962, %v2960
    %2964 = vrot.lane.b32.xlu0 %v2963, 96
    %v2965 = vpop.permute.xlu0 %2964
    %2966 = vrot.lane.b32.xlu0 %v2963, 64
    %v2967 = vpop.permute.xlu0 %2966
    %v2968 = vmul.f32 %v2963, %v2795
    %v2969 = vmul.f32 %v2965, %v2967
    %v2970 = vadd.f32 %v2968, %v2969
    %v2971 = vtanh.pop %v2970
    %2972 = vrot.lane.b32.xlu0 %v2971, 96
    %v2973 = vpop.permute.xlu0 %2972
    %v2974 = vmul.f32 %v2963, %v2973
    %s2975 = scalar_lea.vmem [#allocation2], 56
    %v2976 = vld [vmem:[%s2975] sm:$0xff]
    %2977 = vmatprep.subr.bf16.mxu0 0
    %2978 = vmatpush1.bf16.msra.mxu0 %v1724
    %2979 = vmatprep.subr.bf16.mxu0 0
    %2980 = vmatpush1.bf16.msra.mxu0 %v1725
    %2981 = vmatprep.subr.bf16.mxu0 0
    %2982 = vmatpush1.bf16.msra.mxu0 0
    %2983 = vmatprep.subr.bf16.mxu0 0
    %2984 = vmatpush1.bf16.msra.mxu0 0
    %2985 = vmatprep.subr.bf16.mxu0 0
    %2986 = vmatpush1.bf16.msra.mxu0 0
    %2987 = vmatprep.subr.bf16.mxu0 0
    %2988 = vmatpush1.bf16.msra.mxu0 0
    %2989 = vmatprep.subr.bf16.mxu0 0
    %2990 = vmatpush1.bf16.msra.mxu0 0
    %2991 = vmatprep.subr.bf16.mxu0 0
    %2992 = vmatpush1.bf16.msra.mxu0 0
    %2993 = vmatprep.subr.bf16.mxu0 0
    %2994 = vmatpush1.bf16.msra.mxu0 0
    %2995 = vmatprep.subr.bf16.mxu0 0
    %2996 = vmatpush1.bf16.msra.mxu0 0
    %2997 = vmatprep.subr.bf16.mxu0 0
    %2998 = vmatpush1.bf16.msra.mxu0 0
    %2999 = vmatprep.subr.bf16.mxu0 0
    %3000 = vmatpush1.bf16.msra.mxu0 0
    %3001 = vmatprep.subr.bf16.mxu0 0
    %3002 = vmatpush1.bf16.msra.mxu0 0
    %3003 = vmatprep.subr.bf16.mxu0 0
    %3004 = vmatpush1.bf16.msra.mxu0 0
    %3005 = vmatprep.subr.bf16.mxu0 0
    %3006 = vmatpush1.bf16.msra.mxu0 0
    %3007 = vmatprep.subr.bf16.mxu0 0
    %3008 = vmatpush1.bf16.msra.mxu0 0
    %3009 = vmatprep.mubr.bf16.mxu0 0
    %3010 = vmatmul.mubr.bf16.gmra.mrb[0].mxu0 %v2866
    %v3011 = vpop.f32.mrb[0].mxu0
    %v3012 = vadd.f32 0.0, %v3011
    %v3013 = vpop.f32.mrb[0].mxu0
    %v3014 = vpop.f32.mrb[0].mxu0
    %v3015 = vpop.f32.mrb[0].mxu0
    %3016 = vdwg.mxu0
    %v3017 = vadd.f32 %v2976, %v3012
    %v3018 = vadd.f32 %v3017, %v3017
    %v3019 = vsel %vm1714, %v3018, %v3017
    %v3020 = vsub.f32 0.0, %v3019
    %v3021 = vmul.f32 %v3020, 1.442695
    %v3022 = vpow.pop %v3021
    %v3023 = vadd.f32 %v3022, 1.0
    %v3024 = vrcp.pop %v3023
    %v3025 = vadd.f32 %v3024, %v3024
    %v3026 = vsub.f32 %v3025, 1.0
    %v3027 = vsel %vm1714, %v3026, %v3024
    %3028 = vrot.lane.b32.xlu0 %v3027, 96
    %v3029 = vpop.permute.xlu0 %3028
    %3030 = vrot.lane.b32.xlu0 %v3027, 64
    %v3031 = vpop.permute.xlu0 %3030
    %v3032 = vmul.f32 %v3027, %v2859
    %v3033 = vmul.f32 %v3029, %v3031
    %v3034 = vadd.f32 %v3032, %v3033
    %v3035 = vtanh.pop %v3034
    %3036 = vrot.lane.b32.xlu0 %v3035, 96
    %v3037 = vpop.permute.xlu0 %3036
    %v3038 = vmul.f32 %v3027, %v3037
    %v3039 = vpack.c.bf16 %v3038, %v3038
    %v3041 = vsel %vm1728, %v3039, 0
    %3043 = vmatprep.subr.bf16.mxu0 0
    %3044 = vmatpush1.bf16.msra.mxu0 %v1803
    %3045 = vmatprep.subr.bf16.mxu0 0
    %3046 = vmatpush1.bf16.msra.mxu0 %v1804
    %3047 = vmatprep.subr.bf16.mxu0 0
    %3048 = vmatpush1.bf16.msra.mxu0 0
    %3049 = vmatprep.subr.bf16.mxu0 0
    %3050 = vmatpush1.bf16.msra.mxu0 0
    %3051 = vmatprep.subr.bf16.mxu0 0
    %3052 = vmatpush1.bf16.msra.mxu0 0
    %3053 = vmatprep.subr.bf16.mxu0 0
    %3054 = vmatpush1.bf16.msra.mxu0 0
    %3055 = vmatprep.subr.bf16.mxu0 0
    %3056 = vmatpush1.bf16.msra.mxu0 0
    %3057 = vmatprep.subr.bf16.mxu0 0
    %3058 = vmatpush1.bf16.msra.mxu0 0
    %3059 = vmatprep.subr.bf16.mxu0 0
    %3060 = vmatpush1.bf16.msra.mxu0 0
    %3061 = vmatprep.subr.bf16.mxu0 0
    %3062 = vmatpush1.bf16.msra.mxu0 0
    %3063 = vmatprep.subr.bf16.mxu0 0
    %3064 = vmatpush1.bf16.msra.mxu0 0
    %3065 = vmatprep.subr.bf16.mxu0 0
    %3066 = vmatpush1.bf16.msra.mxu0 0
    %3067 = vmatprep.subr.bf16.mxu0 0
    %3068 = vmatpush1.bf16.msra.mxu0 0
    %3069 = vmatprep.subr.bf16.mxu0 0
    %3070 = vmatpush1.bf16.msra.mxu0 0
    %3071 = vmatprep.subr.bf16.mxu0 0
    %3072 = vmatpush1.bf16.msra.mxu0 0
    %3073 = vmatprep.subr.bf16.mxu0 0
    %3074 = vmatpush1.bf16.msra.mxu0 0
    %3075 = vmatprep.mubr.bf16.mxu0 0
    %3076 = vmatmul.mubr.bf16.gmra.mrb[0].mxu0 %v3041
    %v3077 = vpop.f32.mrb[0].mxu0
    %v3078 = vadd.f32 0.0, %v3077
    %v3079 = vpop.f32.mrb[0].mxu0
    %v3080 = vpop.f32.mrb[0].mxu0
    %v3081 = vpop.f32.mrb[0].mxu0
    %3082 = vdwg.mxu0
    %v3083 = vadd.f32 %v1710, %v3078
    %v3084 = vpack.c.bf16 %v2974, %v2974
    %v3086 = vsel %vm1728, %v3084, 0
    %3088 = vmatprep.subr.bf16.mxu0 0
    %3089 = vmatpush1.bf16.msra.mxu0 %v1859
    %3090 = vmatprep.subr.bf16.mxu0 0
    %3091 = vmatpush1.bf16.msra.mxu0 %v1860
    %3092 = vmatprep.subr.bf16.mxu0 0
    %3093 = vmatpush1.bf16.msra.mxu0 0
    %3094 = vmatprep.subr.bf16.mxu0 0
    %3095 = vmatpush1.bf16.msra.mxu0 0
    %3096 = vmatprep.subr.bf16.mxu0 0
    %3097 = vmatpush1.bf16.msra.mxu0 0
    %3098 = vmatprep.subr.bf16.mxu0 0
    %3099 = vmatpush1.bf16.msra.mxu0 0
    %3100 = vmatprep.subr.bf16.mxu0 0
    %3101 = vmatpush1.bf16.msra.mxu0 0
    %3102 = vmatprep.subr.bf16.mxu0 0
    %3103 = vmatpush1.bf16.msra.mxu0 0
    %3104 = vmatprep.subr.bf16.mxu0 0
    %3105 = vmatpush1.bf16.msra.mxu0 0
    %3106 = vmatprep.subr.bf16.mxu0 0
    %3107 = vmatpush1.bf16.msra.mxu0 0
    %3108 = vmatprep.subr.bf16.mxu0 0
    %3109 = vmatpush1.bf16.msra.mxu0 0
    %3110 = vmatprep.subr.bf16.mxu0 0
    %3111 = vmatpush1.bf16.msra.mxu0 0
    %3112 = vmatprep.subr.bf16.mxu0 0
    %3113 = vmatpush1.bf16.msra.mxu0 0
    %3114 = vmatprep.subr.bf16.mxu0 0
    %3115 = vmatpush1.bf16.msra.mxu0 0
    %3116 = vmatprep.subr.bf16.mxu0 0
    %3117 = vmatpush1.bf16.msra.mxu0 0
    %3118 = vmatprep.subr.bf16.mxu0 0
    %3119 = vmatpush1.bf16.msra.mxu0 0
    %3120 = vmatprep.mubr.bf16.mxu0 0
    %3121 = vmatmul.mubr.bf16.gmra.mrb[0].mxu0 %v3086
    %v3122 = vpop.f32.mrb[0].mxu0
    %v3123 = vadd.f32 0.0, %v3122
    %v3124 = vpop.f32.mrb[0].mxu0
    %v3125 = vpop.f32.mrb[0].mxu0
    %v3126 = vpop.f32.mrb[0].mxu0
    %3127 = vdwg.mxu0
    %v3128 = vadd.f32 %v3083, %v3123
    %v3129 = vadd.f32 %v3128, %v3128
    %v3130 = vsel %vm1714, %v3129, %v3128
    %v3131 = vsub.f32 0.0, %v3130
    %v3132 = vmul.f32 %v3131, 1.442695
    %v3133 = vpow.pop %v3132
    %v3134 = vadd.f32 %v3133, 1.0
    %v3135 = vrcp.pop %v3134
    %v3136 = vadd.f32 %v3135, %v3135
    %v3137 = vsub.f32 %v3136, 1.0
    %v3138 = vsel %vm1714, %v3137, %v3135
    %3139 = vrot.lane.b32.xlu0 %v3138, 96
    %v3140 = vpop.permute.xlu0 %3139
    %3141 = vrot.lane.b32.xlu0 %v3138, 64
    %v3142 = vpop.permute.xlu0 %3141
    %v3143 = vmul.f32 %v3138, %v2970
    %v3144 = vmul.f32 %v3140, %v3142
    %v3145 = vadd.f32 %v3143, %v3144
    %v3146 = vtanh.pop %v3145
    %3147 = vrot.lane.b32.xlu0 %v3146, 96
    %v3148 = vpop.permute.xlu0 %3147
    %v3149 = vmul.f32 %v3138, %v3148
    %s3150 = scalar_lea.vmem [#allocation2], 64
    %v3151 = vld [vmem:[%s3150] sm:$0xff]
    %3152 = vmatprep.subr.bf16.mxu0 0
    %3153 = vmatpush1.bf16.msra.mxu0 %v1724
    %3154 = vmatprep.subr.bf16.mxu0 0
    %3155 = vmatpush1.bf16.msra.mxu0 %v1725
    %3156 = vmatprep.subr.bf16.mxu0 0
    %3157 = vmatpush1.bf16.msra.mxu0 0
    %3158 = vmatprep.subr.bf16.mxu0 0
    %3159 = vmatpush1.bf16.msra.mxu0 0
    %3160 = vmatprep.subr.bf16.mxu0 0
    %3161 = vmatpush1.bf16.msra.mxu0 0
    %3162 = vmatprep.subr.bf16.mxu0 0
    %3163 = vmatpush1.bf16.msra.mxu0 0
    %3164 = vmatprep.subr.bf16.mxu0 0
    %3165 = vmatpush1.bf16.msra.mxu0 0
    %3166 = vmatprep.subr.bf16.mxu0 0
    %3167 = vmatpush1.bf16.msra.mxu0 0
    %3168 = vmatprep.subr.bf16.mxu0 0
    %3169 = vmatpush1.bf16.msra.mxu0 0
    %3170 = vmatprep.subr.bf16.mxu0 0
    %3171 = vmatpush1.bf16.msra.mxu0 0
    %3172 = vmatprep.subr.bf16.mxu0 0
    %3173 = vmatpush1.bf16.msra.mxu0 0
    %3174 = vmatprep.subr.bf16.mxu0 0
    %3175 = vmatpush1.bf16.msra.mxu0 0
    %3176 = vmatprep.subr.bf16.mxu0 0
    %3177 = vmatpush1.bf16.msra.mxu0 0
    %3178 = vmatprep.subr.bf16.mxu0 0
    %3179 = vmatpush1.bf16.msra.mxu0 0
    %3180 = vmatprep.subr.bf16.mxu0 0
    %3181 = vmatpush1.bf16.msra.mxu0 0
    %3182 = vmatprep.subr.bf16.mxu0 0
    %3183 = vmatpush1.bf16.msra.mxu0 0
    %3184 = vmatprep.mubr.bf16.mxu0 0
    %3185 = vmatmul.mubr.bf16.gmra.mrb[0].mxu0 %v3041
    %v3186 = vpop.f32.mrb[0].mxu0
    %v3187 = vadd.f32 0.0, %v3186
    %v3188 = vpop.f32.mrb[0].mxu0
    %v3189 = vpop.f32.mrb[0].mxu0
    %v3190 = vpop.f32.mrb[0].mxu0
    %3191 = vdwg.mxu0
    %v3192 = vadd.f32 %v3151, %v3187
    %v3193 = vadd.f32 %v3192, %v3192
    %v3194 = vsel %vm1714, %v3193, %v3192
    %v3195 = vsub.f32 0.0, %v3194
    %v3196 = vmul.f32 %v3195, 1.442695
    %v3197 = vpow.pop %v3196
    %v3198 = vadd.f32 %v3197, 1.0
    %v3199 = vrcp.pop %v3198
    %v3200 = vadd.f32 %v3199, %v3199
    %v3201 = vsub.f32 %v3200, 1.0
    %v3202 = vsel %vm1714, %v3201, %v3199
    %3203 = vrot.lane.b32.xlu0 %v3202, 96
    %v3204 = vpop.permute.xlu0 %3203
    %3205 = vrot.lane.b32.xlu0 %v3202, 64
    %v3206 = vpop.permute.xlu0 %3205
    %v3207 = vmul.f32 %v3202, %v3034
    %v3208 = vmul.f32 %v3204, %v3206
    %v3209 = vadd.f32 %v3207, %v3208
    %v3210 = vtanh.pop %v3209
    %3211 = vrot.lane.b32.xlu0 %v3210, 96
    %v3212 = vpop.permute.xlu0 %3211
    %v3213 = vmul.f32 %v3202, %v3212
    %v3214 = vpack.c.bf16 %v3213, %v3213
    %v3216 = vsel %vm1728, %v3214, 0
    %3218 = vmatprep.subr.bf16.mxu0 0
    %3219 = vmatpush1.bf16.msra.mxu0 %v1803
    %3220 = vmatprep.subr.bf16.mxu0 0
    %3221 = vmatpush1.bf16.msra.mxu0 %v1804
    %3222 = vmatprep.subr.bf16.mxu0 0
    %3223 = vmatpush1.bf16.msra.mxu0 0
    %3224 = vmatprep.subr.bf16.mxu0 0
    %3225 = vmatpush1.bf16.msra.mxu0 0
    %3226 = vmatprep.subr.bf16.mxu0 0
    %3227 = vmatpush1.bf16.msra.mxu0 0
    %3228 = vmatprep.subr.bf16.mxu0 0
    %3229 = vmatpush1.bf16.msra.mxu0 0
    %3230 = vmatprep.subr.bf16.mxu0 0
    %3231 = vmatpush1.bf16.msra.mxu0 0
    %3232 = vmatprep.subr.bf16.mxu0 0
    %3233 = vmatpush1.bf16.msra.mxu0 0
    %3234 = vmatprep.subr.bf16.mxu0 0
    %3235 = vmatpush1.bf16.msra.mxu0 0
    %3236 = vmatprep.subr.bf16.mxu0 0
    %3237 = vmatpush1.bf16.msra.mxu0 0
    %3238 = vmatprep.subr.bf16.mxu0 0
    %3239 = vmatpush1.bf16.msra.mxu0 0
    %3240 = vmatprep.subr.bf16.mxu0 0
    %3241 = vmatpush1.bf16.msra.mxu0 0
    %3242 = vmatprep.subr.bf16.mxu0 0
    %3243 = vmatpush1.bf16.msra.mxu0 0
    %3244 = vmatprep.subr.bf16.mxu0 0
    %3245 = vmatpush1.bf16.msra.mxu0 0
    %3246 = vmatprep.subr.bf16.mxu0 0
    %3247 = vmatpush1.bf16.msra.mxu0 0
    %3248 = vmatprep.subr.bf16.mxu0 0
    %3249 = vmatpush1.bf16.msra.mxu0 0
    %3250 = vmatprep.mubr.bf16.mxu0 0
    %3251 = vmatmul.mubr.bf16.gmra.mrb[0].mxu0 %v3216
    %v3252 = vpop.f32.mrb[0].mxu0
    %v3253 = vadd.f32 0.0, %v3252
    %v3254 = vpop.f32.mrb[0].mxu0
    %v3255 = vpop.f32.mrb[0].mxu0
    %v3256 = vpop.f32.mrb[0].mxu0
    %3257 = vdwg.mxu0
    %v3258 = vadd.f32 %v1710, %v3253
    %v3259 = vpack.c.bf16 %v3149, %v3149
    %v3261 = vsel %vm1728, %v3259, 0
    %3263 = vmatprep.subr.bf16.mxu0 0
    %3264 = vmatpush1.bf16.msra.mxu0 %v1859
    %3265 = vmatprep.subr.bf16.mxu0 0
    %3266 = vmatpush1.bf16.msra.mxu0 %v1860
    %3267 = vmatprep.subr.bf16.mxu0 0
    %3268 = vmatpush1.bf16.msra.mxu0 0
    %3269 = vmatprep.subr.bf16.mxu0 0
    %3270 = vmatpush1.bf16.msra.mxu0 0
    %3271 = vmatprep.subr.bf16.mxu0 0
    %3272 = vmatpush1.bf16.msra.mxu0 0
    %3273 = vmatprep.subr.bf16.mxu0 0
    %3274 = vmatpush1.bf16.msra.mxu0 0
    %3275 = vmatprep.subr.bf16.mxu0 0
    %3276 = vmatpush1.bf16.msra.mxu0 0
    %3277 = vmatprep.subr.bf16.mxu0 0
    %3278 = vmatpush1.bf16.msra.mxu0 0
    %3279 = vmatprep.subr.bf16.mxu0 0
    %3280 = vmatpush1.bf16.msra.mxu0 0
    %3281 = vmatprep.subr.bf16.mxu0 0
    %3282 = vmatpush1.bf16.msra.mxu0 0
    %3283 = vmatprep.subr.bf16.mxu0 0
    %3284 = vmatpush1.bf16.msra.mxu0 0
    %3285 = vmatprep.subr.bf16.mxu0 0
    %3286 = vmatpush1.bf16.msra.mxu0 0
    %3287 = vmatprep.subr.bf16.mxu0 0
    %3288 = vmatpush1.bf16.msra.mxu0 0
    %3289 = vmatprep.subr.bf16.mxu0 0
    %3290 = vmatpush1.bf16.msra.mxu0 0
    %3291 = vmatprep.subr.bf16.mxu0 0
    %3292 = vmatpush1.bf16.msra.mxu0 0
    %3293 = vmatprep.subr.bf16.mxu0 0
    %3294 = vmatpush1.bf16.msra.mxu0 0
    %3295 = vmatprep.mubr.bf16.mxu0 0
    %3296 = vmatmul.mubr.bf16.gmra.mrb[0].mxu0 %v3261
    %v3297 = vpop.f32.mrb[0].mxu0
    %v3298 = vadd.f32 0.0, %v3297
    %v3299 = vpop.f32.mrb[0].mxu0
    %v3300 = vpop.f32.mrb[0].mxu0
    %v3301 = vpop.f32.mrb[0].mxu0
    %3302 = vdwg.mxu0
    %v3303 = vadd.f32 %v3258, %v3298
    %v3304 = vadd.f32 %v3303, %v3303
    %v3305 = vsel %vm1714, %v3304, %v3303
    %v3306 = vsub.f32 0.0, %v3305
    %v3307 = vmul.f32 %v3306, 1.442695
    %v3308 = vpow.pop %v3307
    %v3309 = vadd.f32 %v3308, 1.0
    %v3310 = vrcp.pop %v3309
    %v3311 = vadd.f32 %v3310, %v3310
    %v3312 = vsub.f32 %v3311, 1.0
    %v3313 = vsel %vm1714, %v3312, %v3310
    %3314 = vrot.lane.b32.xlu0 %v3313, 96
    %v3315 = vpop.permute.xlu0 %3314
    %3316 = vrot.lane.b32.xlu0 %v3313, 64
    %v3317 = vpop.permute.xlu0 %3316
    %v3318 = vmul.f32 %v3313, %v3145
    %v3319 = vmul.f32 %v3315, %v3317
    %v3320 = vadd.f32 %v3318, %v3319
    %v3321 = vtanh.pop %v3320
    %3322 = vrot.lane.b32.xlu0 %v3321, 96
    %v3323 = vpop.permute.xlu0 %3322
    %v3324 = vmul.f32 %v3313, %v3323
    %s3325 = scalar_lea.vmem [#allocation2], 72
    %v3326 = vld [vmem:[%s3325] sm:$0xff]
    %3327 = vmatprep.subr.bf16.mxu0 0
    %3328 = vmatpush1.bf16.msra.mxu0 %v1724
    %3329 = vmatprep.subr.bf16.mxu0 0
    %3330 = vmatpush1.bf16.msra.mxu0 %v1725
    %3331 = vmatprep.subr.bf16.mxu0 0
    %3332 = vmatpush1.bf16.msra.mxu0 0
    %3333 = vmatprep.subr.bf16.mxu0 0
    %3334 = vmatpush1.bf16.msra.mxu0 0
    %3335 = vmatprep.subr.bf16.mxu0 0
    %3336 = vmatpush1.bf16.msra.mxu0 0
    %3337 = vmatprep.subr.bf16.mxu0 0
    %3338 = vmatpush1.bf16.msra.mxu0 0
    %3339 = vmatprep.subr.bf16.mxu0 0
    %3340 = vmatpush1.bf16.msra.mxu0 0
    %3341 = vmatprep.subr.bf16.mxu0 0
    %3342 = vmatpush1.bf16.msra.mxu0 0
    %3343 = vmatprep.subr.bf16.mxu0 0
    %3344 = vmatpush1.bf16.msra.mxu0 0
    %3345 = vmatprep.subr.bf16.mxu0 0
    %3346 = vmatpush1.bf16.msra.mxu0 0
    %3347 = vmatprep.subr.bf16.mxu0 0
    %3348 = vmatpush1.bf16.msra.mxu0 0
    %3349 = vmatprep.subr.bf16.mxu0 0
    %3350 = vmatpush1.bf16.msra.mxu0 0
    %3351 = vmatprep.subr.bf16.mxu0 0
    %3352 = vmatpush1.bf16.msra.mxu0 0
    %3353 = vmatprep.subr.bf16.mxu0 0
    %3354 = vmatpush1.bf16.msra.mxu0 0
    %3355 = vmatprep.subr.bf16.mxu0 0
    %3356 = vmatpush1.bf16.msra.mxu0 0
    %3357 = vmatprep.subr.bf16.mxu0 0
    %3358 = vmatpush1.bf16.msra.mxu0 0
    %3359 = vmatprep.mubr.bf16.mxu0 0
    %3360 = vmatmul.mubr.bf16.gmra.mrb[0].mxu0 %v3216
    %v3361 = vpop.f32.mrb[0].mxu0
    %v3362 = vadd.f32 0.0, %v3361
    %v3363 = vpop.f32.mrb[0].mxu0
    %v3364 = vpop.f32.mrb[0].mxu0
    %v3365 = vpop.f32.mrb[0].mxu0
    %3366 = vdwg.mxu0
    %v3367 = vadd.f32 %v3326, %v3362
    %v3368 = vadd.f32 %v3367, %v3367
    %v3369 = vsel %vm1714, %v3368, %v3367
    %v3370 = vsub.f32 0.0, %v3369
    %v3371 = vmul.f32 %v3370, 1.442695
    %v3372 = vpow.pop %v3371
    %v3373 = vadd.f32 %v3372, 1.0
    %v3374 = vrcp.pop %v3373
    %v3375 = vadd.f32 %v3374, %v3374
    %v3376 = vsub.f32 %v3375, 1.0
    %v3377 = vsel %vm1714, %v3376, %v3374
    %3378 = vrot.lane.b32.xlu0 %v3377, 96
    %v3379 = vpop.permute.xlu0 %3378
    %3380 = vrot.lane.b32.xlu0 %v3377, 64
    %v3381 = vpop.permute.xlu0 %3380
    %v3382 = vmul.f32 %v3377, %v3209
    %v3383 = vmul.f32 %v3379, %v3381
    %v3384 = vadd.f32 %v3382, %v3383
    %v3385 = vtanh.pop %v3384
    %3386 = vrot.lane.b32.xlu0 %v3385, 96
    %v3387 = vpop.permute.xlu0 %3386
    %v3388 = vmul.f32 %v3377, %v3387
    %v3389 = vpack.c.bf16 %v3388, %v3388
    %v3391 = vsel %vm1728, %v3389, 0
    %3393 = vmatprep.subr.bf16.mxu0 0
    %3394 = vmatpush1.bf16.msra.mxu0 %v1803
    %3395 = vmatprep.subr.bf16.mxu0 0
    %3396 = vmatpush1.bf16.msra.mxu0 %v1804
    %3397 = vmatprep.subr.bf16.mxu0 0
    %3398 = vmatpush1.bf16.msra.mxu0 0
    %3399 = vmatprep.subr.bf16.mxu0 0
    %3400 = vmatpush1.bf16.msra.mxu0 0
    %3401 = vmatprep.subr.bf16.mxu0 0
    %3402 = vmatpush1.bf16.msra.mxu0 0
    %3403 = vmatprep.subr.bf16.mxu0 0
    %3404 = vmatpush1.bf16.msra.mxu0 0
    %3405 = vmatprep.subr.bf16.mxu0 0
    %3406 = vmatpush1.bf16.msra.mxu0 0
    %3407 = vmatprep.subr.bf16.mxu0 0
    %3408 = vmatpush1.bf16.msra.mxu0 0
    %3409 = vmatprep.subr.bf16.mxu0 0
    %3410 = vmatpush1.bf16.msra.mxu0 0
    %3411 = vmatprep.subr.bf16.mxu0 0
    %3412 = vmatpush1.bf16.msra.mxu0 0
    %3413 = vmatprep.subr.bf16.mxu0 0
    %3414 = vmatpush1.bf16.msra.mxu0 0
    %3415 = vmatprep.subr.bf16.mxu0 0
    %3416 = vmatpush1.bf16.msra.mxu0 0
    %3417 = vmatprep.subr.bf16.mxu0 0
    %3418 = vmatpush1.bf16.msra.mxu0 0
    %3419 = vmatprep.subr.bf16.mxu0 0
    %3420 = vmatpush1.bf16.msra.mxu0 0
    %3421 = vmatprep.subr.bf16.mxu0 0
    %3422 = vmatpush1.bf16.msra.mxu0 0
    %3423 = vmatprep.subr.bf16.mxu0 0
    %3424 = vmatpush1.bf16.msra.mxu0 0
    %3425 = vmatprep.mubr.bf16.mxu0 0
    %3426 = vmatmul.mubr.bf16.gmra.mrb[0].mxu0 %v3391
    %v3427 = vpop.f32.mrb[0].mxu0
    %v3428 = vadd.f32 0.0, %v3427
    %v3429 = vpop.f32.mrb[0].mxu0
    %v3430 = vpop.f32.mrb[0].mxu0
    %v3431 = vpop.f32.mrb[0].mxu0
    %3432 = vdwg.mxu0
    %v3433 = vadd.f32 %v1710, %v3428
    %v3434 = vpack.c.bf16 %v3324, %v3324
    %v3436 = vsel %vm1728, %v3434, 0
    %3438 = vmatprep.subr.bf16.mxu0 0
    %3439 = vmatpush1.bf16.msra.mxu0 %v1859
    %3440 = vmatprep.subr.bf16.mxu0 0
    %3441 = vmatpush1.bf16.msra.mxu0 %v1860
    %3442 = vmatprep.subr.bf16.mxu0 0
    %3443 = vmatpush1.bf16.msra.mxu0 0
    %3444 = vmatprep.subr.bf16.mxu0 0
    %3445 = vmatpush1.bf16.msra.mxu0 0
    %3446 = vmatprep.subr.bf16.mxu0 0
    %3447 = vmatpush1.bf16.msra.mxu0 0
    %3448 = vmatprep.subr.bf16.mxu0 0
    %3449 = vmatpush1.bf16.msra.mxu0 0
    %3450 = vmatprep.subr.bf16.mxu0 0
    %3451 = vmatpush1.bf16.msra.mxu0 0
    %3452 = vmatprep.subr.bf16.mxu0 0
    %3453 = vmatpush1.bf16.msra.mxu0 0
    %3454 = vmatprep.subr.bf16.mxu0 0
    %3455 = vmatpush1.bf16.msra.mxu0 0
    %3456 = vmatprep.subr.bf16.mxu0 0
    %3457 = vmatpush1.bf16.msra.mxu0 0
    %3458 = vmatprep.subr.bf16.mxu0 0
    %3459 = vmatpush1.bf16.msra.mxu0 0
    %3460 = vmatprep.subr.bf16.mxu0 0
    %3461 = vmatpush1.bf16.msra.mxu0 0
    %3462 = vmatprep.subr.bf16.mxu0 0
    %3463 = vmatpush1.bf16.msra.mxu0 0
    %3464 = vmatprep.subr.bf16.mxu0 0
    %3465 = vmatpush1.bf16.msra.mxu0 0
    %3466 = vmatprep.subr.bf16.mxu0 0
    %3467 = vmatpush1.bf16.msra.mxu0 0
    %3468 = vmatprep.subr.bf16.mxu0 0
    %3469 = vmatpush1.bf16.msra.mxu0 0
    %3470 = vmatprep.mubr.bf16.mxu0 0
    %3471 = vmatmul.mubr.bf16.gmra.mrb[0].mxu0 %v3436
    %v3472 = vpop.f32.mrb[0].mxu0
    %v3473 = vadd.f32 0.0, %v3472
    %v3474 = vpop.f32.mrb[0].mxu0
    %v3475 = vpop.f32.mrb[0].mxu0
    %v3476 = vpop.f32.mrb[0].mxu0
    %3477 = vdwg.mxu0
    %v3478 = vadd.f32 %v3433, %v3473
    %v3479 = vadd.f32 %v3478, %v3478
    %v3480 = vsel %vm1714, %v3479, %v3478
    %v3481 = vsub.f32 0.0, %v3480
    %v3482 = vmul.f32 %v3481, 1.442695
    %v3483 = vpow.pop %v3482
    %v3484 = vadd.f32 %v3483, 1.0
    %v3485 = vrcp.pop %v3484
    %v3486 = vadd.f32 %v3485, %v3485
    %v3487 = vsub.f32 %v3486, 1.0
    %v3488 = vsel %vm1714, %v3487, %v3485
    %3489 = vrot.lane.b32.xlu0 %v3488, 96
    %v3490 = vpop.permute.xlu0 %3489
    %3491 = vrot.lane.b32.xlu0 %v3488, 64
    %v3492 = vpop.permute.xlu0 %3491
    %v3493 = vmul.f32 %v3488, %v3320
    %v3494 = vmul.f32 %v3490, %v3492
    %v3495 = vadd.f32 %v3493, %v3494
    %v3496 = vtanh.pop %v3495
    %3497 = vrot.lane.b32.xlu0 %v3496, 96
    %v3498 = vpop.permute.xlu0 %3497
    %v3499 = vmul.f32 %v3488, %v3498
    %s3500 = scalar_lea.vmem [#allocation2], 80
    %v3501 = vld [vmem:[%s3500] sm:$0xff]
    %3502 = vmatprep.subr.bf16.mxu0 0
    %3503 = vmatpush1.bf16.msra.mxu0 %v1724
    %3504 = vmatprep.subr.bf16.mxu0 0
    %3505 = vmatpush1.bf16.msra.mxu0 %v1725
    %3506 = vmatprep.subr.bf16.mxu0 0
    %3507 = vmatpush1.bf16.msra.mxu0 0
    %3508 = vmatprep.subr.bf16.mxu0 0
    %3509 = vmatpush1.bf16.msra.mxu0 0
    %3510 = vmatprep.subr.bf16.mxu0 0
    %3511 = vmatpush1.bf16.msra.mxu0 0
    %3512 = vmatprep.subr.bf16.mxu0 0
    %3513 = vmatpush1.bf16.msra.mxu0 0
    %3514 = vmatprep.subr.bf16.mxu0 0
    %3515 = vmatpush1.bf16.msra.mxu0 0
    %3516 = vmatprep.subr.bf16.mxu0 0
    %3517 = vmatpush1.bf16.msra.mxu0 0
    %3518 = vmatprep.subr.bf16.mxu0 0
    %3519 = vmatpush1.bf16.msra.mxu0 0
    %3520 = vmatprep.subr.bf16.mxu0 0
    %3521 = vmatpush1.bf16.msra.mxu0 0
    %3522 = vmatprep.subr.bf16.mxu0 0
    %3523 = vmatpush1.bf16.msra.mxu0 0
    %3524 = vmatprep.subr.bf16.mxu0 0
    %3525 = vmatpush1.bf16.msra.mxu0 0
    %3526 = vmatprep.subr.bf16.mxu0 0
    %3527 = vmatpush1.bf16.msra.mxu0 0
    %3528 = vmatprep.subr.bf16.mxu0 0
    %3529 = vmatpush1.bf16.msra.mxu0 0
    %3530 = vmatprep.subr.bf16.mxu0 0
    %3531 = vmatpush1.bf16.msra.mxu0 0
    %3532 = vmatprep.subr.bf16.mxu0 0
    %3533 = vmatpush1.bf16.msra.mxu0 0
    %3534 = vmatprep.mubr.bf16.mxu0 0
    %3535 = vmatmul.mubr.bf16.gmra.mrb[0].mxu0 %v3391
    %v3536 = vpop.f32.mrb[0].mxu0
    %v3537 = vadd.f32 0.0, %v3536
    %v3538 = vpop.f32.mrb[0].mxu0
    %v3539 = vpop.f32.mrb[0].mxu0
    %v3540 = vpop.f32.mrb[0].mxu0
    %3541 = vdwg.mxu0
    %v3542 = vadd.f32 %v3501, %v3537
    %v3543 = vadd.f32 %v3542, %v3542
    %v3544 = vsel %vm1714, %v3543, %v3542
    %v3545 = vsub.f32 0.0, %v3544
    %v3546 = vmul.f32 %v3545, 1.442695
    %v3547 = vpow.pop %v3546
    %v3548 = vadd.f32 %v3547, 1.0
    %v3549 = vrcp.pop %v3548
    %v3550 = vadd.f32 %v3549, %v3549
    %v3551 = vsub.f32 %v3550, 1.0
    %v3552 = vsel %vm1714, %v3551, %v3549
    %3553 = vrot.lane.b32.xlu0 %v3552, 96
    %v3554 = vpop.permute.xlu0 %3553
    %3555 = vrot.lane.b32.xlu0 %v3552, 64
    %v3556 = vpop.permute.xlu0 %3555
    %v3557 = vmul.f32 %v3552, %v3384
    %v3558 = vmul.f32 %v3554, %v3556
    %v3559 = vadd.f32 %v3557, %v3558
    %v3560 = vtanh.pop %v3559
    %3561 = vrot.lane.b32.xlu0 %v3560, 96
    %v3562 = vpop.permute.xlu0 %3561
    %v3563 = vmul.f32 %v3552, %v3562
    %v3564 = vpack.c.bf16 %v3563, %v3563
    %v3566 = vsel %vm1728, %v3564, 0
    %3568 = vmatprep.subr.bf16.mxu0 0
    %3569 = vmatpush1.bf16.msra.mxu0 %v1803
    %3570 = vmatprep.subr.bf16.mxu0 0
    %3571 = vmatpush1.bf16.msra.mxu0 %v1804
    %3572 = vmatprep.subr.bf16.mxu0 0
    %3573 = vmatpush1.bf16.msra.mxu0 0
    %3574 = vmatprep.subr.bf16.mxu0 0
    %3575 = vmatpush1.bf16.msra.mxu0 0
    %3576 = vmatprep.subr.bf16.mxu0 0
    %3577 = vmatpush1.bf16.msra.mxu0 0
    %3578 = vmatprep.subr.bf16.mxu0 0
    %3579 = vmatpush1.bf16.msra.mxu0 0
    %3580 = vmatprep.subr.bf16.mxu0 0
    %3581 = vmatpush1.bf16.msra.mxu0 0
    %3582 = vmatprep.subr.bf16.mxu0 0
    %3583 = vmatpush1.bf16.msra.mxu0 0
    %3584 = vmatprep.subr.bf16.mxu0 0
    %3585 = vmatpush1.bf16.msra.mxu0 0
    %3586 = vmatprep.subr.bf16.mxu0 0
    %3587 = vmatpush1.bf16.msra.mxu0 0
    %3588 = vmatprep.subr.bf16.mxu0 0
    %3589 = vmatpush1.bf16.msra.mxu0 0
    %3590 = vmatprep.subr.bf16.mxu0 0
    %3591 = vmatpush1.bf16.msra.mxu0 0
    %3592 = vmatprep.subr.bf16.mxu0 0
    %3593 = vmatpush1.bf16.msra.mxu0 0
    %3594 = vmatprep.subr.bf16.mxu0 0
    %3595 = vmatpush1.bf16.msra.mxu0 0
    %3596 = vmatprep.subr.bf16.mxu0 0
    %3597 = vmatpush1.bf16.msra.mxu0 0
    %3598 = vmatprep.subr.bf16.mxu0 0
    %3599 = vmatpush1.bf16.msra.mxu0 0
    %3600 = vmatprep.mubr.bf16.mxu0 0
    %3601 = vmatmul.mubr.bf16.gmra.mrb[0].mxu0 %v3566
    %v3602 = vpop.f32.mrb[0].mxu0
    %v3603 = vadd.f32 0.0, %v3602
    %v3604 = vpop.f32.mrb[0].mxu0
    %v3605 = vpop.f32.mrb[0].mxu0
    %v3606 = vpop.f32.mrb[0].mxu0
    %3607 = vdwg.mxu0
    %v3608 = vadd.f32 %v1710, %v3603
    %v3609 = vpack.c.bf16 %v3499, %v3499
    %v3611 = vsel %vm1728, %v3609, 0
    %3613 = vmatprep.subr.bf16.mxu0 0
    %3614 = vmatpush1.bf16.msra.mxu0 %v1859
    %3615 = vmatprep.subr.bf16.mxu0 0
    %3616 = vmatpush1.bf16.msra.mxu0 %v1860
    %3617 = vmatprep.subr.bf16.mxu0 0
    %3618 = vmatpush1.bf16.msra.mxu0 0
    %3619 = vmatprep.subr.bf16.mxu0 0
    %3620 = vmatpush1.bf16.msra.mxu0 0
    %3621 = vmatprep.subr.bf16.mxu0 0
    %3622 = vmatpush1.bf16.msra.mxu0 0
    %3623 = vmatprep.subr.bf16.mxu0 0
    %3624 = vmatpush1.bf16.msra.mxu0 0
    %3625 = vmatprep.subr.bf16.mxu0 0
    %3626 = vmatpush1.bf16.msra.mxu0 0
    %3627 = vmatprep.subr.bf16.mxu0 0
    %3628 = vmatpush1.bf16.msra.mxu0 0
    %3629 = vmatprep.subr.bf16.mxu0 0
    %3630 = vmatpush1.bf16.msra.mxu0 0
    %3631 = vmatprep.subr.bf16.mxu0 0
    %3632 = vmatpush1.bf16.msra.mxu0 0
    %3633 = vmatprep.subr.bf16.mxu0 0
    %3634 = vmatpush1.bf16.msra.mxu0 0
    %3635 = vmatprep.subr.bf16.mxu0 0
    %3636 = vmatpush1.bf16.msra.mxu0 0
    %3637 = vmatprep.subr.bf16.mxu0 0
    %3638 = vmatpush1.bf16.msra.mxu0 0
    %3639 = vmatprep.subr.bf16.mxu0 0
    %3640 = vmatpush1.bf16.msra.mxu0 0
    %3641 = vmatprep.subr.bf16.mxu0 0
    %3642 = vmatpush1.bf16.msra.mxu0 0
    %3643 = vmatprep.subr.bf16.mxu0 0
    %3644 = vmatpush1.bf16.msra.mxu0 0
    %3645 = vmatprep.mubr.bf16.mxu0 0
    %3646 = vmatmul.mubr.bf16.gmra.mrb[0].mxu0 %v3611
    %v3647 = vpop.f32.mrb[0].mxu0
    %v3648 = vadd.f32 0.0, %v3647
    %v3649 = vpop.f32.mrb[0].mxu0
    %v3650 = vpop.f32.mrb[0].mxu0
    %v3651 = vpop.f32.mrb[0].mxu0
    %3652 = vdwg.mxu0
    %v3653 = vadd.f32 %v3608, %v3648
    %v3654 = vadd.f32 %v3653, %v3653
    %v3655 = vsel %vm1714, %v3654, %v3653
    %v3656 = vsub.f32 0.0, %v3655
    %v3657 = vmul.f32 %v3656, 1.442695
    %v3658 = vpow.pop %v3657
    %v3659 = vadd.f32 %v3658, 1.0
    %v3660 = vrcp.pop %v3659
    %v3661 = vadd.f32 %v3660, %v3660
    %v3662 = vsub.f32 %v3661, 1.0
    %v3663 = vsel %vm1714, %v3662, %v3660
    %3664 = vrot.lane.b32.xlu0 %v3663, 96
    %v3665 = vpop.permute.xlu0 %3664
    %3666 = vrot.lane.b32.xlu0 %v3663, 64
    %v3667 = vpop.permute.xlu0 %3666
    %v3668 = vmul.f32 %v3663, %v3495
    %v3669 = vmul.f32 %v3665, %v3667
    %v3670 = vadd.f32 %v3668, %v3669
    %v3671 = vtanh.pop %v3670
    %3672 = vrot.lane.b32.xlu0 %v3671, 96
    %v3673 = vpop.permute.xlu0 %3672
    %v3674 = vmul.f32 %v3663, %v3673
    %s3675 = scalar_lea.vmem [#allocation2], 88
    %v3676 = vld [vmem:[%s3675] sm:$0xff]
    %3677 = vmatprep.subr.bf16.mxu0 0
    %3678 = vmatpush1.bf16.msra.mxu0 %v1724
    %3679 = vmatprep.subr.bf16.mxu0 0
    %3680 = vmatpush1.bf16.msra.mxu0 %v1725
    %3681 = vmatprep.subr.bf16.mxu0 0
    %3682 = vmatpush1.bf16.msra.mxu0 0
    %3683 = vmatprep.subr.bf16.mxu0 0
    %3684 = vmatpush1.bf16.msra.mxu0 0
    %3685 = vmatprep.subr.bf16.mxu0 0
    %3686 = vmatpush1.bf16.msra.mxu0 0
    %3687 = vmatprep.subr.bf16.mxu0 0
    %3688 = vmatpush1.bf16.msra.mxu0 0
    %3689 = vmatprep.subr.bf16.mxu0 0
    %3690 = vmatpush1.bf16.msra.mxu0 0
    %3691 = vmatprep.subr.bf16.mxu0 0
    %3692 = vmatpush1.bf16.msra.mxu0 0
    %3693 = vmatprep.subr.bf16.mxu0 0
    %3694 = vmatpush1.bf16.msra.mxu0 0
    %3695 = vmatprep.subr.bf16.mxu0 0
    %3696 = vmatpush1.bf16.msra.mxu0 0
    %3697 = vmatprep.subr.bf16.mxu0 0
    %3698 = vmatpush1.bf16.msra.mxu0 0
    %3699 = vmatprep.subr.bf16.mxu0 0
    %3700 = vmatpush1.bf16.msra.mxu0 0
    %3701 = vmatprep.subr.bf16.mxu0 0
    %3702 = vmatpush1.bf16.msra.mxu0 0
    %3703 = vmatprep.subr.bf16.mxu0 0
    %3704 = vmatpush1.bf16.msra.mxu0 0
    %3705 = vmatprep.subr.bf16.mxu0 0
    %3706 = vmatpush1.bf16.msra.mxu0 0
    %3707 = vmatprep.subr.bf16.mxu0 0
    %3708 = vmatpush1.bf16.msra.mxu0 0
    %3709 = vmatprep.mubr.bf16.mxu0 0
    %3710 = vmatmul.mubr.bf16.gmra.mrb[0].mxu0 %v3566
    %v3711 = vpop.f32.mrb[0].mxu0
    %v3712 = vadd.f32 0.0, %v3711
    %v3713 = vpop.f32.mrb[0].mxu0
    %v3714 = vpop.f32.mrb[0].mxu0
    %v3715 = vpop.f32.mrb[0].mxu0
    %3716 = vdwg.mxu0
    %v3717 = vadd.f32 %v3676, %v3712
    %v3718 = vadd.f32 %v3717, %v3717
    %v3719 = vsel %vm1714, %v3718, %v3717
    %v3720 = vsub.f32 0.0, %v3719
    %v3721 = vmul.f32 %v3720, 1.442695
    %v3722 = vpow.pop %v3721
    %v3723 = vadd.f32 %v3722, 1.0
    %v3724 = vrcp.pop %v3723
    %v3725 = vadd.f32 %v3724, %v3724
    %v3726 = vsub.f32 %v3725, 1.0
    %v3727 = vsel %vm1714, %v3726, %v3724
    %3728 = vrot.lane.b32.xlu0 %v3727, 96
    %v3729 = vpop.permute.xlu0 %3728
    %3730 = vrot.lane.b32.xlu0 %v3727, 64
    %v3731 = vpop.permute.xlu0 %3730
    %v3732 = vmul.f32 %v3727, %v3559
    %v3733 = vmul.f32 %v3729, %v3731
    %v3734 = vadd.f32 %v3732, %v3733
    %v3735 = vtanh.pop %v3734
    %3736 = vrot.lane.b32.xlu0 %v3735, 96
    %v3737 = vpop.permute.xlu0 %3736
    %v3738 = vmul.f32 %v3727, %v3737
    %v3739 = vpack.c.bf16 %v3738, %v3738
    %v3741 = vsel %vm1728, %v3739, 0
    %3743 = vmatprep.subr.bf16.mxu0 0
    %3744 = vmatpush1.bf16.msra.mxu0 %v1803
    %3745 = vmatprep.subr.bf16.mxu0 0
    %3746 = vmatpush1.bf16.msra.mxu0 %v1804
    %3747 = vmatprep.subr.bf16.mxu0 0
    %3748 = vmatpush1.bf16.msra.mxu0 0
    %3749 = vmatprep.subr.bf16.mxu0 0
    %3750 = vmatpush1.bf16.msra.mxu0 0
    %3751 = vmatprep.subr.bf16.mxu0 0
    %3752 = vmatpush1.bf16.msra.mxu0 0
    %3753 = vmatprep.subr.bf16.mxu0 0
    %3754 = vmatpush1.bf16.msra.mxu0 0
    %3755 = vmatprep.subr.bf16.mxu0 0
    %3756 = vmatpush1.bf16.msra.mxu0 0
    %3757 = vmatprep.subr.bf16.mxu0 0
    %3758 = vmatpush1.bf16.msra.mxu0 0
    %3759 = vmatprep.subr.bf16.mxu0 0
    %3760 = vmatpush1.bf16.msra.mxu0 0
    %3761 = vmatprep.subr.bf16.mxu0 0
    %3762 = vmatpush1.bf16.msra.mxu0 0
    %3763 = vmatprep.subr.bf16.mxu0 0
    %3764 = vmatpush1.bf16.msra.mxu0 0
    %3765 = vmatprep.subr.bf16.mxu0 0
    %3766 = vmatpush1.bf16.msra.mxu0 0
    %3767 = vmatprep.subr.bf16.mxu0 0
    %3768 = vmatpush1.bf16.msra.mxu0 0
    %3769 = vmatprep.subr.bf16.mxu0 0
    %3770 = vmatpush1.bf16.msra.mxu0 0
    %3771 = vmatprep.subr.bf16.mxu0 0
    %3772 = vmatpush1.bf16.msra.mxu0 0
    %3773 = vmatprep.subr.bf16.mxu0 0
    %3774 = vmatpush1.bf16.msra.mxu0 0
    %3775 = vmatprep.mubr.bf16.mxu0 0
    %3776 = vmatmul.mubr.bf16.gmra.mrb[0].mxu0 %v3741
    %v3777 = vpop.f32.mrb[0].mxu0
    %v3778 = vadd.f32 0.0, %v3777
    %v3779 = vpop.f32.mrb[0].mxu0
    %v3780 = vpop.f32.mrb[0].mxu0
    %v3781 = vpop.f32.mrb[0].mxu0
    %3782 = vdwg.mxu0
    %v3783 = vadd.f32 %v1710, %v3778
    %v3784 = vpack.c.bf16 %v3674, %v3674
    %v3786 = vsel %vm1728, %v3784, 0
    %3788 = vmatprep.subr.bf16.mxu0 0
    %3789 = vmatpush1.bf16.msra.mxu0 %v1859
    %3790 = vmatprep.subr.bf16.mxu0 0
    %3791 = vmatpush1.bf16.msra.mxu0 %v1860
    %3792 = vmatprep.subr.bf16.mxu0 0
    %3793 = vmatpush1.bf16.msra.mxu0 0
    %3794 = vmatprep.subr.bf16.mxu0 0
    %3795 = vmatpush1.bf16.msra.mxu0 0
    %3796 = vmatprep.subr.bf16.mxu0 0
    %3797 = vmatpush1.bf16.msra.mxu0 0
    %3798 = vmatprep.subr.bf16.mxu0 0
    %3799 = vmatpush1.bf16.msra.mxu0 0
    %3800 = vmatprep.subr.bf16.mxu0 0
    %3801 = vmatpush1.bf16.msra.mxu0 0
    %3802 = vmatprep.subr.bf16.mxu0 0
    %3803 = vmatpush1.bf16.msra.mxu0 0
    %3804 = vmatprep.subr.bf16.mxu0 0
    %3805 = vmatpush1.bf16.msra.mxu0 0
    %3806 = vmatprep.subr.bf16.mxu0 0
    %3807 = vmatpush1.bf16.msra.mxu0 0
    %3808 = vmatprep.subr.bf16.mxu0 0
    %3809 = vmatpush1.bf16.msra.mxu0 0
    %3810 = vmatprep.subr.bf16.mxu0 0
    %3811 = vmatpush1.bf16.msra.mxu0 0
    %3812 = vmatprep.subr.bf16.mxu0 0
    %3813 = vmatpush1.bf16.msra.mxu0 0
    %3814 = vmatprep.subr.bf16.mxu0 0
    %3815 = vmatpush1.bf16.msra.mxu0 0
    %3816 = vmatprep.subr.bf16.mxu0 0
    %3817 = vmatpush1.bf16.msra.mxu0 0
    %3818 = vmatprep.subr.bf16.mxu0 0
    %3819 = vmatpush1.bf16.msra.mxu0 0
    %3820 = vmatprep.mubr.bf16.mxu0 0
    %3821 = vmatmul.mubr.bf16.gmra.mrb[0].mxu0 %v3786
    %v3822 = vpop.f32.mrb[0].mxu0
    %v3823 = vadd.f32 0.0, %v3822
    %v3824 = vpop.f32.mrb[0].mxu0
    %v3825 = vpop.f32.mrb[0].mxu0
    %v3826 = vpop.f32.mrb[0].mxu0
    %3827 = vdwg.mxu0
    %v3828 = vadd.f32 %v3783, %v3823
    %v3829 = vadd.f32 %v3828, %v3828
    %v3830 = vsel %vm1714, %v3829, %v3828
    %v3831 = vsub.f32 0.0, %v3830
    %v3832 = vmul.f32 %v3831, 1.442695
    %v3833 = vpow.pop %v3832
    %v3834 = vadd.f32 %v3833, 1.0
    %v3835 = vrcp.pop %v3834
    %v3836 = vadd.f32 %v3835, %v3835
    %v3837 = vsub.f32 %v3836, 1.0
    %v3838 = vsel %vm1714, %v3837, %v3835
    %3839 = vrot.lane.b32.xlu0 %v3838, 96
    %v3840 = vpop.permute.xlu0 %3839
    %3841 = vrot.lane.b32.xlu0 %v3838, 64
    %v3842 = vpop.permute.xlu0 %3841
    %v3843 = vmul.f32 %v3838, %v3670
    %v3844 = vmul.f32 %v3840, %v3842
    %v3845 = vadd.f32 %v3843, %v3844
    %v3846 = vtanh.pop %v3845
    %3847 = vrot.lane.b32.xlu0 %v3846, 96
    %v3848 = vpop.permute.xlu0 %3847
    %v3849 = vmul.f32 %v3838, %v3848
    %v3850 = vpack.c.bf16 %v3849, %v3849
    %v3851 = vld [vmem:[#allocation12] sm:$0xf]
    %v3852 = vld [vmem:[#allocation12 + $0x4] sm:$0xf]
    %v3853 = vld [vmem:[#allocation12 + $0x8] sm:$0xf]
    %v3854 = vld [vmem:[#allocation12 + $0xc] sm:$0xf]
    %v3855 = vld [vmem:[%s12] sm:$0x1]
    %v3857 = vlaneseq
    %v3858 = vshrl.u32 %v3857, 7
    %v3859 = vsub.s32 0, %v3858
    %v3860 = vrot.slane %v3855, %v3859
    %v3866 = vunpack.c.l.b16 %v3851
    %v3867 = vunpack.c.l.b16 %v3852
    %v3868 = vunpack.c.l.b16 %v3853
    %v3869 = vunpack.c.l.b16 %v3854
    %v3870 = vpack.c.b16 %v3867, %v3866
    %v3871 = vpack.c.b16 %v3869, %v3868
    %v3875 = vsel %vm1728, %v3850, 0
    %3877 = vmatprep.subr.bf16.mxu0 0
    %3878 = vmatpush1.bf16.msra.mxu0 %v3870
    %3879 = vmatprep.subr.bf16.mxu0 0
    %3880 = vmatpush1.bf16.msra.mxu0 %v3871
    %3881 = vmatprep.subr.bf16.mxu0 0
    %3882 = vmatpush1.bf16.msra.mxu0 0
    %3883 = vmatprep.subr.bf16.mxu0 0
    %3884 = vmatpush1.bf16.msra.mxu0 0
    %3885 = vmatprep.subr.bf16.mxu0 0
    %3886 = vmatpush1.bf16.msra.mxu0 0
    %3887 = vmatprep.subr.bf16.mxu0 0
    %3888 = vmatpush1.bf16.msra.mxu0 0
    %3889 = vmatprep.subr.bf16.mxu0 0
    %3890 = vmatpush1.bf16.msra.mxu0 0
    %3891 = vmatprep.subr.bf16.mxu0 0
    %3892 = vmatpush1.bf16.msra.mxu0 0
    %3893 = vmatprep.subr.bf16.mxu0 0
    %3894 = vmatpush1.bf16.msra.mxu0 0
    %3895 = vmatprep.subr.bf16.mxu0 0
    %3896 = vmatpush1.bf16.msra.mxu0 0
    %3897 = vmatprep.subr.bf16.mxu0 0
    %3898 = vmatpush1.bf16.msra.mxu0 0
    %3899 = vmatprep.subr.bf16.mxu0 0
    %3900 = vmatpush1.bf16.msra.mxu0 0
    %3901 = vmatprep.subr.bf16.mxu0 0
    %3902 = vmatpush1.bf16.msra.mxu0 0
    %3903 = vmatprep.subr.bf16.mxu0 0
    %3904 = vmatpush1.bf16.msra.mxu0 0
    %3905 = vmatprep.subr.bf16.mxu0 0
    %3906 = vmatpush1.bf16.msra.mxu0 0
    %3907 = vmatprep.subr.bf16.mxu0 0
    %3908 = vmatpush1.bf16.msra.mxu0 0
    %3909 = vmatprep.mubr.bf16.mxu0 0
    %3910 = vmatmul.mubr.bf16.gmra.mrb[0].mxu0 %v3875
    %v3911 = vpop.f32.mrb[0].mxu0
    %v3912 = vadd.f32 %v3860, %v3911
    %v3913 = vpop.f32.mrb[0].mxu0
    %v3914 = vpop.f32.mrb[0].mxu0
    %v3915 = vpop.f32.mrb[0].mxu0
    %3916 = vdwg.mxu0
    %3917 = vst [vmem:[#allocation14] sm:$0xff] %v3912
    // Predicated region
    $region78: #{tpu_custom_call.1} parent=1 // pred_check
      _
    $region79: #{tpu_custom_call.1} parent=1 // pred_check_branch
      %3919 = sbr.rel (0) target = $region81
    $region80: #{tpu_custom_call.1} parent=1 // pred_region
      %s3921 = ssub.s32 128, 128
      %3922 = vsyncadd [#allocation5], %s3921
      %s3924 = sshll.u32 [#allocation14], 4
      %s3925 = int_to_ptr.vmem [resolvable:$true] %s3924
      %3927 = dma.vmem_to_hbm [thread:$0]  %s3925, 128, %s13, [#allocation5]
    $region81: #{tpu_custom_call.1} parent=1 // pred_fallthru
      _
    // Predicated region
    $region82: #{tpu_custom_call.1} parent=1 // pred_check
      _
    $region83: #{tpu_custom_call.1} parent=1 // pred_check_branch
      %3929 = sbr.rel (0) target = $region85
    $region84: #{tpu_custom_call.1} parent=1 // pred_region
      %3930 = dma.done [#allocation5], 128
    $region85: #{tpu_custom_call.1} parent=1 // pred_fallthru
      _
    %3931 = vsyncpa [#allocation4], 1
    %3932 = vsyncpa [#allocation7], 1
    %3933 = vsyncpa [#allocation10], 1
    %3934 = vsyncpa [#allocation13], 1
    %3935 = vsyncpa [#allocation5], 1

</llo_original>
